<compile_context>
chip_gen: v7x
topology: tpu7x:2x2x1
jax: 0.10.0
libtpu: 0.0.40
codegen_flags: <defaults>
</compile_context>

<pallas_src>
import math
from functools import partial

import jax
import jax.numpy as jnp
from jax.experimental import pallas as pl
from jax.experimental.pallas import tpu as pltpu

SQRT2 = math.sqrt(2.0)
HP = jax.lax.Precision.HIGHEST


def _ceil8(x):
    return (x + 7) // 8 * 8


def _lrelu_n(x):
    return jnp.where(x >= 0.0, x, 0.2 * x) * SQRT2


# ----------------------------------------------------------------------------
# Fused Pallas kernel: all layers for one batch sample per grid step.
# ----------------------------------------------------------------------------

def _fused_kernel(ll_ref, co_ref, s_sp_ref, d_sp_ref, s_cb_ref, d_cb_ref,
                  w_sp_ref, b_sp_ref, sc_w_ref, sc_b_ref,
                  w_cb_ref, b_cb_ref, mask_ref,
                  o_ref, x_ref,
                  *, n_layers, H0, W0, ks, CHp, CCp):
    Cin_p = CHp + CCp
    NL = H0 * W0
    r = (ks - 1) // 2

    def mm(a, b):
        return jnp.dot(a, b, preferred_element_type=jnp.float32)

    def shifted(xm, k):
        # y[:, i] = xm[:, (i + k) % NL]   (static k, lane rotation on the XLU)
        k = (-k) % NL
        return xm if k == 0 else pltpu.roll(xm, k, 1)

    # Persistent activation buffer: h rows [0:CHp], coords rows [CHp:].
    # Coords never change in the original-stride layout -> written once.
    x_ref[:CHp, :] = ll_ref[0]
    x_ref[CHp:, :] = co_ref[0]

    h = None
    for i in range(n_layers):
        Wc = W0 - 2 * i * r                         # current valid row width
        # Per-layer masks precomputed in the wrapper (hoisted out of tap loop)
        mL = mask_ref[i, 0:1, :]                    # col == left edge
        mR = mask_ref[i, 1:2, :]                    # col == right edge
        mT = mask_ref[i, 2:3, :]                    # row == top edge (pole)
        mB = mask_ref[i, 3:4, :]                    # row == bottom edge (pole)
        mOut = mask_ref[i, 4:5, :]                  # valid lanes after shrink
        mLn, mRn, mTn, mBn = 1.0 - mL, 1.0 - mR, 1.0 - mT, 1.0 - mB

        # -------------------- SphereConditionalBlock -----------------------
        # TODO(synk): exact sphere-aware padding of sp_ops_gs.StyledConv is
        # unavailable; approximated as replicated poles + circular azimuth.
        x = x_ref[...]
        h_old = x[:CHp, :]
        xm = x * s_sp_ref[0, i]                     # style modulation

        def col_planes(roff, xm=xm, mL=mL, mR=mR, mLn=mLn, mRn=mRn, Wc=Wc):
            # column taps -1/0/+1 with circular-azimuth wrap at region edges
            return {
                -1: mL * shifted(xm, roff - 1 + Wc) + mLn * shifted(xm, roff - 1),
                0: shifted(xm, roff),
                1: mR * shifted(xm, roff + 1 - Wc) + mRn * shifted(xm, roff + 1),
            }

        c0 = col_planes(0)                          # same row
        cU = col_planes(-W0)                        # row above  (dh = -1)
        cD = col_planes(+W0)                        # row below  (dh = +1)

        acc = jnp.zeros((CHp, NL), jnp.float32)
        for dh, cd, m_pole, m_int in ((-1, cU, mT, mTn), (0, c0, None, None),
                                      (1, cD, mB, mBn)):
            for dw in (-1, 0, 1):
                plane = cd[dw]
                if m_pole is not None:              # replicate at the poles
                    plane = m_pole * c0[dw] + m_int * plane
                t = (dh + 1) * 3 + (dw + 1)
                acc = acc + mm(w_sp_ref[i, t], plane)
        out_sp = _lrelu_n(acc * d_sp_ref[0, i] + b_sp_ref[i])

        # 1x1 residual conv on the pre-conv h
        h = out_sp + mm(sc_w_ref[i], h_old) + sc_b_ref[i]
        x_ref[:CHp, :] = h

        # -------------------- ConditionalBlock (VALID kxk) -----------------
        xm = x_ref[...] * s_cb_ref[0, i]
        acc = jnp.zeros((CHp, NL), jnp.float32)
        for dh in range(-r, r + 1):
            for dw in range(-r, r + 1):
                t = (dh + r) * ks + (dw + r)
                acc = acc + mm(w_cb_ref[i, t], shifted(xm, dh * W0 + dw))
        out_cb = _lrelu_n(acc * d_cb_ref[0, i] + b_cb_ref[i])

        # The "center crop" is only this validity mask plus the offset baked
        # into the next layer's masks (keeps garbage lanes zeroed).
        h = out_cb * mOut
        x_ref[:CHp, :] = h

    o_ref[0] = h


# ----------------------------------------------------------------------------
# Wrapper: hoisted mapping / style / demod math + weight re-layout + call
# ----------------------------------------------------------------------------

def _prep_weights(p, KH, KW, C, Cc, CHp, CCp):
    """Per-tap, channel-padded effective conv weights + bias column."""
    f32 = jnp.float32
    Cin, Cin_p = C + Cc, CHp + CCp
    weight = p["weight"].astype(f32)                       # (Cout, Cin, KH, KW)
    Cout = weight.shape[0]
    w_eff = weight * (1.0 / math.sqrt(Cin * KH * KW))
    wt = jnp.transpose(w_eff, (2, 3, 0, 1)).reshape(KH * KW, Cout, Cin)
    w_pad = jnp.zeros((KH * KW, CHp, Cin_p), f32)
    w_pad = w_pad.at[:, :Cout, :C].set(wt[:, :, :C])
    w_pad = w_pad.at[:, :Cout, CHp:CHp + Cc].set(wt[:, :, C:])
    bias = jnp.zeros((CHp, 1), f32).at[:Cout, 0].set(p["bias"].astype(f32))
    return w_pad, bias


def _style_demod(cond, p, KH, KW, C, Cc, CHp, CCp, D):
    """Batched style s and demodulation d (hoisted out of the kernel)."""
    f32 = jnp.float32
    Cin = C + Cc
    B = cond.shape[0]
    s = jnp.dot(cond, (p["mod_w"].astype(f32) * (1.0 / math.sqrt(D))).T,
                precision=HP) + p["mod_b"].astype(f32)         # (B, Cin)
    w_eff = p["weight"].astype(f32) * (1.0 / math.sqrt(Cin * KH * KW))
    w2 = jnp.sum(w_eff * w_eff, axis=(2, 3))                   # (Cout, Cin)
    d = jax.lax.rsqrt(jnp.dot(s * s, w2.T, precision=HP) + 1e-8)
    Cin_p = CHp + CCp
    s_pad = jnp.zeros((B, Cin_p), f32)
    s_pad = s_pad.at[:, :C].set(s[:, :C]).at[:, CHp:CHp + Cc].set(s[:, C:])
    d_pad = jnp.zeros((B, CHp), f32).at[:, :w_eff.shape[0]].set(d)
    return s_pad, d_pad


def implicit_function_forward(params, cfg, global_latent, local_latent, coords):
    """Inputs follow the PyTorch NCHW convention.  Returns (h, flops)."""
    f32 = jnp.float32
    B, C, H0, W0 = local_latent.shape
    Cc = coords.shape[1]
    D = global_latent.shape[1]
    n = cfg["ss_n_layers"]
    r = cfg["ss_unfold_radius"]
    ks = 2 * r + 1

    CHp, CCp = _ceil8(C), _ceil8(Cc)
    Cin_p = CHp + CCp
    NL = H0 * W0

    # ---- global mapping MLP (PixelNorm + EqualLinear stack), batched XLA ---
    cond = global_latent.astype(f32)
    if params["mapping"] is not None:
        m = params["mapping"]
        lr_mul = m["lr_mul"]
        scale = (1.0 / math.sqrt(D)) * lr_mul
        cond = cond * jax.lax.rsqrt(
            jnp.mean(cond * cond, axis=1, keepdims=True) + 1e-8)
        for l in range(m["weight"].shape[0]):
            cond = jnp.dot(cond, (m["weight"][l].astype(f32) * scale).T,
                           precision=HP)
            cond = _lrelu_n(cond + m["bias"][l].astype(f32) * lr_mul)

    # ---- per-conv weights / style / demod (hoisted, batched over B) --------
    w_sp_l, b_sp_l, sc_w_l, sc_b_l = [], [], [], []
    w_cb_l, b_cb_l = [], []
    s_sp_l, d_sp_l, s_cb_l, d_cb_l = [], [], [], []
    for i in range(n):
        blk = params["blocks"][2 * i]
        w, b = _prep_weights(blk["conv"], 3, 3, C, Cc, CHp, CCp)
        s, d = _style_demod(cond, blk["conv"], 3, 3, C, Cc, CHp, CCp, D)
        w_sp_l.append(w); b_sp_l.append(b); s_sp_l.append(s); d_sp_l.append(d)
        sc_w_l.append(jnp.zeros((CHp, CHp), f32).at[:C, :C].set(
            blk["sc_w"].astype(f32)))
        sc_b_l.append(jnp.zeros((CHp, 1), f32).at[:C, 0].set(
            blk["sc_b"].astype(f32)))
        cp = params["blocks"][2 * i + 1]["conv"]
        w, b = _prep_weights(cp, ks, ks, C, Cc, CHp, CCp)
        s, d = _style_demod(cond, cp, ks, ks, C, Cc, CHp, CCp, D)
        w_cb_l.append(w); b_cb_l.append(b); s_cb_l.append(s); d_cb_l.append(d)

    w_sp = jnp.stack(w_sp_l)                         # (n, 9, CHp, Cin_p)
    b_sp = jnp.stack(b_sp_l)                         # (n, CHp, 1)
    sc_w = jnp.stack(sc_w_l)                         # (n, CHp, CHp)
    sc_b = jnp.stack(sc_b_l)                         # (n, CHp, 1)
    w_cb = jnp.stack(w_cb_l)                         # (n, ks*ks, CHp, Cin_p)
    b_cb = jnp.stack(b_cb_l)                         # (n, CHp, 1)
    s_sp = jnp.stack(s_sp_l, axis=1)[..., None]      # (B, n, Cin_p, 1)
    d_sp = jnp.stack(d_sp_l, axis=1)[..., None]      # (B, n, CHp, 1)
    s_cb = jnp.stack(s_cb_l, axis=1)[..., None]
    d_cb = jnp.stack(d_cb_l, axis=1)[..., None]

    # ---- per-layer boundary / validity masks (original-stride layout) ------
    lane = jnp.arange(NL, dtype=jnp.int32)
    row0, col0 = lane // W0, lane % W0
    mask_l = []
    for i in range(n):
        off, off_o = i * r, (i + 1) * r
        rows = [col0 == off, col0 == W0 - 1 - off,
                row0 == off, row0 == H0 - 1 - off,
                (row0 >= off_o) & (row0 <= H0 - 1 - off_o)
                & (col0 >= off_o) & (col0 <= W0 - 1 - off_o)]
        rows += [jnp.zeros((NL,), bool)] * 3
        mask_l.append(jnp.stack(rows).astype(f32))   # (8, NL)
    masks = jnp.stack(mask_l)                        # (n, 8, NL)

    # ---- activations in lane-dense (channels x H0*W0) layout ---------------
    # TODO(synk): SphereCoordHandlerV3BatchDiff.convert_idx_to_input_coords_ori
    # is unavailable; coords are treated as already-encoded inputs.
    ll = jnp.zeros((B, CHp, NL), f32).at[:, :C, :].set(
        local_latent.astype(f32).reshape(B, C, NL))
    co = jnp.zeros((B, CCp, NL), f32).at[:, :Cc, :].set(
        coords.astype(f32).reshape(B, Cc, NL))

    def per_b(shape):
        nd = len(shape)
        return pl.BlockSpec((1,) + tuple(shape[1:]),
                            lambda b, _nd=nd: (b,) + (0,) * (_nd - 1))

    def invariant(shape):
        nd = len(shape)
        return pl.BlockSpec(tuple(shape), lambda b, _nd=nd: (0,) * _nd)

    args = (ll, co, s_sp, d_sp, s_cb, d_cb,
            w_sp, b_sp, sc_w, sc_b, w_cb, b_cb, masks)
    in_specs = [per_b(a.shape) for a in args[:6]] + \
               [invariant(a.shape) for a in args[6:]]

    kernel = partial(_fused_kernel, n_layers=n, H0=H0, W0=W0, ks=ks,
                     CHp=CHp, CCp=CCp)

    taps = 9 + ks * ks
    flops = int(B * n * NL * (2 * CHp * Cin_p * taps + 2 * CHp * CHp))
    bytes_accessed = int(4 * (sum(a.size for a in args) + B * CHp * NL))

    out = pl.pallas_call(
        kernel,
        out_shape=jax.ShapeDtypeStruct((B, CHp, NL), f32),
        grid_spec=pltpu.PrefetchScalarGridSpec(
            num_scalar_prefetch=0,
            grid=(B,),
            in_specs=in_specs,
            out_specs=pl.BlockSpec((1, CHp, NL), lambda b: (b, 0, 0)),
            scratch_shapes=[pltpu.VMEM((Cin_p, NL), f32)],
        ),
        compiler_params=pltpu.CompilerParams(
            dimension_semantics=("parallel",),
            vmem_limit_bytes=32 * 1024 * 1024),
        cost_estimate=pl.CostEstimate(flops=flops, transcendentals=0,
                                      bytes_accessed=bytes_accessed),
    )(*args)

    # The VALID-conv shrink kept the original stride; extract the centered
    # Hf x Wf window here (tiny XLA slice in the wrapper).
    Hf, Wf = H0 - 2 * n * r, W0 - 2 * n * r
    h_full = out[:, :C, :].reshape(B, C, H0, W0)
    h = h_full[:, :, n * r:n * r + Hf, n * r:n * r + Wf]
    return h, 0          # calc_flops=False path


# ----------------------------------------------------------------------------
# Pure-JAX (XLA) reference with identical semantics — runtime self-check
# ----------------------------------------------------------------------------

def reference_forward(params, cfg, global_latent, local_latent, coords):
    D = global_latent.shape[1]
    n = cfg["ss_n_layers"]
    ks = cfg["ss_unfold_radius"] * 2 + 1

    cond = global_latent.astype(jnp.float32)
    if params["mapping"] is not None:
        m = params["mapping"]
        lr_mul = m["lr_mul"]
        scale = (1.0 / math.sqrt(D)) * lr_mul
        x = cond * jax.lax.rsqrt(jnp.mean(cond * cond, axis=1, keepdims=True) + 1e-8)
        for l in range(m["weight"].shape[0]):
            x = jnp.dot(x, (m["weight"][l] * scale).T, precision=HP)
            x = _lrelu_n(x + m["bias"][l] * lr_mul)
        cond = x

    def modconv(x, p, KH, KW):
        weight = p["weight"].astype(jnp.float32)
        Cin = weight.shape[1]
        s = jnp.dot(cond, (p["mod_w"] * (1.0 / math.sqrt(D))).T,
                    precision=HP) + p["mod_b"]
        w_eff = weight * (1.0 / math.sqrt(Cin * KH * KW))
        w2 = jnp.sum(w_eff * w_eff, axis=(2, 3))
        d = jax.lax.rsqrt(jnp.dot(s * s, w2.T, precision=HP) + 1e-8)
        y = jax.lax.conv_general_dilated(
            x * s[:, :, None, None], w_eff, (1, 1), "VALID",
            dimension_numbers=("NCHW", "OIHW", "NCHW"), precision=HP)
        y = y * d[:, :, None, None] + p["bias"][None, :, None, None]
        return _lrelu_n(y)

    def crop_center(src, rh, rw):
        ph = (src.shape[2] - rh) // 2
        pw = (src.shape[3] - rw) // 2
        return src[:, :, ph:ph + rh, pw:pw + rw]

    h = local_latent.astype(jnp.float32)
    co = coords.astype(jnp.float32)
    for i in range(n):
        blk = params["blocks"][2 * i]
        co = crop_center(co, h.shape[2], h.shape[3])
        x_in = jnp.concatenate([h, co], axis=1)
        xp = jnp.pad(x_in, ((0, 0), (0, 0), (1, 1), (0, 0)), mode="edge")
        xp = jnp.pad(xp, ((0, 0), (0, 0), (0, 0), (1, 1)), mode="wrap")
        out = modconv(xp, blk["conv"], 3, 3)
        sc = jnp.einsum("oc,bchw->bohw", blk["sc_w"].astype(jnp.float32), h,
                        precision=HP) + blk["sc_b"][None, :, None, None]
        h = out + sc

        co = crop_center(co, h.shape[2], h.shape[3])
        x_in = jnp.concatenate([h, co], axis=1)
        h = modconv(x_in, params["blocks"][2 * i + 1]["conv"], ks, ks)
    return h


# ----------------------------------------------------------------------------
# Deterministic synthetic parameters (PyTorch-style raw layouts)
# ----------------------------------------------------------------------------

def init_params(key, cfg):
    local = cfg["local_latent_dim"]
    gdim = cfg["global_latent_dim"]
    cdim = cfg["coord_num_dir"]
    in_ch = local + cdim
    ks = cfg["ss_unfold_radius"] * 2 + 1
    keys = iter(jax.random.split(key, 256))

    def nrm(shape, scale=1.0):
        return scale * jax.random.normal(next(keys), shape, jnp.float32)

    blocks = []
    for _ in range(cfg["ss_n_layers"]):
        sphere = {
            "sc_w": nrm((local, local), 0.1),
            "sc_b": nrm((local,), 0.1),
            "conv": {"mod_w": nrm((in_ch, gdim)),
                     "mod_b": jnp.ones((in_ch,), jnp.float32),
                     "weight": nrm((local, in_ch, 3, 3)),
                     "bias": nrm((local,), 0.1)},
        }
        condb = {
            "conv": {"mod_w": nrm((in_ch, gdim)),
                     "mod_b": jnp.ones((in_ch,), jnp.float32),
                     "weight": nrm((local, in_ch, ks, ks)),
                     "bias": nrm((local,), 0.1)},
        }
        blocks += [sphere, condb]

    mapping = None
    if cfg["ss_mapping"]:
        L, lr_mul = 8, 0.01
        mapping = {"weight": nrm((L, gdim, gdim)) / lr_mul,   # randn(out,in)/lr_mul
                   "bias": jnp.zeros((L, gdim), jnp.float32),
                   "lr_mul": lr_mul}
    return {"blocks": blocks, "mapping": mapping}


# ----------------------------------------------------------------------------

if __name__ == "__main__":
    cfg = dict(
        ss_n_layers=2,
        local_latent_dim=8,
        global_latent_dim=32,
        coord_num_dir=3,
        ss_unfold_radius=1,          # ConditionalBlock kernel = 3
        ss_mapping=True,
        ss_disable_noise=True,
        ss_coord_all_layers="each_layer",
    )
    key = jax.random.PRNGKey(0)
    kg, kl, kc, kp = jax.random.split(key, 4)

    B, H, W = 2, 16, 16
    global_latent = jax.random.normal(kg, (B, cfg["global_latent_dim"]), jnp.float32)
    local_latent = jax.random.normal(kl, (B, cfg["local_latent_dim"], H, W), jnp.float32)
    coords = jax.random.normal(kc, (B, cfg["coord_num_dir"], H, W), jnp.float32)

    params = init_params(kp, cfg)

    fwd = jax.jit(partial(implicit_function_forward, params, cfg))
    out, _flops = fwd(global_latent, local_latent, coords)
    out = jax.block_until_ready(out)

    expect_hw = H - cfg["ss_n_layers"] * (cfg["ss_unfold_radius"] * 2)
    assert out.shape == (B, cfg["local_latent_dim"], expect_hw, expect_hw), out.shape
    assert bool(jnp.all(jnp.isfinite(out)))

    # Numerical check of the fused kernel against a pure-JAX reference
    ref = reference_forward(params, cfg, global_latent, local_latent, coords)
    err = float(jnp.max(jnp.abs(out - ref)))
    tol = 2e-2 * max(1.0, float(jnp.max(jnp.abs(ref))))
    assert err <= tol, f"kernel/reference mismatch: max|diff|={err}, tol={tol}"

    print("KERNEL_OK")
</pallas_src>

<mosaic_0001>
module attributes {stable_mosaic.version = 11 : i64} {
  func.func @_fused_kernel(%arg0: i32, %arg1: memref<1x8x256xf32, #tpu.memory_space<vmem>>, %arg2: memref<1x8x256xf32, #tpu.memory_space<vmem>>, %arg3: memref<1x2x16x1xf32, #tpu.memory_space<vmem>>, %arg4: memref<1x2x8x1xf32, #tpu.memory_space<vmem>>, %arg5: memref<1x2x16x1xf32, #tpu.memory_space<vmem>>, %arg6: memref<1x2x8x1xf32, #tpu.memory_space<vmem>>, %arg7: memref<2x9x8x16xf32, #tpu.memory_space<vmem>>, %arg8: memref<2x8x1xf32, #tpu.memory_space<vmem>>, %arg9: memref<2x8x8xf32, #tpu.memory_space<vmem>>, %arg10: memref<2x8x1xf32, #tpu.memory_space<vmem>>, %arg11: memref<2x9x8x16xf32, #tpu.memory_space<vmem>>, %arg12: memref<2x8x1xf32, #tpu.memory_space<vmem>>, %arg13: memref<2x8x256xf32, #tpu.memory_space<vmem>>, %arg14: memref<1x8x256xf32, #tpu.memory_space<vmem>>, %arg15: memref<16x256xf32, #tpu.memory_space<vmem>>) attributes {dimension_semantics = [#tpu.dimension_semantics<parallel>], iteration_bounds = array<i64: 2>, scalar_prefetch = 0 : i64, scratch_operands = 1 : i64, tpu.core_type = #tpu.core_type<tc>, window_params = [{transform_indices = @transform_0, window_bounds = array<i64: 1, 8, 256>}, {transform_indices = @transform_1, window_bounds = array<i64: 1, 8, 256>}, {transform_indices = @transform_2, window_bounds = array<i64: 1, 2, 16, 1>}, {transform_indices = @transform_3, window_bounds = array<i64: 1, 2, 8, 1>}, {transform_indices = @transform_4, window_bounds = array<i64: 1, 2, 16, 1>}, {transform_indices = @transform_5, window_bounds = array<i64: 1, 2, 8, 1>}, {pipeline_mode = #tpu.pipeline_mode<synchronous>, transform_indices = @transform_6, window_bounds = array<i64: 2, 9, 8, 16>}, {pipeline_mode = #tpu.pipeline_mode<synchronous>, transform_indices = @transform_7, window_bounds = array<i64: 2, 8, 1>}, {pipeline_mode = #tpu.pipeline_mode<synchronous>, transform_indices = @transform_8, window_bounds = array<i64: 2, 8, 8>}, {pipeline_mode = #tpu.pipeline_mode<synchronous>, transform_indices = @transform_9, window_bounds = array<i64: 2, 8, 1>}, {pipeline_mode = #tpu.pipeline_mode<synchronous>, transform_indices = @transform_10, window_bounds = array<i64: 2, 9, 8, 16>}, {pipeline_mode = #tpu.pipeline_mode<synchronous>, transform_indices = @transform_11, window_bounds = array<i64: 2, 8, 1>}, {pipeline_mode = #tpu.pipeline_mode<synchronous>, transform_indices = @transform_12, window_bounds = array<i64: 2, 8, 256>}, {transform_indices = @transform_13, window_bounds = array<i64: 1, 8, 256>}]} {
    %c0 = arith.constant 0 : index
    %c0_0 = arith.constant 0 : index
    %c0_1 = arith.constant 0 : index
    %0 = vector.load %arg1[%c0, %c0_0, %c0_1] : memref<1x8x256xf32, #tpu.memory_space<vmem>>, vector<1x8x256xf32>
    %1 = vector.shape_cast %0 : vector<1x8x256xf32> to vector<8x256xf32>
    %c0_2 = arith.constant 0 : index
    %c0_3 = arith.constant 0 : index
    %2 = vector.load %arg15[%c0_2, %c0_3] : memref<16x256xf32, #tpu.memory_space<vmem>>, vector<8x256xf32>
    tpu.vector_store %arg15[%c0_2, %c0_3], %1 {strides = array<i32>} : memref<16x256xf32, #tpu.memory_space<vmem>>, vector<8x256xf32>,
    %c0_4 = arith.constant 0 : index
    %c0_5 = arith.constant 0 : index
    %c0_6 = arith.constant 0 : index
    %3 = vector.load %arg2[%c0_4, %c0_5, %c0_6] : memref<1x8x256xf32, #tpu.memory_space<vmem>>, vector<1x8x256xf32>
    %4 = vector.shape_cast %3 : vector<1x8x256xf32> to vector<8x256xf32>
    %c8 = arith.constant 8 : index
    %c0_7 = arith.constant 0 : index
    %5 = vector.load %arg15[%c8, %c0_7] : memref<16x256xf32, #tpu.memory_space<vmem>>, vector<8x256xf32>
    tpu.vector_store %arg15[%c8, %c0_7], %4 {strides = array<i32>} : memref<16x256xf32, #tpu.memory_space<vmem>>, vector<8x256xf32>,
    %c0_8 = arith.constant 0 : index
    %c0_9 = arith.constant 0 : index
    %c0_10 = arith.constant 0 : index
    %6 = vector.load %arg13[%c0_8, %c0_9, %c0_10] : memref<2x8x256xf32, #tpu.memory_space<vmem>>, vector<1x1x256xf32>
    %7 = vector.shape_cast %6 : vector<1x1x256xf32> to vector<1x256xf32>
    %c0_11 = arith.constant 0 : index
    %c1 = arith.constant 1 : index
    %c0_12 = arith.constant 0 : index
    %8 = vector.load %arg13[%c0_11, %c1, %c0_12] : memref<2x8x256xf32, #tpu.memory_space<vmem>>, vector<1x1x256xf32>
    %9 = vector.shape_cast %8 : vector<1x1x256xf32> to vector<1x256xf32>
    %c0_13 = arith.constant 0 : index
    %c2 = arith.constant 2 : index
    %c0_14 = arith.constant 0 : index
    %10 = vector.load %arg13[%c0_13, %c2, %c0_14] : memref<2x8x256xf32, #tpu.memory_space<vmem>>, vector<1x1x256xf32>
    %11 = vector.shape_cast %10 : vector<1x1x256xf32> to vector<1x256xf32>
    %c0_15 = arith.constant 0 : index
    %c3 = arith.constant 3 : index
    %c0_16 = arith.constant 0 : index
    %12 = vector.load %arg13[%c0_15, %c3, %c0_16] : memref<2x8x256xf32, #tpu.memory_space<vmem>>, vector<1x1x256xf32>
    %13 = vector.shape_cast %12 : vector<1x1x256xf32> to vector<1x256xf32>
    %c0_17 = arith.constant 0 : index
    %c4 = arith.constant 4 : index
    %c0_18 = arith.constant 0 : index
    %14 = vector.load %arg13[%c0_17, %c4, %c0_18] : memref<2x8x256xf32, #tpu.memory_space<vmem>>, vector<1x1x256xf32>
    %15 = vector.shape_cast %14 : vector<1x1x256xf32> to vector<1x256xf32>
    %cst = arith.constant 1.000000e+00 : f32
    %16 = vector.broadcast %cst : f32 to vector<1x256xf32>
    %17 = arith.subf %16, %7 : vector<1x256xf32>
    %cst_19 = arith.constant 1.000000e+00 : f32
    %18 = vector.broadcast %cst_19 : f32 to vector<1x256xf32>
    %19 = arith.subf %18, %9 : vector<1x256xf32>
    %cst_20 = arith.constant 1.000000e+00 : f32
    %20 = vector.broadcast %cst_20 : f32 to vector<1x256xf32>
    %21 = arith.subf %20, %11 : vector<1x256xf32>
    %cst_21 = arith.constant 1.000000e+00 : f32
    %22 = vector.broadcast %cst_21 : f32 to vector<1x256xf32>
    %23 = arith.subf %22, %13 : vector<1x256xf32>
    %c0_22 = arith.constant 0 : index
    %c0_23 = arith.constant 0 : index
    %24 = vector.load %arg15[%c0_22, %c0_23] : memref<16x256xf32, #tpu.memory_space<vmem>>, vector<16x256xf32>
    %25 = vector.extract_strided_slice %24 {offsets = [0, 0], sizes = [8, 256], strides = [1, 1]} : vector<16x256xf32> to vector<8x256xf32>
    %c0_24 = arith.constant 0 : index
    %c0_25 = arith.constant 0 : index
    %c0_26 = arith.constant 0 : index
    %c0_27 = arith.constant 0 : index
    %26 = vector.load %arg3[%c0_24, %c0_25, %c0_26, %c0_27] : memref<1x2x16x1xf32, #tpu.memory_space<vmem>>, vector<1x1x16x1xf32>
    %27 = vector.shape_cast %26 : vector<1x1x16x1xf32> to vector<16x1xf32>
    %28 = vector.broadcast %27 : vector<16x1xf32> to vector<16x256xf32>
    %29 = arith.mulf %24, %28 : vector<16x256xf32>
    %c241_i32 = arith.constant 241 : i32
    %30 = tpu.dynamic_rotate %29 by %c241_i32 dim 1 : vector<16x256xf32>, i32 -> vector<16x256xf32>
    %31 = vector.broadcast %7 : vector<1x256xf32> to vector<16x256xf32>
    %32 = arith.mulf %31, %30 : vector<16x256xf32>
    %c1_i32 = arith.constant 1 : i32
    %33 = tpu.dynamic_rotate %29 by %c1_i32 dim 1 : vector<16x256xf32>, i32 -> vector<16x256xf32>
    %34 = vector.broadcast %17 : vector<1x256xf32> to vector<16x256xf32>
    %35 = arith.mulf %34, %33 : vector<16x256xf32>
    %36 = arith.addf %32, %35 : vector<16x256xf32>
    %c15_i32 = arith.constant 15 : i32
    %37 = tpu.dynamic_rotate %29 by %c15_i32 dim 1 : vector<16x256xf32>, i32 -> vector<16x256xf32>
    %38 = vector.broadcast %9 : vector<1x256xf32> to vector<16x256xf32>
    %39 = arith.mulf %38, %37 : vector<16x256xf32>
    %c255_i32 = arith.constant 255 : i32
    %40 = tpu.dynamic_rotate %29 by %c255_i32 dim 1 : vector<16x256xf32>, i32 -> vector<16x256xf32>
    %41 = vector.broadcast %19 : vector<1x256xf32> to vector<16x256xf32>
    %42 = arith.mulf %41, %40 : vector<16x256xf32>
    %43 = arith.addf %39, %42 : vector<16x256xf32>
    %c1_i32_28 = arith.constant 1 : i32
    %44 = tpu.dynamic_rotate %29 by %c1_i32_28 dim 1 : vector<16x256xf32>, i32 -> vector<16x256xf32>
    %45 = vector.broadcast %7 : vector<1x256xf32> to vector<16x256xf32>
    %46 = arith.mulf %45, %44 : vector<16x256xf32>
    %c17_i32 = arith.constant 17 : i32
    %47 = tpu.dynamic_rotate %29 by %c17_i32 dim 1 : vector<16x256xf32>, i32 -> vector<16x256xf32>
    %48 = vector.broadcast %17 : vector<1x256xf32> to vector<16x256xf32>
    %49 = arith.mulf %48, %47 : vector<16x256xf32>
    %50 = arith.addf %46, %49 : vector<16x256xf32>
    %c16_i32 = arith.constant 16 : i32
    %51 = tpu.dynamic_rotate %29 by %c16_i32 dim 1 : vector<16x256xf32>, i32 -> vector<16x256xf32>
    %c31_i32 = arith.constant 31 : i32
    %52 = tpu.dynamic_rotate %29 by %c31_i32 dim 1 : vector<16x256xf32>, i32 -> vector<16x256xf32>
    %53 = vector.broadcast %9 : vector<1x256xf32> to vector<16x256xf32>
    %54 = arith.mulf %53, %52 : vector<16x256xf32>
    %c15_i32_29 = arith.constant 15 : i32
    %55 = tpu.dynamic_rotate %29 by %c15_i32_29 dim 1 : vector<16x256xf32>, i32 -> vector<16x256xf32>
    %56 = vector.broadcast %19 : vector<1x256xf32> to vector<16x256xf32>
    %57 = arith.mulf %56, %55 : vector<16x256xf32>
    %58 = arith.addf %54, %57 : vector<16x256xf32>
    %c225_i32 = arith.constant 225 : i32
    %59 = tpu.dynamic_rotate %29 by %c225_i32 dim 1 : vector<16x256xf32>, i32 -> vector<16x256xf32>
    %60 = vector.broadcast %7 : vector<1x256xf32> to vector<16x256xf32>
    %61 = arith.mulf %60, %59 : vector<16x256xf32>
    %c241_i32_30 = arith.constant 241 : i32
    %62 = tpu.dynamic_rotate %29 by %c241_i32_30 dim 1 : vector<16x256xf32>, i32 -> vector<16x256xf32>
    %63 = vector.broadcast %17 : vector<1x256xf32> to vector<16x256xf32>
    %64 = arith.mulf %63, %62 : vector<16x256xf32>
    %65 = arith.addf %61, %64 : vector<16x256xf32>
    %c240_i32 = arith.constant 240 : i32
    %66 = tpu.dynamic_rotate %29 by %c240_i32 dim 1 : vector<16x256xf32>, i32 -> vector<16x256xf32>
    %c255_i32_31 = arith.constant 255 : i32
    %67 = tpu.dynamic_rotate %29 by %c255_i32_31 dim 1 : vector<16x256xf32>, i32 -> vector<16x256xf32>
    %68 = vector.broadcast %9 : vector<1x256xf32> to vector<16x256xf32>
    %69 = arith.mulf %68, %67 : vector<16x256xf32>
    %c239_i32 = arith.constant 239 : i32
    %70 = tpu.dynamic_rotate %29 by %c239_i32 dim 1 : vector<16x256xf32>, i32 -> vector<16x256xf32>
    %71 = vector.broadcast %19 : vector<1x256xf32> to vector<16x256xf32>
    %72 = arith.mulf %71, %70 : vector<16x256xf32>
    %73 = arith.addf %69, %72 : vector<16x256xf32>
    %cst_32 = arith.constant 0.000000e+00 : f32
    %74 = vector.broadcast %cst_32 : f32 to vector<8x256xf32>
    %75 = vector.broadcast %11 : vector<1x256xf32> to vector<16x256xf32>
    %76 = arith.mulf %75, %36 : vector<16x256xf32>
    %77 = vector.broadcast %21 : vector<1x256xf32> to vector<16x256xf32>
    %78 = arith.mulf %77, %50 : vector<16x256xf32>
    %79 = arith.addf %76, %78 : vector<16x256xf32>
    %c0_33 = arith.constant 0 : index
    %c0_34 = arith.constant 0 : index
    %c0_35 = arith.constant 0 : index
    %c0_36 = arith.constant 0 : index
    %80 = vector.load %arg7[%c0_33, %c0_34, %c0_35, %c0_36] : memref<2x9x8x16xf32, #tpu.memory_space<vmem>>, vector<1x1x8x16xf32>
    %81 = vector.shape_cast %80 : vector<1x1x8x16xf32> to vector<8x16xf32>
    %cst_37 = arith.constant dense<0.000000e+00> : vector<8x256xf32>
    %82 = tpu.matmul %81, %79, %cst_37 {dimension_numbers = #tpu.dot_dimension_numbers<[1], [0], [0], [1], [0, 0, 1, 1], [], []>} : vector<8x16xf32>, vector<16x256xf32>, vector<8x256xf32> -> vector<8x256xf32>
    %83 = arith.addf %74, %82 : vector<8x256xf32>
    %84 = vector.broadcast %11 : vector<1x256xf32> to vector<16x256xf32>
    %85 = arith.mulf %84, %29 : vector<16x256xf32>
    %86 = vector.broadcast %21 : vector<1x256xf32> to vector<16x256xf32>
    %87 = arith.mulf %86, %51 : vector<16x256xf32>
    %88 = arith.addf %85, %87 : vector<16x256xf32>
    %c0_38 = arith.constant 0 : index
    %c1_39 = arith.constant 1 : index
    %c0_40 = arith.constant 0 : index
    %c0_41 = arith.constant 0 : index
    %89 = vector.load %arg7[%c0_38, %c1_39, %c0_40, %c0_41] : memref<2x9x8x16xf32, #tpu.memory_space<vmem>>, vector<1x1x8x16xf32>
    %90 = vector.shape_cast %89 : vector<1x1x8x16xf32> to vector<8x16xf32>
    %cst_42 = arith.constant dense<0.000000e+00> : vector<8x256xf32>
    %91 = tpu.matmul %90, %88, %cst_42 {dimension_numbers = #tpu.dot_dimension_numbers<[1], [0], [0], [1], [0, 0, 1, 1], [], []>} : vector<8x16xf32>, vector<16x256xf32>, vector<8x256xf32> -> vector<8x256xf32>
    %92 = arith.addf %83, %91 : vector<8x256xf32>
    %93 = vector.broadcast %11 : vector<1x256xf32> to vector<16x256xf32>
    %94 = arith.mulf %93, %43 : vector<16x256xf32>
    %95 = vector.broadcast %21 : vector<1x256xf32> to vector<16x256xf32>
    %96 = arith.mulf %95, %58 : vector<16x256xf32>
    %97 = arith.addf %94, %96 : vector<16x256xf32>
    %c0_43 = arith.constant 0 : index
    %c2_44 = arith.constant 2 : index
    %c0_45 = arith.constant 0 : index
    %c0_46 = arith.constant 0 : index
    %98 = vector.load %arg7[%c0_43, %c2_44, %c0_45, %c0_46] : memref<2x9x8x16xf32, #tpu.memory_space<vmem>>, vector<1x1x8x16xf32>
    %99 = vector.shape_cast %98 : vector<1x1x8x16xf32> to vector<8x16xf32>
    %cst_47 = arith.constant dense<0.000000e+00> : vector<8x256xf32>
    %100 = tpu.matmul %99, %97, %cst_47 {dimension_numbers = #tpu.dot_dimension_numbers<[1], [0], [0], [1], [0, 0, 1, 1], [], []>} : vector<8x16xf32>, vector<16x256xf32>, vector<8x256xf32> -> vector<8x256xf32>
    %101 = arith.addf %92, %100 : vector<8x256xf32>
    %c0_48 = arith.constant 0 : index
    %c3_49 = arith.constant 3 : index
    %c0_50 = arith.constant 0 : index
    %c0_51 = arith.constant 0 : index
    %102 = vector.load %arg7[%c0_48, %c3_49, %c0_50, %c0_51] : memref<2x9x8x16xf32, #tpu.memory_space<vmem>>, vector<1x1x8x16xf32>
    %103 = vector.shape_cast %102 : vector<1x1x8x16xf32> to vector<8x16xf32>
    %cst_52 = arith.constant dense<0.000000e+00> : vector<8x256xf32>
    %104 = tpu.matmul %103, %36, %cst_52 {dimension_numbers = #tpu.dot_dimension_numbers<[1], [0], [0], [1], [0, 0, 1, 1], [], []>} : vector<8x16xf32>, vector<16x256xf32>, vector<8x256xf32> -> vector<8x256xf32>
    %105 = arith.addf %101, %104 : vector<8x256xf32>
    %c0_53 = arith.constant 0 : index
    %c4_54 = arith.constant 4 : index
    %c0_55 = arith.constant 0 : index
    %c0_56 = arith.constant 0 : index
    %106 = vector.load %arg7[%c0_53, %c4_54, %c0_55, %c0_56] : memref<2x9x8x16xf32, #tpu.memory_space<vmem>>, vector<1x1x8x16xf32>
    %107 = vector.shape_cast %106 : vector<1x1x8x16xf32> to vector<8x16xf32>
    %cst_57 = arith.constant dense<0.000000e+00> : vector<8x256xf32>
    %108 = tpu.matmul %107, %29, %cst_57 {dimension_numbers = #tpu.dot_dimension_numbers<[1], [0], [0], [1], [0, 0, 1, 1], [], []>} : vector<8x16xf32>, vector<16x256xf32>, vector<8x256xf32> -> vector<8x256xf32>
    %109 = arith.addf %105, %108 : vector<8x256xf32>
    %c0_58 = arith.constant 0 : index
    %c5 = arith.constant 5 : index
    %c0_59 = arith.constant 0 : index
    %c0_60 = arith.constant 0 : index
    %110 = vector.load %arg7[%c0_58, %c5, %c0_59, %c0_60] : memref<2x9x8x16xf32, #tpu.memory_space<vmem>>, vector<1x1x8x16xf32>
    %111 = vector.shape_cast %110 : vector<1x1x8x16xf32> to vector<8x16xf32>
    %cst_61 = arith.constant dense<0.000000e+00> : vector<8x256xf32>
    %112 = tpu.matmul %111, %43, %cst_61 {dimension_numbers = #tpu.dot_dimension_numbers<[1], [0], [0], [1], [0, 0, 1, 1], [], []>} : vector<8x16xf32>, vector<16x256xf32>, vector<8x256xf32> -> vector<8x256xf32>
    %113 = arith.addf %109, %112 : vector<8x256xf32>
    %114 = vector.broadcast %13 : vector<1x256xf32> to vector<16x256xf32>
    %115 = arith.mulf %114, %36 : vector<16x256xf32>
    %116 = vector.broadcast %23 : vector<1x256xf32> to vector<16x256xf32>
    %117 = arith.mulf %116, %65 : vector<16x256xf32>
    %118 = arith.addf %115, %117 : vector<16x256xf32>
    %c0_62 = arith.constant 0 : index
    %c6 = arith.constant 6 : index
    %c0_63 = arith.constant 0 : index
    %c0_64 = arith.constant 0 : index
    %119 = vector.load %arg7[%c0_62, %c6, %c0_63, %c0_64] : memref<2x9x8x16xf32, #tpu.memory_space<vmem>>, vector<1x1x8x16xf32>
    %120 = vector.shape_cast %119 : vector<1x1x8x16xf32> to vector<8x16xf32>
    %cst_65 = arith.constant dense<0.000000e+00> : vector<8x256xf32>
    %121 = tpu.matmul %120, %118, %cst_65 {dimension_numbers = #tpu.dot_dimension_numbers<[1], [0], [0], [1], [0, 0, 1, 1], [], []>} : vector<8x16xf32>, vector<16x256xf32>, vector<8x256xf32> -> vector<8x256xf32>
    %122 = arith.addf %113, %121 : vector<8x256xf32>
    %123 = vector.broadcast %13 : vector<1x256xf32> to vector<16x256xf32>
    %124 = arith.mulf %123, %29 : vector<16x256xf32>
    %125 = vector.broadcast %23 : vector<1x256xf32> to vector<16x256xf32>
    %126 = arith.mulf %125, %66 : vector<16x256xf32>
    %127 = arith.addf %124, %126 : vector<16x256xf32>
    %c0_66 = arith.constant 0 : index
    %c7 = arith.constant 7 : index
    %c0_67 = arith.constant 0 : index
    %c0_68 = arith.constant 0 : index
    %128 = vector.load %arg7[%c0_66, %c7, %c0_67, %c0_68] : memref<2x9x8x16xf32, #tpu.memory_space<vmem>>, vector<1x1x8x16xf32>
    %129 = vector.shape_cast %128 : vector<1x1x8x16xf32> to vector<8x16xf32>
    %cst_69 = arith.constant dense<0.000000e+00> : vector<8x256xf32>
    %130 = tpu.matmul %129, %127, %cst_69 {dimension_numbers = #tpu.dot_dimension_numbers<[1], [0], [0], [1], [0, 0, 1, 1], [], []>} : vector<8x16xf32>, vector<16x256xf32>, vector<8x256xf32> -> vector<8x256xf32>
    %131 = arith.addf %122, %130 : vector<8x256xf32>
    %132 = vector.broadcast %13 : vector<1x256xf32> to vector<16x256xf32>
    %133 = arith.mulf %132, %43 : vector<16x256xf32>
    %134 = vector.broadcast %23 : vector<1x256xf32> to vector<16x256xf32>
    %135 = arith.mulf %134, %73 : vector<16x256xf32>
    %136 = arith.addf %133, %135 : vector<16x256xf32>
    %c0_70 = arith.constant 0 : index
    %c8_71 = arith.constant 8 : index
    %c0_72 = arith.constant 0 : index
    %c0_73 = arith.constant 0 : index
    %137 = vector.load %arg7[%c0_70, %c8_71, %c0_72, %c0_73] : memref<2x9x8x16xf32, #tpu.memory_space<vmem>>, vector<1x1x8x16xf32>
    %138 = vector.shape_cast %137 : vector<1x1x8x16xf32> to vector<8x16xf32>
    %cst_74 = arith.constant dense<0.000000e+00> : vector<8x256xf32>
    %139 = tpu.matmul %138, %136, %cst_74 {dimension_numbers = #tpu.dot_dimension_numbers<[1], [0], [0], [1], [0, 0, 1, 1], [], []>} : vector<8x16xf32>, vector<16x256xf32>, vector<8x256xf32> -> vector<8x256xf32>
    %140 = arith.addf %131, %139 : vector<8x256xf32>
    %c0_75 = arith.constant 0 : index
    %c0_76 = arith.constant 0 : index
    %c0_77 = arith.constant 0 : index
    %c0_78 = arith.constant 0 : index
    %141 = vector.load %arg4[%c0_75, %c0_76, %c0_77, %c0_78] : memref<1x2x8x1xf32, #tpu.memory_space<vmem>>, vector<1x1x8x1xf32>
    %142 = vector.shape_cast %141 : vector<1x1x8x1xf32> to vector<8x1xf32>
    %143 = vector.broadcast %142 : vector<8x1xf32> to vector<8x256xf32>
    %144 = arith.mulf %140, %143 : vector<8x256xf32>
    %c0_79 = arith.constant 0 : index
    %c0_80 = arith.constant 0 : index
    %c0_81 = arith.constant 0 : index
    %145 = vector.load %arg8[%c0_79, %c0_80, %c0_81] : memref<2x8x1xf32, #tpu.memory_space<vmem>>, vector<1x8x1xf32>
    %146 = vector.shape_cast %145 : vector<1x8x1xf32> to vector<8x1xf32>
    %147 = vector.broadcast %146 : vector<8x1xf32> to vector<8x256xf32>
    %148 = arith.addf %144, %147 : vector<8x256xf32>
    %cst_82 = arith.constant 0.000000e+00 : f32
    %149 = vector.broadcast %cst_82 : f32 to vector<8x256xf32>
    %150 = arith.cmpf oge, %148, %149 : vector<8x256xf32>
    %cst_83 = arith.constant 2.000000e-01 : f32
    %151 = vector.broadcast %cst_83 : f32 to vector<8x256xf32>
    %152 = arith.mulf %151, %148 : vector<8x256xf32>
    %153 = arith.select %150, %148, %152 : vector<8x256xi1>, vector<8x256xf32>
    %cst_84 = arith.constant 1.41421354 : f32
    %154 = vector.broadcast %cst_84 : f32 to vector<8x256xf32>
    %155 = arith.mulf %153, %154 : vector<8x256xf32>
    %c0_85 = arith.constant 0 : index
    %c0_86 = arith.constant 0 : index
    %c0_87 = arith.constant 0 : index
    %156 = vector.load %arg9[%c0_85, %c0_86, %c0_87] : memref<2x8x8xf32, #tpu.memory_space<vmem>>, vector<1x8x8xf32>
    %157 = vector.shape_cast %156 : vector<1x8x8xf32> to vector<8x8xf32>
    %cst_88 = arith.constant dense<0.000000e+00> : vector<8x256xf32>
    %158 = tpu.matmul %157, %25, %cst_88 {dimension_numbers = #tpu.dot_dimension_numbers<[1], [0], [0], [1], [0, 0, 1, 1], [], []>} : vector<8x8xf32>, vector<8x256xf32>, vector<8x256xf32> -> vector<8x256xf32>
    %159 = arith.addf %155, %158 : vector<8x256xf32>
    %c0_89 = arith.constant 0 : index
    %c0_90 = arith.constant 0 : index
    %c0_91 = arith.constant 0 : index
    %160 = vector.load %arg10[%c0_89, %c0_90, %c0_91] : memref<2x8x1xf32, #tpu.memory_space<vmem>>, vector<1x8x1xf32>
    %161 = vector.shape_cast %160 : vector<1x8x1xf32> to vector<8x1xf32>
    %162 = vector.broadcast %161 : vector<8x1xf32> to vector<8x256xf32>
    %163 = arith.addf %159, %162 : vector<8x256xf32>
    %c0_92 = arith.constant 0 : index
    %c0_93 = arith.constant 0 : index
    %164 = vector.load %arg15[%c0_92, %c0_93] : memref<16x256xf32, #tpu.memory_space<vmem>>, vector<8x256xf32>
    tpu.vector_store %arg15[%c0_92, %c0_93], %163 {strides = array<i32>} : memref<16x256xf32, #tpu.memory_space<vmem>>, vector<8x256xf32>,
    %c0_94 = arith.constant 0 : index
    %c0_95 = arith.constant 0 : index
    %165 = vector.load %arg15[%c0_94, %c0_95] : memref<16x256xf32, #tpu.memory_space<vmem>>, vector<16x256xf32>
    %c0_96 = arith.constant 0 : index
    %c0_97 = arith.constant 0 : index
    %c0_98 = arith.constant 0 : index
    %c0_99 = arith.constant 0 : index
    %166 = vector.load %arg5[%c0_96, %c0_97, %c0_98, %c0_99] : memref<1x2x16x1xf32, #tpu.memory_space<vmem>>, vector<1x1x16x1xf32>
    %167 = vector.shape_cast %166 : vector<1x1x16x1xf32> to vector<16x1xf32>
    %168 = vector.broadcast %167 : vector<16x1xf32> to vector<16x256xf32>
    %169 = arith.mulf %165, %168 : vector<16x256xf32>
    %cst_100 = arith.constant 0.000000e+00 : f32
    %170 = vector.broadcast %cst_100 : f32 to vector<8x256xf32>
    %c0_101 = arith.constant 0 : index
    %c0_102 = arith.constant 0 : index
    %c0_103 = arith.constant 0 : index
    %c0_104 = arith.constant 0 : index
    %171 = vector.load %arg11[%c0_101, %c0_102, %c0_103, %c0_104] : memref<2x9x8x16xf32, #tpu.memory_space<vmem>>, vector<1x1x8x16xf32>
    %172 = vector.shape_cast %171 : vector<1x1x8x16xf32> to vector<8x16xf32>
    %c17_i32_105 = arith.constant 17 : i32
    %173 = tpu.dynamic_rotate %169 by %c17_i32_105 dim 1 : vector<16x256xf32>, i32 -> vector<16x256xf32>
    %cst_106 = arith.constant dense<0.000000e+00> : vector<8x256xf32>
    %174 = tpu.matmul %172, %173, %cst_106 {dimension_numbers = #tpu.dot_dimension_numbers<[1], [0], [0], [1], [0, 0, 1, 1], [], []>} : vector<8x16xf32>, vector<16x256xf32>, vector<8x256xf32> -> vector<8x256xf32>
    %175 = arith.addf %170, %174 : vector<8x256xf32>
    %c0_107 = arith.constant 0 : index
    %c1_108 = arith.constant 1 : index
    %c0_109 = arith.constant 0 : index
    %c0_110 = arith.constant 0 : index
    %176 = vector.load %arg11[%c0_107, %c1_108, %c0_109, %c0_110] : memref<2x9x8x16xf32, #tpu.memory_space<vmem>>, vector<1x1x8x16xf32>
    %177 = vector.shape_cast %176 : vector<1x1x8x16xf32> to vector<8x16xf32>
    %c16_i32_111 = arith.constant 16 : i32
    %178 = tpu.dynamic_rotate %169 by %c16_i32_111 dim 1 : vector<16x256xf32>, i32 -> vector<16x256xf32>
    %cst_112 = arith.constant dense<0.000000e+00> : vector<8x256xf32>
    %179 = tpu.matmul %177, %178, %cst_112 {dimension_numbers = #tpu.dot_dimension_numbers<[1], [0], [0], [1], [0, 0, 1, 1], [], []>} : vector<8x16xf32>, vector<16x256xf32>, vector<8x256xf32> -> vector<8x256xf32>
    %180 = arith.addf %175, %179 : vector<8x256xf32>
    %c0_113 = arith.constant 0 : index
    %c2_114 = arith.constant 2 : index
    %c0_115 = arith.constant 0 : index
    %c0_116 = arith.constant 0 : index
    %181 = vector.load %arg11[%c0_113, %c2_114, %c0_115, %c0_116] : memref<2x9x8x16xf32, #tpu.memory_space<vmem>>, vector<1x1x8x16xf32>
    %182 = vector.shape_cast %181 : vector<1x1x8x16xf32> to vector<8x16xf32>
    %c15_i32_117 = arith.constant 15 : i32
    %183 = tpu.dynamic_rotate %169 by %c15_i32_117 dim 1 : vector<16x256xf32>, i32 -> vector<16x256xf32>
    %cst_118 = arith.constant dense<0.000000e+00> : vector<8x256xf32>
    %184 = tpu.matmul %182, %183, %cst_118 {dimension_numbers = #tpu.dot_dimension_numbers<[1], [0], [0], [1], [0, 0, 1, 1], [], []>} : vector<8x16xf32>, vector<16x256xf32>, vector<8x256xf32> -> vector<8x256xf32>
    %185 = arith.addf %180, %184 : vector<8x256xf32>
    %c0_119 = arith.constant 0 : index
    %c3_120 = arith.constant 3 : index
    %c0_121 = arith.constant 0 : index
    %c0_122 = arith.constant 0 : index
    %186 = vector.load %arg11[%c0_119, %c3_120, %c0_121, %c0_122] : memref<2x9x8x16xf32, #tpu.memory_space<vmem>>, vector<1x1x8x16xf32>
    %187 = vector.shape_cast %186 : vector<1x1x8x16xf32> to vector<8x16xf32>
    %c1_i32_123 = arith.constant 1 : i32
    %188 = tpu.dynamic_rotate %169 by %c1_i32_123 dim 1 : vector<16x256xf32>, i32 -> vector<16x256xf32>
    %cst_124 = arith.constant dense<0.000000e+00> : vector<8x256xf32>
    %189 = tpu.matmul %187, %188, %cst_124 {dimension_numbers = #tpu.dot_dimension_numbers<[1], [0], [0], [1], [0, 0, 1, 1], [], []>} : vector<8x16xf32>, vector<16x256xf32>, vector<8x256xf32> -> vector<8x256xf32>
    %190 = arith.addf %185, %189 : vector<8x256xf32>
    %c0_125 = arith.constant 0 : index
    %c4_126 = arith.constant 4 : index
    %c0_127 = arith.constant 0 : index
    %c0_128 = arith.constant 0 : index
    %191 = vector.load %arg11[%c0_125, %c4_126, %c0_127, %c0_128] : memref<2x9x8x16xf32, #tpu.memory_space<vmem>>, vector<1x1x8x16xf32>
    %192 = vector.shape_cast %191 : vector<1x1x8x16xf32> to vector<8x16xf32>
    %cst_129 = arith.constant dense<0.000000e+00> : vector<8x256xf32>
    %193 = tpu.matmul %192, %169, %cst_129 {dimension_numbers = #tpu.dot_dimension_numbers<[1], [0], [0], [1], [0, 0, 1, 1], [], []>} : vector<8x16xf32>, vector<16x256xf32>, vector<8x256xf32> -> vector<8x256xf32>
    %194 = arith.addf %190, %193 : vector<8x256xf32>
    %c0_130 = arith.constant 0 : index
    %c5_131 = arith.constant 5 : index
    %c0_132 = arith.constant 0 : index
    %c0_133 = arith.constant 0 : index
    %195 = vector.load %arg11[%c0_130, %c5_131, %c0_132, %c0_133] : memref<2x9x8x16xf32, #tpu.memory_space<vmem>>, vector<1x1x8x16xf32>
    %196 = vector.shape_cast %195 : vector<1x1x8x16xf32> to vector<8x16xf32>
    %c255_i32_134 = arith.constant 255 : i32
    %197 = tpu.dynamic_rotate %169 by %c255_i32_134 dim 1 : vector<16x256xf32>, i32 -> vector<16x256xf32>
    %cst_135 = arith.constant dense<0.000000e+00> : vector<8x256xf32>
    %198 = tpu.matmul %196, %197, %cst_135 {dimension_numbers = #tpu.dot_dimension_numbers<[1], [0], [0], [1], [0, 0, 1, 1], [], []>} : vector<8x16xf32>, vector<16x256xf32>, vector<8x256xf32> -> vector<8x256xf32>
    %199 = arith.addf %194, %198 : vector<8x256xf32>
    %c0_136 = arith.constant 0 : index
    %c6_137 = arith.constant 6 : index
    %c0_138 = arith.constant 0 : index
    %c0_139 = arith.constant 0 : index
    %200 = vector.load %arg11[%c0_136, %c6_137, %c0_138, %c0_139] : memref<2x9x8x16xf32, #tpu.memory_space<vmem>>, vector<1x1x8x16xf32>
    %201 = vector.shape_cast %200 : vector<1x1x8x16xf32> to vector<8x16xf32>
    %c241_i32_140 = arith.constant 241 : i32
    %202 = tpu.dynamic_rotate %169 by %c241_i32_140 dim 1 : vector<16x256xf32>, i32 -> vector<16x256xf32>
    %cst_141 = arith.constant dense<0.000000e+00> : vector<8x256xf32>
    %203 = tpu.matmul %201, %202, %cst_141 {dimension_numbers = #tpu.dot_dimension_numbers<[1], [0], [0], [1], [0, 0, 1, 1], [], []>} : vector<8x16xf32>, vector<16x256xf32>, vector<8x256xf32> -> vector<8x256xf32>
    %204 = arith.addf %199, %203 : vector<8x256xf32>
    %c0_142 = arith.constant 0 : index
    %c7_143 = arith.constant 7 : index
    %c0_144 = arith.constant 0 : index
    %c0_145 = arith.constant 0 : index
    %205 = vector.load %arg11[%c0_142, %c7_143, %c0_144, %c0_145] : memref<2x9x8x16xf32, #tpu.memory_space<vmem>>, vector<1x1x8x16xf32>
    %206 = vector.shape_cast %205 : vector<1x1x8x16xf32> to vector<8x16xf32>
    %c240_i32_146 = arith.constant 240 : i32
    %207 = tpu.dynamic_rotate %169 by %c240_i32_146 dim 1 : vector<16x256xf32>, i32 -> vector<16x256xf32>
    %cst_147 = arith.constant dense<0.000000e+00> : vector<8x256xf32>
    %208 = tpu.matmul %206, %207, %cst_147 {dimension_numbers = #tpu.dot_dimension_numbers<[1], [0], [0], [1], [0, 0, 1, 1], [], []>} : vector<8x16xf32>, vector<16x256xf32>, vector<8x256xf32> -> vector<8x256xf32>
    %209 = arith.addf %204, %208 : vector<8x256xf32>
    %c0_148 = arith.constant 0 : index
    %c8_149 = arith.constant 8 : index
    %c0_150 = arith.constant 0 : index
    %c0_151 = arith.constant 0 : index
    %210 = vector.load %arg11[%c0_148, %c8_149, %c0_150, %c0_151] : memref<2x9x8x16xf32, #tpu.memory_space<vmem>>, vector<1x1x8x16xf32>
    %211 = vector.shape_cast %210 : vector<1x1x8x16xf32> to vector<8x16xf32>
    %c239_i32_152 = arith.constant 239 : i32
    %212 = tpu.dynamic_rotate %169 by %c239_i32_152 dim 1 : vector<16x256xf32>, i32 -> vector<16x256xf32>
    %cst_153 = arith.constant dense<0.000000e+00> : vector<8x256xf32>
    %213 = tpu.matmul %211, %212, %cst_153 {dimension_numbers = #tpu.dot_dimension_numbers<[1], [0], [0], [1], [0, 0, 1, 1], [], []>} : vector<8x16xf32>, vector<16x256xf32>, vector<8x256xf32> -> vector<8x256xf32>
    %214 = arith.addf %209, %213 : vector<8x256xf32>
    %c0_154 = arith.constant 0 : index
    %c0_155 = arith.constant 0 : index
    %c0_156 = arith.constant 0 : index
    %c0_157 = arith.constant 0 : index
    %215 = vector.load %arg6[%c0_154, %c0_155, %c0_156, %c0_157] : memref<1x2x8x1xf32, #tpu.memory_space<vmem>>, vector<1x1x8x1xf32>
    %216 = vector.shape_cast %215 : vector<1x1x8x1xf32> to vector<8x1xf32>
    %217 = vector.broadcast %216 : vector<8x1xf32> to vector<8x256xf32>
    %218 = arith.mulf %214, %217 : vector<8x256xf32>
    %c0_158 = arith.constant 0 : index
    %c0_159 = arith.constant 0 : index
    %c0_160 = arith.constant 0 : index
    %219 = vector.load %arg12[%c0_158, %c0_159, %c0_160] : memref<2x8x1xf32, #tpu.memory_space<vmem>>, vector<1x8x1xf32>
    %220 = vector.shape_cast %219 : vector<1x8x1xf32> to vector<8x1xf32>
    %221 = vector.broadcast %220 : vector<8x1xf32> to vector<8x256xf32>
    %222 = arith.addf %218, %221 : vector<8x256xf32>
    %cst_161 = arith.constant 0.000000e+00 : f32
    %223 = vector.broadcast %cst_161 : f32 to vector<8x256xf32>
    %224 = arith.cmpf oge, %222, %223 : vector<8x256xf32>
    %cst_162 = arith.constant 2.000000e-01 : f32
    %225 = vector.broadcast %cst_162 : f32 to vector<8x256xf32>
    %226 = arith.mulf %225, %222 : vector<8x256xf32>
    %227 = arith.select %224, %222, %226 : vector<8x256xi1>, vector<8x256xf32>
    %cst_163 = arith.constant 1.41421354 : f32
    %228 = vector.broadcast %cst_163 : f32 to vector<8x256xf32>
    %229 = arith.mulf %227, %228 : vector<8x256xf32>
    %230 = vector.broadcast %15 : vector<1x256xf32> to vector<8x256xf32>
    %231 = arith.mulf %229, %230 : vector<8x256xf32>
    %c0_164 = arith.constant 0 : index
    %c0_165 = arith.constant 0 : index
    %232 = vector.load %arg15[%c0_164, %c0_165] : memref<16x256xf32, #tpu.memory_space<vmem>>, vector<8x256xf32>
    tpu.vector_store %arg15[%c0_164, %c0_165], %231 {strides = array<i32>} : memref<16x256xf32, #tpu.memory_space<vmem>>, vector<8x256xf32>,
    %c1_166 = arith.constant 1 : index
    %c0_167 = arith.constant 0 : index
    %c0_168 = arith.constant 0 : index
    %233 = vector.load %arg13[%c1_166, %c0_167, %c0_168] : memref<2x8x256xf32, #tpu.memory_space<vmem>>, vector<1x1x256xf32>
    %234 = vector.shape_cast %233 : vector<1x1x256xf32> to vector<1x256xf32>
    %c1_169 = arith.constant 1 : index
    %c1_170 = arith.constant 1 : index
    %c0_171 = arith.constant 0 : index
    %235 = vector.load %arg13[%c1_169, %c1_170, %c0_171] : memref<2x8x256xf32, #tpu.memory_space<vmem>>, vector<1x1x256xf32>
    %236 = vector.shape_cast %235 : vector<1x1x256xf32> to vector<1x256xf32>
    %c1_172 = arith.constant 1 : index
    %c2_173 = arith.constant 2 : index
    %c0_174 = arith.constant 0 : index
    %237 = vector.load %arg13[%c1_172, %c2_173, %c0_174] : memref<2x8x256xf32, #tpu.memory_space<vmem>>, vector<1x1x256xf32>
    %238 = vector.shape_cast %237 : vector<1x1x256xf32> to vector<1x256xf32>
    %c1_175 = arith.constant 1 : index
    %c3_176 = arith.constant 3 : index
    %c0_177 = arith.constant 0 : index
    %239 = vector.load %arg13[%c1_175, %c3_176, %c0_177] : memref<2x8x256xf32, #tpu.memory_space<vmem>>, vector<1x1x256xf32>
    %240 = vector.shape_cast %239 : vector<1x1x256xf32> to vector<1x256xf32>
    %c1_178 = arith.constant 1 : index
    %c4_179 = arith.constant 4 : index
    %c0_180 = arith.constant 0 : index
    %241 = vector.load %arg13[%c1_178, %c4_179, %c0_180] : memref<2x8x256xf32, #tpu.memory_space<vmem>>, vector<1x1x256xf32>
    %242 = vector.shape_cast %241 : vector<1x1x256xf32> to vector<1x256xf32>
    %cst_181 = arith.constant 1.000000e+00 : f32
    %243 = vector.broadcast %cst_181 : f32 to vector<1x256xf32>
    %244 = arith.subf %243, %234 : vector<1x256xf32>
    %cst_182 = arith.constant 1.000000e+00 : f32
    %245 = vector.broadcast %cst_182 : f32 to vector<1x256xf32>
    %246 = arith.subf %245, %236 : vector<1x256xf32>
    %cst_183 = arith.constant 1.000000e+00 : f32
    %247 = vector.broadcast %cst_183 : f32 to vector<1x256xf32>
    %248 = arith.subf %247, %238 : vector<1x256xf32>
    %cst_184 = arith.constant 1.000000e+00 : f32
    %249 = vector.broadcast %cst_184 : f32 to vector<1x256xf32>
    %250 = arith.subf %249, %240 : vector<1x256xf32>
    %c0_185 = arith.constant 0 : index
    %c0_186 = arith.constant 0 : index
    %251 = vector.load %arg15[%c0_185, %c0_186] : memref<16x256xf32, #tpu.memory_space<vmem>>, vector<16x256xf32>
    %252 = vector.extract_strided_slice %251 {offsets = [0, 0], sizes = [8, 256], strides = [1, 1]} : vector<16x256xf32> to vector<8x256xf32>
    %c0_187 = arith.constant 0 : index
    %c1_188 = arith.constant 1 : index
    %c0_189 = arith.constant 0 : index
    %c0_190 = arith.constant 0 : index
    %253 = vector.load %arg3[%c0_187, %c1_188, %c0_189, %c0_190] : memref<1x2x16x1xf32, #tpu.memory_space<vmem>>, vector<1x1x16x1xf32>
    %254 = vector.shape_cast %253 : vector<1x1x16x1xf32> to vector<16x1xf32>
    %255 = vector.broadcast %254 : vector<16x1xf32> to vector<16x256xf32>
    %256 = arith.mulf %251, %255 : vector<16x256xf32>
    %c243_i32 = arith.constant 243 : i32
    %257 = tpu.dynamic_rotate %256 by %c243_i32 dim 1 : vector<16x256xf32>, i32 -> vector<16x256xf32>
    %258 = vector.broadcast %234 : vector<1x256xf32> to vector<16x256xf32>
    %259 = arith.mulf %258, %257 : vector<16x256xf32>
    %c1_i32_191 = arith.constant 1 : i32
    %260 = tpu.dynamic_rotate %256 by %c1_i32_191 dim 1 : vector<16x256xf32>, i32 -> vector<16x256xf32>
    %261 = vector.broadcast %244 : vector<1x256xf32> to vector<16x256xf32>
    %262 = arith.mulf %261, %260 : vector<16x256xf32>
    %263 = arith.addf %259, %262 : vector<16x256xf32>
    %c13_i32 = arith.constant 13 : i32
    %264 = tpu.dynamic_rotate %256 by %c13_i32 dim 1 : vector<16x256xf32>, i32 -> vector<16x256xf32>
    %265 = vector.broadcast %236 : vector<1x256xf32> to vector<16x256xf32>
    %266 = arith.mulf %265, %264 : vector<16x256xf32>
    %c255_i32_192 = arith.constant 255 : i32
    %267 = tpu.dynamic_rotate %256 by %c255_i32_192 dim 1 : vector<16x256xf32>, i32 -> vector<16x256xf32>
    %268 = vector.broadcast %246 : vector<1x256xf32> to vector<16x256xf32>
    %269 = arith.mulf %268, %267 : vector<16x256xf32>
    %270 = arith.addf %266, %269 : vector<16x256xf32>
    %c3_i32 = arith.constant 3 : i32
    %271 = tpu.dynamic_rotate %256 by %c3_i32 dim 1 : vector<16x256xf32>, i32 -> vector<16x256xf32>
    %272 = vector.broadcast %234 : vector<1x256xf32> to vector<16x256xf32>
    %273 = arith.mulf %272, %271 : vector<16x256xf32>
    %c17_i32_193 = arith.constant 17 : i32
    %274 = tpu.dynamic_rotate %256 by %c17_i32_193 dim 1 : vector<16x256xf32>, i32 -> vector<16x256xf32>
    %275 = vector.broadcast %244 : vector<1x256xf32> to vector<16x256xf32>
    %276 = arith.mulf %275, %274 : vector<16x256xf32>
    %277 = arith.addf %273, %276 : vector<16x256xf32>
    %c16_i32_194 = arith.constant 16 : i32
    %278 = tpu.dynamic_rotate %256 by %c16_i32_194 dim 1 : vector<16x256xf32>, i32 -> vector<16x256xf32>
    %c29_i32 = arith.constant 29 : i32
    %279 = tpu.dynamic_rotate %256 by %c29_i32 dim 1 : vector<16x256xf32>, i32 -> vector<16x256xf32>
    %280 = vector.broadcast %236 : vector<1x256xf32> to vector<16x256xf32>
    %281 = arith.mulf %280, %279 : vector<16x256xf32>
    %c15_i32_195 = arith.constant 15 : i32
    %282 = tpu.dynamic_rotate %256 by %c15_i32_195 dim 1 : vector<16x256xf32>, i32 -> vector<16x256xf32>
    %283 = vector.broadcast %246 : vector<1x256xf32> to vector<16x256xf32>
    %284 = arith.mulf %283, %282 : vector<16x256xf32>
    %285 = arith.addf %281, %284 : vector<16x256xf32>
    %c227_i32 = arith.constant 227 : i32
    %286 = tpu.dynamic_rotate %256 by %c227_i32 dim 1 : vector<16x256xf32>, i32 -> vector<16x256xf32>
    %287 = vector.broadcast %234 : vector<1x256xf32> to vector<16x256xf32>
    %288 = arith.mulf %287, %286 : vector<16x256xf32>
    %c241_i32_196 = arith.constant 241 : i32
    %289 = tpu.dynamic_rotate %256 by %c241_i32_196 dim 1 : vector<16x256xf32>, i32 -> vector<16x256xf32>
    %290 = vector.broadcast %244 : vector<1x256xf32> to vector<16x256xf32>
    %291 = arith.mulf %290, %289 : vector<16x256xf32>
    %292 = arith.addf %288, %291 : vector<16x256xf32>
    %c240_i32_197 = arith.constant 240 : i32
    %293 = tpu.dynamic_rotate %256 by %c240_i32_197 dim 1 : vector<16x256xf32>, i32 -> vector<16x256xf32>
    %c253_i32 = arith.constant 253 : i32
    %294 = tpu.dynamic_rotate %256 by %c253_i32 dim 1 : vector<16x256xf32>, i32 -> vector<16x256xf32>
    %295 = vector.broadcast %236 : vector<1x256xf32> to vector<16x256xf32>
    %296 = arith.mulf %295, %294 : vector<16x256xf32>
    %c239_i32_198 = arith.constant 239 : i32
    %297 = tpu.dynamic_rotate %256 by %c239_i32_198 dim 1 : vector<16x256xf32>, i32 -> vector<16x256xf32>
    %298 = vector.broadcast %246 : vector<1x256xf32> to vector<16x256xf32>
    %299 = arith.mulf %298, %297 : vector<16x256xf32>
    %300 = arith.addf %296, %299 : vector<16x256xf32>
    %cst_199 = arith.constant 0.000000e+00 : f32
    %301 = vector.broadcast %cst_199 : f32 to vector<8x256xf32>
    %302 = vector.broadcast %238 : vector<1x256xf32> to vector<16x256xf32>
    %303 = arith.mulf %302, %263 : vector<16x256xf32>
    %304 = vector.broadcast %248 : vector<1x256xf32> to vector<16x256xf32>
    %305 = arith.mulf %304, %277 : vector<16x256xf32>
    %306 = arith.addf %303, %305 : vector<16x256xf32>
    %c1_200 = arith.constant 1 : index
    %c0_201 = arith.constant 0 : index
    %c0_202 = arith.constant 0 : index
    %c0_203 = arith.constant 0 : index
    %307 = vector.load %arg7[%c1_200, %c0_201, %c0_202, %c0_203] : memref<2x9x8x16xf32, #tpu.memory_space<vmem>>, vector<1x1x8x16xf32>
    %308 = vector.shape_cast %307 : vector<1x1x8x16xf32> to vector<8x16xf32>
    %cst_204 = arith.constant dense<0.000000e+00> : vector<8x256xf32>
    %309 = tpu.matmul %308, %306, %cst_204 {dimension_numbers = #tpu.dot_dimension_numbers<[1], [0], [0], [1], [0, 0, 1, 1], [], []>} : vector<8x16xf32>, vector<16x256xf32>, vector<8x256xf32> -> vector<8x256xf32>
    %310 = arith.addf %301, %309 : vector<8x256xf32>
    %311 = vector.broadcast %238 : vector<1x256xf32> to vector<16x256xf32>
    %312 = arith.mulf %311, %256 : vector<16x256xf32>
    %313 = vector.broadcast %248 : vector<1x256xf32> to vector<16x256xf32>
    %314 = arith.mulf %313, %278 : vector<16x256xf32>
    %315 = arith.addf %312, %314 : vector<16x256xf32>
    %c1_205 = arith.constant 1 : index
    %c1_206 = arith.constant 1 : index
    %c0_207 = arith.constant 0 : index
    %c0_208 = arith.constant 0 : index
    %316 = vector.load %arg7[%c1_205, %c1_206, %c0_207, %c0_208] : memref<2x9x8x16xf32, #tpu.memory_space<vmem>>, vector<1x1x8x16xf32>
    %317 = vector.shape_cast %316 : vector<1x1x8x16xf32> to vector<8x16xf32>
    %cst_209 = arith.constant dense<0.000000e+00> : vector<8x256xf32>
    %318 = tpu.matmul %317, %315, %cst_209 {dimension_numbers = #tpu.dot_dimension_numbers<[1], [0], [0], [1], [0, 0, 1, 1], [], []>} : vector<8x16xf32>, vector<16x256xf32>, vector<8x256xf32> -> vector<8x256xf32>
    %319 = arith.addf %310, %318 : vector<8x256xf32>
    %320 = vector.broadcast %238 : vector<1x256xf32> to vector<16x256xf32>
    %321 = arith.mulf %320, %270 : vector<16x256xf32>
    %322 = vector.broadcast %248 : vector<1x256xf32> to vector<16x256xf32>
    %323 = arith.mulf %322, %285 : vector<16x256xf32>
    %324 = arith.addf %321, %323 : vector<16x256xf32>
    %c1_210 = arith.constant 1 : index
    %c2_211 = arith.constant 2 : index
    %c0_212 = arith.constant 0 : index
    %c0_213 = arith.constant 0 : index
    %325 = vector.load %arg7[%c1_210, %c2_211, %c0_212, %c0_213] : memref<2x9x8x16xf32, #tpu.memory_space<vmem>>, vector<1x1x8x16xf32>
    %326 = vector.shape_cast %325 : vector<1x1x8x16xf32> to vector<8x16xf32>
    %cst_214 = arith.constant dense<0.000000e+00> : vector<8x256xf32>
    %327 = tpu.matmul %326, %324, %cst_214 {dimension_numbers = #tpu.dot_dimension_numbers<[1], [0], [0], [1], [0, 0, 1, 1], [], []>} : vector<8x16xf32>, vector<16x256xf32>, vector<8x256xf32> -> vector<8x256xf32>
    %328 = arith.addf %319, %327 : vector<8x256xf32>
    %c1_215 = arith.constant 1 : index
    %c3_216 = arith.constant 3 : index
    %c0_217 = arith.constant 0 : index
    %c0_218 = arith.constant 0 : index
    %329 = vector.load %arg7[%c1_215, %c3_216, %c0_217, %c0_218] : memref<2x9x8x16xf32, #tpu.memory_space<vmem>>, vector<1x1x8x16xf32>
    %330 = vector.shape_cast %329 : vector<1x1x8x16xf32> to vector<8x16xf32>
    %cst_219 = arith.constant dense<0.000000e+00> : vector<8x256xf32>
    %331 = tpu.matmul %330, %263, %cst_219 {dimension_numbers = #tpu.dot_dimension_numbers<[1], [0], [0], [1], [0, 0, 1, 1], [], []>} : vector<8x16xf32>, vector<16x256xf32>, vector<8x256xf32> -> vector<8x256xf32>
    %332 = arith.addf %328, %331 : vector<8x256xf32>
    %c1_220 = arith.constant 1 : index
    %c4_221 = arith.constant 4 : index
    %c0_222 = arith.constant 0 : index
    %c0_223 = arith.constant 0 : index
    %333 = vector.load %arg7[%c1_220, %c4_221, %c0_222, %c0_223] : memref<2x9x8x16xf32, #tpu.memory_space<vmem>>, vector<1x1x8x16xf32>
    %334 = vector.shape_cast %333 : vector<1x1x8x16xf32> to vector<8x16xf32>
    %cst_224 = arith.constant dense<0.000000e+00> : vector<8x256xf32>
    %335 = tpu.matmul %334, %256, %cst_224 {dimension_numbers = #tpu.dot_dimension_numbers<[1], [0], [0], [1], [0, 0, 1, 1], [], []>} : vector<8x16xf32>, vector<16x256xf32>, vector<8x256xf32> -> vector<8x256xf32>
    %336 = arith.addf %332, %335 : vector<8x256xf32>
    %c1_225 = arith.constant 1 : index
    %c5_226 = arith.constant 5 : index
    %c0_227 = arith.constant 0 : index
    %c0_228 = arith.constant 0 : index
    %337 = vector.load %arg7[%c1_225, %c5_226, %c0_227, %c0_228] : memref<2x9x8x16xf32, #tpu.memory_space<vmem>>, vector<1x1x8x16xf32>
    %338 = vector.shape_cast %337 : vector<1x1x8x16xf32> to vector<8x16xf32>
    %cst_229 = arith.constant dense<0.000000e+00> : vector<8x256xf32>
    %339 = tpu.matmul %338, %270, %cst_229 {dimension_numbers = #tpu.dot_dimension_numbers<[1], [0], [0], [1], [0, 0, 1, 1], [], []>} : vector<8x16xf32>, vector<16x256xf32>, vector<8x256xf32> -> vector<8x256xf32>
    %340 = arith.addf %336, %339 : vector<8x256xf32>
    %341 = vector.broadcast %240 : vector<1x256xf32> to vector<16x256xf32>
    %342 = arith.mulf %341, %263 : vector<16x256xf32>
    %343 = vector.broadcast %250 : vector<1x256xf32> to vector<16x256xf32>
    %344 = arith.mulf %343, %292 : vector<16x256xf32>
    %345 = arith.addf %342, %344 : vector<16x256xf32>
    %c1_230 = arith.constant 1 : index
    %c6_231 = arith.constant 6 : index
    %c0_232 = arith.constant 0 : index
    %c0_233 = arith.constant 0 : index
    %346 = vector.load %arg7[%c1_230, %c6_231, %c0_232, %c0_233] : memref<2x9x8x16xf32, #tpu.memory_space<vmem>>, vector<1x1x8x16xf32>
    %347 = vector.shape_cast %346 : vector<1x1x8x16xf32> to vector<8x16xf32>
    %cst_234 = arith.constant dense<0.000000e+00> : vector<8x256xf32>
    %348 = tpu.matmul %347, %345, %cst_234 {dimension_numbers = #tpu.dot_dimension_numbers<[1], [0], [0], [1], [0, 0, 1, 1], [], []>} : vector<8x16xf32>, vector<16x256xf32>, vector<8x256xf32> -> vector<8x256xf32>
    %349 = arith.addf %340, %348 : vector<8x256xf32>
    %350 = vector.broadcast %240 : vector<1x256xf32> to vector<16x256xf32>
    %351 = arith.mulf %350, %256 : vector<16x256xf32>
    %352 = vector.broadcast %250 : vector<1x256xf32> to vector<16x256xf32>
    %353 = arith.mulf %352, %293 : vector<16x256xf32>
    %354 = arith.addf %351, %353 : vector<16x256xf32>
    %c1_235 = arith.constant 1 : index
    %c7_236 = arith.constant 7 : index
    %c0_237 = arith.constant 0 : index
    %c0_238 = arith.constant 0 : index
    %355 = vector.load %arg7[%c1_235, %c7_236, %c0_237, %c0_238] : memref<2x9x8x16xf32, #tpu.memory_space<vmem>>, vector<1x1x8x16xf32>
    %356 = vector.shape_cast %355 : vector<1x1x8x16xf32> to vector<8x16xf32>
    %cst_239 = arith.constant dense<0.000000e+00> : vector<8x256xf32>
    %357 = tpu.matmul %356, %354, %cst_239 {dimension_numbers = #tpu.dot_dimension_numbers<[1], [0], [0], [1], [0, 0, 1, 1], [], []>} : vector<8x16xf32>, vector<16x256xf32>, vector<8x256xf32> -> vector<8x256xf32>
    %358 = arith.addf %349, %357 : vector<8x256xf32>
    %359 = vector.broadcast %240 : vector<1x256xf32> to vector<16x256xf32>
    %360 = arith.mulf %359, %270 : vector<16x256xf32>
    %361 = vector.broadcast %250 : vector<1x256xf32> to vector<16x256xf32>
    %362 = arith.mulf %361, %300 : vector<16x256xf32>
    %363 = arith.addf %360, %362 : vector<16x256xf32>
    %c1_240 = arith.constant 1 : index
    %c8_241 = arith.constant 8 : index
    %c0_242 = arith.constant 0 : index
    %c0_243 = arith.constant 0 : index
    %364 = vector.load %arg7[%c1_240, %c8_241, %c0_242, %c0_243] : memref<2x9x8x16xf32, #tpu.memory_space<vmem>>, vector<1x1x8x16xf32>
    %365 = vector.shape_cast %364 : vector<1x1x8x16xf32> to vector<8x16xf32>
    %cst_244 = arith.constant dense<0.000000e+00> : vector<8x256xf32>
    %366 = tpu.matmul %365, %363, %cst_244 {dimension_numbers = #tpu.dot_dimension_numbers<[1], [0], [0], [1], [0, 0, 1, 1], [], []>} : vector<8x16xf32>, vector<16x256xf32>, vector<8x256xf32> -> vector<8x256xf32>
    %367 = arith.addf %358, %366 : vector<8x256xf32>
    %c0_245 = arith.constant 0 : index
    %c1_246 = arith.constant 1 : index
    %c0_247 = arith.constant 0 : index
    %c0_248 = arith.constant 0 : index
    %368 = vector.load %arg4[%c0_245, %c1_246, %c0_247, %c0_248] : memref<1x2x8x1xf32, #tpu.memory_space<vmem>>, vector<1x1x8x1xf32>
    %369 = vector.shape_cast %368 : vector<1x1x8x1xf32> to vector<8x1xf32>
    %370 = vector.broadcast %369 : vector<8x1xf32> to vector<8x256xf32>
    %371 = arith.mulf %367, %370 : vector<8x256xf32>
    %c1_249 = arith.constant 1 : index
    %c0_250 = arith.constant 0 : index
    %c0_251 = arith.constant 0 : index
    %372 = vector.load %arg8[%c1_249, %c0_250, %c0_251] : memref<2x8x1xf32, #tpu.memory_space<vmem>>, vector<1x8x1xf32>
    %373 = vector.shape_cast %372 : vector<1x8x1xf32> to vector<8x1xf32>
    %374 = vector.broadcast %373 : vector<8x1xf32> to vector<8x256xf32>
    %375 = arith.addf %371, %374 : vector<8x256xf32>
    %cst_252 = arith.constant 0.000000e+00 : f32
    %376 = vector.broadcast %cst_252 : f32 to vector<8x256xf32>
    %377 = arith.cmpf oge, %375, %376 : vector<8x256xf32>
    %cst_253 = arith.constant 2.000000e-01 : f32
    %378 = vector.broadcast %cst_253 : f32 to vector<8x256xf32>
    %379 = arith.mulf %378, %375 : vector<8x256xf32>
    %380 = arith.select %377, %375, %379 : vector<8x256xi1>, vector<8x256xf32>
    %cst_254 = arith.constant 1.41421354 : f32
    %381 = vector.broadcast %cst_254 : f32 to vector<8x256xf32>
    %382 = arith.mulf %380, %381 : vector<8x256xf32>
    %c1_255 = arith.constant 1 : index
    %c0_256 = arith.constant 0 : index
    %c0_257 = arith.constant 0 : index
    %383 = vector.load %arg9[%c1_255, %c0_256, %c0_257] : memref<2x8x8xf32, #tpu.memory_space<vmem>>, vector<1x8x8xf32>
    %384 = vector.shape_cast %383 : vector<1x8x8xf32> to vector<8x8xf32>
    %cst_258 = arith.constant dense<0.000000e+00> : vector<8x256xf32>
    %385 = tpu.matmul %384, %252, %cst_258 {dimension_numbers = #tpu.dot_dimension_numbers<[1], [0], [0], [1], [0, 0, 1, 1], [], []>} : vector<8x8xf32>, vector<8x256xf32>, vector<8x256xf32> -> vector<8x256xf32>
    %386 = arith.addf %382, %385 : vector<8x256xf32>
    %c1_259 = arith.constant 1 : index
    %c0_260 = arith.constant 0 : index
    %c0_261 = arith.constant 0 : index
    %387 = vector.load %arg10[%c1_259, %c0_260, %c0_261] : memref<2x8x1xf32, #tpu.memory_space<vmem>>, vector<1x8x1xf32>
    %388 = vector.shape_cast %387 : vector<1x8x1xf32> to vector<8x1xf32>
    %389 = vector.broadcast %388 : vector<8x1xf32> to vector<8x256xf32>
    %390 = arith.addf %386, %389 : vector<8x256xf32>
    %c0_262 = arith.constant 0 : index
    %c0_263 = arith.constant 0 : index
    %391 = vector.load %arg15[%c0_262, %c0_263] : memref<16x256xf32, #tpu.memory_space<vmem>>, vector<8x256xf32>
    tpu.vector_store %arg15[%c0_262, %c0_263], %390 {strides = array<i32>} : memref<16x256xf32, #tpu.memory_space<vmem>>, vector<8x256xf32>,
    %c0_264 = arith.constant 0 : index
    %c0_265 = arith.constant 0 : index
    %392 = vector.load %arg15[%c0_264, %c0_265] : memref<16x256xf32, #tpu.memory_space<vmem>>, vector<16x256xf32>
    %c0_266 = arith.constant 0 : index
    %c1_267 = arith.constant 1 : index
    %c0_268 = arith.constant 0 : index
    %c0_269 = arith.constant 0 : index
    %393 = vector.load %arg5[%c0_266, %c1_267, %c0_268, %c0_269] : memref<1x2x16x1xf32, #tpu.memory_space<vmem>>, vector<1x1x16x1xf32>
    %394 = vector.shape_cast %393 : vector<1x1x16x1xf32> to vector<16x1xf32>
    %395 = vector.broadcast %394 : vector<16x1xf32> to vector<16x256xf32>
    %396 = arith.mulf %392, %395 : vector<16x256xf32>
    %cst_270 = arith.constant 0.000000e+00 : f32
    %397 = vector.broadcast %cst_270 : f32 to vector<8x256xf32>
    %c1_271 = arith.constant 1 : index
    %c0_272 = arith.constant 0 : index
    %c0_273 = arith.constant 0 : index
    %c0_274 = arith.constant 0 : index
    %398 = vector.load %arg11[%c1_271, %c0_272, %c0_273, %c0_274] : memref<2x9x8x16xf32, #tpu.memory_space<vmem>>, vector<1x1x8x16xf32>
    %399 = vector.shape_cast %398 : vector<1x1x8x16xf32> to vector<8x16xf32>
    %c17_i32_275 = arith.constant 17 : i32
    %400 = tpu.dynamic_rotate %396 by %c17_i32_275 dim 1 : vector<16x256xf32>, i32 -> vector<16x256xf32>
    %cst_276 = arith.constant dense<0.000000e+00> : vector<8x256xf32>
    %401 = tpu.matmul %399, %400, %cst_276 {dimension_numbers = #tpu.dot_dimension_numbers<[1], [0], [0], [1], [0, 0, 1, 1], [], []>} : vector<8x16xf32>, vector<16x256xf32>, vector<8x256xf32> -> vector<8x256xf32>
    %402 = arith.addf %397, %401 : vector<8x256xf32>
    %c1_277 = arith.constant 1 : index
    %c1_278 = arith.constant 1 : index
    %c0_279 = arith.constant 0 : index
    %c0_280 = arith.constant 0 : index
    %403 = vector.load %arg11[%c1_277, %c1_278, %c0_279, %c0_280] : memref<2x9x8x16xf32, #tpu.memory_space<vmem>>, vector<1x1x8x16xf32>
    %404 = vector.shape_cast %403 : vector<1x1x8x16xf32> to vector<8x16xf32>
    %c16_i32_281 = arith.constant 16 : i32
    %405 = tpu.dynamic_rotate %396 by %c16_i32_281 dim 1 : vector<16x256xf32>, i32 -> vector<16x256xf32>
    %cst_282 = arith.constant dense<0.000000e+00> : vector<8x256xf32>
    %406 = tpu.matmul %404, %405, %cst_282 {dimension_numbers = #tpu.dot_dimension_numbers<[1], [0], [0], [1], [0, 0, 1, 1], [], []>} : vector<8x16xf32>, vector<16x256xf32>, vector<8x256xf32> -> vector<8x256xf32>
    %407 = arith.addf %402, %406 : vector<8x256xf32>
    %c1_283 = arith.constant 1 : index
    %c2_284 = arith.constant 2 : index
    %c0_285 = arith.constant 0 : index
    %c0_286 = arith.constant 0 : index
    %408 = vector.load %arg11[%c1_283, %c2_284, %c0_285, %c0_286] : memref<2x9x8x16xf32, #tpu.memory_space<vmem>>, vector<1x1x8x16xf32>
    %409 = vector.shape_cast %408 : vector<1x1x8x16xf32> to vector<8x16xf32>
    %c15_i32_287 = arith.constant 15 : i32
    %410 = tpu.dynamic_rotate %396 by %c15_i32_287 dim 1 : vector<16x256xf32>, i32 -> vector<16x256xf32>
    %cst_288 = arith.constant dense<0.000000e+00> : vector<8x256xf32>
    %411 = tpu.matmul %409, %410, %cst_288 {dimension_numbers = #tpu.dot_dimension_numbers<[1], [0], [0], [1], [0, 0, 1, 1], [], []>} : vector<8x16xf32>, vector<16x256xf32>, vector<8x256xf32> -> vector<8x256xf32>
    %412 = arith.addf %407, %411 : vector<8x256xf32>
    %c1_289 = arith.constant 1 : index
    %c3_290 = arith.constant 3 : index
    %c0_291 = arith.constant 0 : index
    %c0_292 = arith.constant 0 : index
    %413 = vector.load %arg11[%c1_289, %c3_290, %c0_291, %c0_292] : memref<2x9x8x16xf32, #tpu.memory_space<vmem>>, vector<1x1x8x16xf32>
    %414 = vector.shape_cast %413 : vector<1x1x8x16xf32> to vector<8x16xf32>
    %c1_i32_293 = arith.constant 1 : i32
    %415 = tpu.dynamic_rotate %396 by %c1_i32_293 dim 1 : vector<16x256xf32>, i32 -> vector<16x256xf32>
    %cst_294 = arith.constant dense<0.000000e+00> : vector<8x256xf32>
    %416 = tpu.matmul %414, %415, %cst_294 {dimension_numbers = #tpu.dot_dimension_numbers<[1], [0], [0], [1], [0, 0, 1, 1], [], []>} : vector<8x16xf32>, vector<16x256xf32>, vector<8x256xf32> -> vector<8x256xf32>
    %417 = arith.addf %412, %416 : vector<8x256xf32>
    %c1_295 = arith.constant 1 : index
    %c4_296 = arith.constant 4 : index
    %c0_297 = arith.constant 0 : index
    %c0_298 = arith.constant 0 : index
    %418 = vector.load %arg11[%c1_295, %c4_296, %c0_297, %c0_298] : memref<2x9x8x16xf32, #tpu.memory_space<vmem>>, vector<1x1x8x16xf32>
    %419 = vector.shape_cast %418 : vector<1x1x8x16xf32> to vector<8x16xf32>
    %cst_299 = arith.constant dense<0.000000e+00> : vector<8x256xf32>
    %420 = tpu.matmul %419, %396, %cst_299 {dimension_numbers = #tpu.dot_dimension_numbers<[1], [0], [0], [1], [0, 0, 1, 1], [], []>} : vector<8x16xf32>, vector<16x256xf32>, vector<8x256xf32> -> vector<8x256xf32>
    %421 = arith.addf %417, %420 : vector<8x256xf32>
    %c1_300 = arith.constant 1 : index
    %c5_301 = arith.constant 5 : index
    %c0_302 = arith.constant 0 : index
    %c0_303 = arith.constant 0 : index
    %422 = vector.load %arg11[%c1_300, %c5_301, %c0_302, %c0_303] : memref<2x9x8x16xf32, #tpu.memory_space<vmem>>, vector<1x1x8x16xf32>
    %423 = vector.shape_cast %422 : vector<1x1x8x16xf32> to vector<8x16xf32>
    %c255_i32_304 = arith.constant 255 : i32
    %424 = tpu.dynamic_rotate %396 by %c255_i32_304 dim 1 : vector<16x256xf32>, i32 -> vector<16x256xf32>
    %cst_305 = arith.constant dense<0.000000e+00> : vector<8x256xf32>
    %425 = tpu.matmul %423, %424, %cst_305 {dimension_numbers = #tpu.dot_dimension_numbers<[1], [0], [0], [1], [0, 0, 1, 1], [], []>} : vector<8x16xf32>, vector<16x256xf32>, vector<8x256xf32> -> vector<8x256xf32>
    %426 = arith.addf %421, %425 : vector<8x256xf32>
    %c1_306 = arith.constant 1 : index
    %c6_307 = arith.constant 6 : index
    %c0_308 = arith.constant 0 : index
    %c0_309 = arith.constant 0 : index
    %427 = vector.load %arg11[%c1_306, %c6_307, %c0_308, %c0_309] : memref<2x9x8x16xf32, #tpu.memory_space<vmem>>, vector<1x1x8x16xf32>
    %428 = vector.shape_cast %427 : vector<1x1x8x16xf32> to vector<8x16xf32>
    %c241_i32_310 = arith.constant 241 : i32
    %429 = tpu.dynamic_rotate %396 by %c241_i32_310 dim 1 : vector<16x256xf32>, i32 -> vector<16x256xf32>
    %cst_311 = arith.constant dense<0.000000e+00> : vector<8x256xf32>
    %430 = tpu.matmul %428, %429, %cst_311 {dimension_numbers = #tpu.dot_dimension_numbers<[1], [0], [0], [1], [0, 0, 1, 1], [], []>} : vector<8x16xf32>, vector<16x256xf32>, vector<8x256xf32> -> vector<8x256xf32>
    %431 = arith.addf %426, %430 : vector<8x256xf32>
    %c1_312 = arith.constant 1 : index
    %c7_313 = arith.constant 7 : index
    %c0_314 = arith.constant 0 : index
    %c0_315 = arith.constant 0 : index
    %432 = vector.load %arg11[%c1_312, %c7_313, %c0_314, %c0_315] : memref<2x9x8x16xf32, #tpu.memory_space<vmem>>, vector<1x1x8x16xf32>
    %433 = vector.shape_cast %432 : vector<1x1x8x16xf32> to vector<8x16xf32>
    %c240_i32_316 = arith.constant 240 : i32
    %434 = tpu.dynamic_rotate %396 by %c240_i32_316 dim 1 : vector<16x256xf32>, i32 -> vector<16x256xf32>
    %cst_317 = arith.constant dense<0.000000e+00> : vector<8x256xf32>
    %435 = tpu.matmul %433, %434, %cst_317 {dimension_numbers = #tpu.dot_dimension_numbers<[1], [0], [0], [1], [0, 0, 1, 1], [], []>} : vector<8x16xf32>, vector<16x256xf32>, vector<8x256xf32> -> vector<8x256xf32>
    %436 = arith.addf %431, %435 : vector<8x256xf32>
    %c1_318 = arith.constant 1 : index
    %c8_319 = arith.constant 8 : index
    %c0_320 = arith.constant 0 : index
    %c0_321 = arith.constant 0 : index
    %437 = vector.load %arg11[%c1_318, %c8_319, %c0_320, %c0_321] : memref<2x9x8x16xf32, #tpu.memory_space<vmem>>, vector<1x1x8x16xf32>
    %438 = vector.shape_cast %437 : vector<1x1x8x16xf32> to vector<8x16xf32>
    %c239_i32_322 = arith.constant 239 : i32
    %439 = tpu.dynamic_rotate %396 by %c239_i32_322 dim 1 : vector<16x256xf32>, i32 -> vector<16x256xf32>
    %cst_323 = arith.constant dense<0.000000e+00> : vector<8x256xf32>
    %440 = tpu.matmul %438, %439, %cst_323 {dimension_numbers = #tpu.dot_dimension_numbers<[1], [0], [0], [1], [0, 0, 1, 1], [], []>} : vector<8x16xf32>, vector<16x256xf32>, vector<8x256xf32> -> vector<8x256xf32>
    %441 = arith.addf %436, %440 : vector<8x256xf32>
    %c0_324 = arith.constant 0 : index
    %c1_325 = arith.constant 1 : index
    %c0_326 = arith.constant 0 : index
    %c0_327 = arith.constant 0 : index
    %442 = vector.load %arg6[%c0_324, %c1_325, %c0_326, %c0_327] : memref<1x2x8x1xf32, #tpu.memory_space<vmem>>, vector<1x1x8x1xf32>
    %443 = vector.shape_cast %442 : vector<1x1x8x1xf32> to vector<8x1xf32>
    %444 = vector.broadcast %443 : vector<8x1xf32> to vector<8x256xf32>
    %445 = arith.mulf %441, %444 : vector<8x256xf32>
    %c1_328 = arith.constant 1 : index
    %c0_329 = arith.constant 0 : index
    %c0_330 = arith.constant 0 : index
    %446 = vector.load %arg12[%c1_328, %c0_329, %c0_330] : memref<2x8x1xf32, #tpu.memory_space<vmem>>, vector<1x8x1xf32>
    %447 = vector.shape_cast %446 : vector<1x8x1xf32> to vector<8x1xf32>
    %448 = vector.broadcast %447 : vector<8x1xf32> to vector<8x256xf32>
    %449 = arith.addf %445, %448 : vector<8x256xf32>
    %cst_331 = arith.constant 0.000000e+00 : f32
    %450 = vector.broadcast %cst_331 : f32 to vector<8x256xf32>
    %451 = arith.cmpf oge, %449, %450 : vector<8x256xf32>
    %cst_332 = arith.constant 2.000000e-01 : f32
    %452 = vector.broadcast %cst_332 : f32 to vector<8x256xf32>
    %453 = arith.mulf %452, %449 : vector<8x256xf32>
    %454 = arith.select %451, %449, %453 : vector<8x256xi1>, vector<8x256xf32>
    %cst_333 = arith.constant 1.41421354 : f32
    %455 = vector.broadcast %cst_333 : f32 to vector<8x256xf32>
    %456 = arith.mulf %454, %455 : vector<8x256xf32>
    %457 = vector.broadcast %242 : vector<1x256xf32> to vector<8x256xf32>
    %458 = arith.mulf %456, %457 : vector<8x256xf32>
    %c0_334 = arith.constant 0 : index
    %c0_335 = arith.constant 0 : index
    %459 = vector.load %arg15[%c0_334, %c0_335] : memref<16x256xf32, #tpu.memory_space<vmem>>, vector<8x256xf32>
    tpu.vector_store %arg15[%c0_334, %c0_335], %458 {strides = array<i32>} : memref<16x256xf32, #tpu.memory_space<vmem>>, vector<8x256xf32>,
    %c0_336 = arith.constant 0 : index
    %c0_337 = arith.constant 0 : index
    %c0_338 = arith.constant 0 : index
    %460 = vector.load %arg14[%c0_336, %c0_337, %c0_338] : memref<1x8x256xf32, #tpu.memory_space<vmem>>, vector<1x8x256xf32>
    %461 = vector.shape_cast %460 : vector<1x8x256xf32> to vector<8x256xf32>
    %462 = vector.shape_cast %458 : vector<8x256xf32> to vector<1x8x256xf32>
    tpu.vector_store %arg14[%c0_336, %c0_337, %c0_338], %462 {strides = array<i32>} : memref<1x8x256xf32, #tpu.memory_space<vmem>>, vector<1x8x256xf32>,
    return
  }
  func.func @transform_0(%arg0: i32) -> (i32, i32, i32) {
    %c0_i32 = arith.constant 0 : i32
    %c0_i32_0 = arith.constant 0 : i32
    %c0_i32_1 = arith.constant 0 : i32
    return %arg0, %c0_i32, %c0_i32_0 : i32, i32, i32
  }
  func.func @transform_1(%arg0: i32) -> (i32, i32, i32) {
    %c0_i32 = arith.constant 0 : i32
    %c0_i32_0 = arith.constant 0 : i32
    %c0_i32_1 = arith.constant 0 : i32
    return %arg0, %c0_i32, %c0_i32_0 : i32, i32, i32
  }
  func.func @transform_2(%arg0: i32) -> (i32, i32, i32, i32) {
    %c0_i32 = arith.constant 0 : i32
    %c0_i32_0 = arith.constant 0 : i32
    %c0_i32_1 = arith.constant 0 : i32
    %c0_i32_2 = arith.constant 0 : i32
    return %arg0, %c0_i32, %c0_i32_0, %c0_i32_1 : i32, i32, i32, i32
  }
  func.func @transform_3(%arg0: i32) -> (i32, i32, i32, i32) {
    %c0_i32 = arith.constant 0 : i32
    %c0_i32_0 = arith.constant 0 : i32
    %c0_i32_1 = arith.constant 0 : i32
    %c0_i32_2 = arith.constant 0 : i32
    return %arg0, %c0_i32, %c0_i32_0, %c0_i32_1 : i32, i32, i32, i32
  }
  func.func @transform_4(%arg0: i32) -> (i32, i32, i32, i32) {
    %c0_i32 = arith.constant 0 : i32
    %c0_i32_0 = arith.constant 0 : i32
    %c0_i32_1 = arith.constant 0 : i32
    %c0_i32_2 = arith.constant 0 : i32
    return %arg0, %c0_i32, %c0_i32_0, %c0_i32_1 : i32, i32, i32, i32
  }
  func.func @transform_5(%arg0: i32) -> (i32, i32, i32, i32) {
    %c0_i32 = arith.constant 0 : i32
    %c0_i32_0 = arith.constant 0 : i32
    %c0_i32_1 = arith.constant 0 : i32
    %c0_i32_2 = arith.constant 0 : i32
    return %arg0, %c0_i32, %c0_i32_0, %c0_i32_1 : i32, i32, i32, i32
  }
  func.func @transform_6(%arg0: i32) -> (i32, i32, i32, i32) {
    %c0_i32 = arith.constant 0 : i32
    %c0_i32_0 = arith.constant 0 : i32
    %c0_i32_1 = arith.constant 0 : i32
    %c0_i32_2 = arith.constant 0 : i32
    %c0_i32_3 = arith.constant 0 : i32
    return %c0_i32, %c0_i32_0, %c0_i32_1, %c0_i32_2 : i32, i32, i32, i32
  }
  func.func @transform_7(%arg0: i32) -> (i32, i32, i32) {
    %c0_i32 = arith.constant 0 : i32
    %c0_i32_0 = arith.constant 0 : i32
    %c0_i32_1 = arith.constant 0 : i32
    %c0_i32_2 = arith.constant 0 : i32
    return %c0_i32, %c0_i32_0, %c0_i32_1 : i32, i32, i32
  }
  func.func @transform_8(%arg0: i32) -> (i32, i32, i32) {
    %c0_i32 = arith.constant 0 : i32
    %c0_i32_0 = arith.constant 0 : i32
    %c0_i32_1 = arith.constant 0 : i32
    %c0_i32_2 = arith.constant 0 : i32
    return %c0_i32, %c0_i32_0, %c0_i32_1 : i32, i32, i32
  }
  func.func @transform_9(%arg0: i32) -> (i32, i32, i32) {
    %c0_i32 = arith.constant 0 : i32
    %c0_i32_0 = arith.constant 0 : i32
    %c0_i32_1 = arith.constant 0 : i32
    %c0_i32_2 = arith.constant 0 : i32
    return %c0_i32, %c0_i32_0, %c0_i32_1 : i32, i32, i32
  }
  func.func @transform_10(%arg0: i32) -> (i32, i32, i32, i32) {
    %c0_i32 = arith.constant 0 : i32
    %c0_i32_0 = arith.constant 0 : i32
    %c0_i32_1 = arith.constant 0 : i32
    %c0_i32_2 = arith.constant 0 : i32
    %c0_i32_3 = arith.constant 0 : i32
    return %c0_i32, %c0_i32_0, %c0_i32_1, %c0_i32_2 : i32, i32, i32, i32
  }
  func.func @transform_11(%arg0: i32) -> (i32, i32, i32) {
    %c0_i32 = arith.constant 0 : i32
    %c0_i32_0 = arith.constant 0 : i32
    %c0_i32_1 = arith.constant 0 : i32
    %c0_i32_2 = arith.constant 0 : i32
    return %c0_i32, %c0_i32_0, %c0_i32_1 : i32, i32, i32
  }
  func.func @transform_12(%arg0: i32) -> (i32, i32, i32) {
    %c0_i32 = arith.constant 0 : i32
    %c0_i32_0 = arith.constant 0 : i32
    %c0_i32_1 = arith.constant 0 : i32
    %c0_i32_2 = arith.constant 0 : i32
    return %c0_i32, %c0_i32_0, %c0_i32_1 : i32, i32, i32
  }
  func.func @transform_13(%arg0: i32) -> (i32, i32, i32) {
    %c0_i32 = arith.constant 0 : i32
    %c0_i32_0 = arith.constant 0 : i32
    %c0_i32_1 = arith.constant 0 : i32
    return %arg0, %c0_i32, %c0_i32_0 : i32, i32, i32
  }
}

</mosaic_0001>

<llo_original>
// kernel: implicit_function_forward.1
$region0: #{implicit_function_forward.1}
  #allocation0 [shape = 'u32[]', space=smem, size = 0x4, offset = 0x4, fixed_abs, tag = 'smem constant byte address 0x4 - core index']
  #allocation1 [shape = 'u32[144,128]{1,0:T(1,128)}', space=vmem, size = 0x12000, scoped, tag = 'internal scratch']
  #allocation2 [shape = 'f32[16,256]{1,0:T(8,128)}', space=vmem, size = 0x4000, scoped, tag = 'scratch operand']
  %s0 = inlined_call_operand.vmem [shape: f32[2,8,256], index: 0, kind: input, shape index: {}]
  %s1 = inlined_call_operand.vmem [shape: f32[2,8,256], index: 1, kind: input, shape index: {}]
  %s2 = inlined_call_operand.vmem [shape: f32[2,2,16,1], index: 2, kind: input, shape index: {}]
  %s3 = inlined_call_operand.vmem [shape: f32[2,2,8,1], index: 3, kind: input, shape index: {}]
  %s4 = inlined_call_operand.vmem [shape: f32[2,2,16,1], index: 4, kind: input, shape index: {}]
  %s5 = inlined_call_operand.vmem [shape: f32[2,2,8,1], index: 5, kind: input, shape index: {}]
  %s6 = inlined_call_operand.vmem [shape: f32[2,9,8,16], index: 6, kind: input, shape index: {}]
  %s7 = inlined_call_operand.vmem [shape: f32[2,8,1], index: 7, kind: input, shape index: {}]
  %s8 = inlined_call_operand.vmem [shape: f32[2,8,8], index: 8, kind: input, shape index: {}]
  %s9 = inlined_call_operand.vmem [shape: f32[2,8,1], index: 9, kind: input, shape index: {}]
  %s10 = inlined_call_operand.vmem [shape: f32[2,9,8,16], index: 10, kind: input, shape index: {}]
  %s11 = inlined_call_operand.vmem [shape: f32[2,8,1], index: 11, kind: input, shape index: {}]
  %s12 = inlined_call_operand.vmem [shape: f32[2,8,256], index: 12, kind: input, shape index: {}]
  %s13 = inlined_call_operand.vmem [shape: f32[2,8,256], index: 13, kind: output, shape index: {}]
  %s14 = sld [smem:[#allocation0]]
  $region85: #{implicit_function_forward.1} parent=0
    _
  %s16 = ssub.s32 1, %s14
  %s17 = scalar_select 0, %s16, %s14
  loop: start=0, step=1, limit=4
  $region2: #{implicit_function_forward.1} parent=0 // loop_pre_header
    _
  $region3: #{implicit_function_forward.1} parent=0 // loop_header
    %s19 = sphi 0, %s23
    %p20 = scmp.ge.s32.totalorder %s19, 4
    %s29 = sphi 0, %s31
    %s32 = sphi 0, %s29
    %s33 = sphi 0, %s32
    %s49 = sphi 0, %s33
    %s55 = sphi 0, %s57
    %s58 = sphi 0, %s55
    %s59 = sphi 0, %s58
    %s75 = sphi 0, %s59
    %s81 = sphi 0, %s83
    %s84 = sphi 0, %s81
    %s85 = sphi 0, %s84
    %s101 = sphi 0, %s85
    %s107 = sphi 0, %s109
    %s110 = sphi 0, %s107
    %s111 = sphi 0, %s110
    %s127 = sphi 0, %s111
    %s133 = sphi 0, %s135
    %s136 = sphi 0, %s133
    %s137 = sphi 0, %s136
    %s153 = sphi 0, %s137
    %s159 = sphi 0, %s161
    %s162 = sphi 0, %s159
    %s163 = sphi 0, %s162
    %s179 = sphi 0, %s163
    %s183 = sphi 0, %s183
    %s185 = sphi 0, %s183
    %s186 = sphi 0, %s185
    %s200 = sphi 0, %s186
    %s204 = sphi 0, %s204
    %s206 = sphi 0, %s204
    %s207 = sphi 0, %s206
    %s221 = sphi 0, %s207
    %s225 = sphi 0, %s225
    %s227 = sphi 0, %s225
    %s228 = sphi 0, %s227
    %s242 = sphi 0, %s228
    %s246 = sphi 0, %s246
    %s248 = sphi 0, %s246
    %s249 = sphi 0, %s248
    %s263 = sphi 0, %s249
    %s267 = sphi 0, %s267
    %s269 = sphi 0, %s267
    %s270 = sphi 0, %s269
    %s284 = sphi 0, %s270
    %s288 = sphi 0, %s288
    %s290 = sphi 0, %s288
    %s291 = sphi 0, %s290
    %s305 = sphi 0, %s291
    %s309 = sphi 0, %s309
    %s311 = sphi 0, %s309
    %s312 = sphi 0, %s311
    %s326 = sphi 0, %s312
    %s332 = sphi 0, %s334
    %s335 = sphi 0, %s332
    %s336 = sphi 0, %s335
    %s352 = sphi 0, %s336
  $region4: #{implicit_function_forward.1} parent=0 // loop_header_branch
    %22 = sbr.rel (%p20) target = $region8
  $region5: #{implicit_function_forward.1} parent=0 // loop_body
    %s24 = ssub.s32 %s19, 1
    %s25 = ssub.s32 %s19, 2
    %s26 = sadd.s32 %s19, 1
    %s27 = ssub.s32 %s19, %s26
    %p28 = scmp.eq.s32.totalorder %s27, 0
    %s30 = sadd.s32 %s29, 1
    %s31 = scalar_select %p28, %s29, %s30
    %p34 = pneg %p28
    %p35 = scmp.eq.s32.totalorder %s19, 1
    %p36 = por %p34, %p35
    %p37 = scmp.ne.s32.totalorder %s29, %s32
    %p38 = scmp.eq.s32.totalorder %s19, 0
    %p39 = por %p37, %p38
    %p40 = scmp.ne.s32.totalorder %s29, %s32
    %p41 = scmp.eq.s32.totalorder %s24, 1
    %p42 = por %p40, %p41
    %p43 = scmp.ne.s32.totalorder %s32, %s33
    %p44 = scmp.eq.s32.totalorder %s24, 0
    %p45 = por %p43, %p44
    %p46 = scmp.ne.s32.totalorder %s32, %s33
    %p47 = scmp.eq.s32.totalorder %s25, 1
    %p48 = por %p46, %p47
    %p50 = scmp.ne.s32.totalorder %s33, %s49
    %p51 = scmp.eq.s32.totalorder %s25, 0
    %p52 = por %p50, %p51
    %s53 = ssub.s32 %s19, %s26
    %p54 = scmp.eq.s32.totalorder %s53, 0
    %s56 = sadd.s32 %s55, 1
    %s57 = scalar_select %p54, %s55, %s56
    %p60 = pneg %p54
    %p61 = scmp.eq.s32.totalorder %s19, 1
    %p62 = por %p60, %p61
    %p63 = scmp.ne.s32.totalorder %s55, %s58
    %p64 = scmp.eq.s32.totalorder %s19, 0
    %p65 = por %p63, %p64
    %p66 = scmp.ne.s32.totalorder %s55, %s58
    %p67 = scmp.eq.s32.totalorder %s24, 1
    %p68 = por %p66, %p67
    %p69 = scmp.ne.s32.totalorder %s58, %s59
    %p70 = scmp.eq.s32.totalorder %s24, 0
    %p71 = por %p69, %p70
    %p72 = scmp.ne.s32.totalorder %s58, %s59
    %p73 = scmp.eq.s32.totalorder %s25, 1
    %p74 = por %p72, %p73
    %p76 = scmp.ne.s32.totalorder %s59, %s75
    %p77 = scmp.eq.s32.totalorder %s25, 0
    %p78 = por %p76, %p77
    %s79 = ssub.s32 %s19, %s26
    %p80 = scmp.eq.s32.totalorder %s79, 0
    %s82 = sadd.s32 %s81, 1
    %s83 = scalar_select %p80, %s81, %s82
    %p86 = pneg %p80
    %p87 = scmp.eq.s32.totalorder %s19, 1
    %p88 = por %p86, %p87
    %p89 = scmp.ne.s32.totalorder %s81, %s84
    %p90 = scmp.eq.s32.totalorder %s19, 0
    %p91 = por %p89, %p90
    %p92 = scmp.ne.s32.totalorder %s81, %s84
    %p93 = scmp.eq.s32.totalorder %s24, 1
    %p94 = por %p92, %p93
    %p95 = scmp.ne.s32.totalorder %s84, %s85
    %p96 = scmp.eq.s32.totalorder %s24, 0
    %p97 = por %p95, %p96
    %p98 = scmp.ne.s32.totalorder %s84, %s85
    %p99 = scmp.eq.s32.totalorder %s25, 1
    %p100 = por %p98, %p99
    %p102 = scmp.ne.s32.totalorder %s85, %s101
    %p103 = scmp.eq.s32.totalorder %s25, 0
    %p104 = por %p102, %p103
    %s105 = ssub.s32 %s19, %s26
    %p106 = scmp.eq.s32.totalorder %s105, 0
    %s108 = sadd.s32 %s107, 1
    %s109 = scalar_select %p106, %s107, %s108
    %p112 = pneg %p106
    %p113 = scmp.eq.s32.totalorder %s19, 1
    %p114 = por %p112, %p113
    %p115 = scmp.ne.s32.totalorder %s107, %s110
    %p116 = scmp.eq.s32.totalorder %s19, 0
    %p117 = por %p115, %p116
    %p118 = scmp.ne.s32.totalorder %s107, %s110
    %p119 = scmp.eq.s32.totalorder %s24, 1
    %p120 = por %p118, %p119
    %p121 = scmp.ne.s32.totalorder %s110, %s111
    %p122 = scmp.eq.s32.totalorder %s24, 0
    %p123 = por %p121, %p122
    %p124 = scmp.ne.s32.totalorder %s110, %s111
    %p125 = scmp.eq.s32.totalorder %s25, 1
    %p126 = por %p124, %p125
    %p128 = scmp.ne.s32.totalorder %s111, %s127
    %p129 = scmp.eq.s32.totalorder %s25, 0
    %p130 = por %p128, %p129
    %s131 = ssub.s32 %s19, %s26
    %p132 = scmp.eq.s32.totalorder %s131, 0
    %s134 = sadd.s32 %s133, 1
    %s135 = scalar_select %p132, %s133, %s134
    %p138 = pneg %p132
    %p139 = scmp.eq.s32.totalorder %s19, 1
    %p140 = por %p138, %p139
    %p141 = scmp.ne.s32.totalorder %s133, %s136
    %p142 = scmp.eq.s32.totalorder %s19, 0
    %p143 = por %p141, %p142
    %p144 = scmp.ne.s32.totalorder %s133, %s136
    %p145 = scmp.eq.s32.totalorder %s24, 1
    %p146 = por %p144, %p145
    %p147 = scmp.ne.s32.totalorder %s136, %s137
    %p148 = scmp.eq.s32.totalorder %s24, 0
    %p149 = por %p147, %p148
    %p150 = scmp.ne.s32.totalorder %s136, %s137
    %p151 = scmp.eq.s32.totalorder %s25, 1
    %p152 = por %p150, %p151
    %p154 = scmp.ne.s32.totalorder %s137, %s153
    %p155 = scmp.eq.s32.totalorder %s25, 0
    %p156 = por %p154, %p155
    %s157 = ssub.s32 %s19, %s26
    %p158 = scmp.eq.s32.totalorder %s157, 0
    %s160 = sadd.s32 %s159, 1
    %s161 = scalar_select %p158, %s159, %s160
    %p164 = pneg %p158
    %p165 = scmp.eq.s32.totalorder %s19, 1
    %p166 = por %p164, %p165
    %p167 = scmp.ne.s32.totalorder %s159, %s162
    %p168 = scmp.eq.s32.totalorder %s19, 0
    %p169 = por %p167, %p168
    %p170 = scmp.ne.s32.totalorder %s159, %s162
    %p171 = scmp.eq.s32.totalorder %s24, 1
    %p172 = por %p170, %p171
    %p173 = scmp.ne.s32.totalorder %s162, %s163
    %p174 = scmp.eq.s32.totalorder %s24, 0
    %p175 = por %p173, %p174
    %p176 = scmp.ne.s32.totalorder %s162, %s163
    %p177 = scmp.eq.s32.totalorder %s25, 1
    %p178 = por %p176, %p177
    %p180 = scmp.ne.s32.totalorder %s163, %s179
    %p181 = scmp.eq.s32.totalorder %s25, 0
    %p182 = por %p180, %p181
    %s184 = sadd.s32 %s183, 1
    %p187 = scmp.eq.s32.totalorder %s19, 1
    %p188 = scmp.ne.s32.totalorder %s183, %s185
    %p189 = scmp.eq.s32.totalorder %s19, 0
    %p190 = por %p188, %p189
    %p191 = scmp.ne.s32.totalorder %s183, %s185
    %p192 = scmp.eq.s32.totalorder %s24, 1
    %p193 = por %p191, %p192
    %p194 = scmp.ne.s32.totalorder %s185, %s186
    %p195 = scmp.eq.s32.totalorder %s24, 0
    %p196 = por %p194, %p195
    %p197 = scmp.ne.s32.totalorder %s185, %s186
    %p198 = scmp.eq.s32.totalorder %s25, 1
    %p199 = por %p197, %p198
    %p201 = scmp.ne.s32.totalorder %s186, %s200
    %p202 = scmp.eq.s32.totalorder %s25, 0
    %p203 = por %p201, %p202
    %s205 = sadd.s32 %s204, 1
    %p208 = scmp.eq.s32.totalorder %s19, 1
    %p209 = scmp.ne.s32.totalorder %s204, %s206
    %p210 = scmp.eq.s32.totalorder %s19, 0
    %p211 = por %p209, %p210
    %p212 = scmp.ne.s32.totalorder %s204, %s206
    %p213 = scmp.eq.s32.totalorder %s24, 1
    %p214 = por %p212, %p213
    %p215 = scmp.ne.s32.totalorder %s206, %s207
    %p216 = scmp.eq.s32.totalorder %s24, 0
    %p217 = por %p215, %p216
    %p218 = scmp.ne.s32.totalorder %s206, %s207
    %p219 = scmp.eq.s32.totalorder %s25, 1
    %p220 = por %p218, %p219
    %p222 = scmp.ne.s32.totalorder %s207, %s221
    %p223 = scmp.eq.s32.totalorder %s25, 0
    %p224 = por %p222, %p223
    %s226 = sadd.s32 %s225, 1
    %p229 = scmp.eq.s32.totalorder %s19, 1
    %p230 = scmp.ne.s32.totalorder %s225, %s227
    %p231 = scmp.eq.s32.totalorder %s19, 0
    %p232 = por %p230, %p231
    %p233 = scmp.ne.s32.totalorder %s225, %s227
    %p234 = scmp.eq.s32.totalorder %s24, 1
    %p235 = por %p233, %p234
    %p236 = scmp.ne.s32.totalorder %s227, %s228
    %p237 = scmp.eq.s32.totalorder %s24, 0
    %p238 = por %p236, %p237
    %p239 = scmp.ne.s32.totalorder %s227, %s228
    %p240 = scmp.eq.s32.totalorder %s25, 1
    %p241 = por %p239, %p240
    %p243 = scmp.ne.s32.totalorder %s228, %s242
    %p244 = scmp.eq.s32.totalorder %s25, 0
    %p245 = por %p243, %p244
    %s247 = sadd.s32 %s246, 1
    %p250 = scmp.eq.s32.totalorder %s19, 1
    %p251 = scmp.ne.s32.totalorder %s246, %s248
    %p252 = scmp.eq.s32.totalorder %s19, 0
    %p253 = por %p251, %p252
    %p254 = scmp.ne.s32.totalorder %s246, %s248
    %p255 = scmp.eq.s32.totalorder %s24, 1
    %p256 = por %p254, %p255
    %p257 = scmp.ne.s32.totalorder %s248, %s249
    %p258 = scmp.eq.s32.totalorder %s24, 0
    %p259 = por %p257, %p258
    %p260 = scmp.ne.s32.totalorder %s248, %s249
    %p261 = scmp.eq.s32.totalorder %s25, 1
    %p262 = por %p260, %p261
    %p264 = scmp.ne.s32.totalorder %s249, %s263
    %p265 = scmp.eq.s32.totalorder %s25, 0
    %p266 = por %p264, %p265
    %s268 = sadd.s32 %s267, 1
    %p271 = scmp.eq.s32.totalorder %s19, 1
    %p272 = scmp.ne.s32.totalorder %s267, %s269
    %p273 = scmp.eq.s32.totalorder %s19, 0
    %p274 = por %p272, %p273
    %p275 = scmp.ne.s32.totalorder %s267, %s269
    %p276 = scmp.eq.s32.totalorder %s24, 1
    %p277 = por %p275, %p276
    %p278 = scmp.ne.s32.totalorder %s269, %s270
    %p279 = scmp.eq.s32.totalorder %s24, 0
    %p280 = por %p278, %p279
    %p281 = scmp.ne.s32.totalorder %s269, %s270
    %p282 = scmp.eq.s32.totalorder %s25, 1
    %p283 = por %p281, %p282
    %p285 = scmp.ne.s32.totalorder %s270, %s284
    %p286 = scmp.eq.s32.totalorder %s25, 0
    %p287 = por %p285, %p286
    %s289 = sadd.s32 %s288, 1
    %p292 = scmp.eq.s32.totalorder %s19, 1
    %p293 = scmp.ne.s32.totalorder %s288, %s290
    %p294 = scmp.eq.s32.totalorder %s19, 0
    %p295 = por %p293, %p294
    %p296 = scmp.ne.s32.totalorder %s288, %s290
    %p297 = scmp.eq.s32.totalorder %s24, 1
    %p298 = por %p296, %p297
    %p299 = scmp.ne.s32.totalorder %s290, %s291
    %p300 = scmp.eq.s32.totalorder %s24, 0
    %p301 = por %p299, %p300
    %p302 = scmp.ne.s32.totalorder %s290, %s291
    %p303 = scmp.eq.s32.totalorder %s25, 1
    %p304 = por %p302, %p303
    %p306 = scmp.ne.s32.totalorder %s291, %s305
    %p307 = scmp.eq.s32.totalorder %s25, 0
    %p308 = por %p306, %p307
    %s310 = sadd.s32 %s309, 1
    %p313 = scmp.eq.s32.totalorder %s19, 1
    %p314 = scmp.ne.s32.totalorder %s309, %s311
    %p315 = scmp.eq.s32.totalorder %s19, 0
    %p316 = por %p314, %p315
    %p317 = scmp.ne.s32.totalorder %s309, %s311
    %p318 = scmp.eq.s32.totalorder %s24, 1
    %p319 = por %p317, %p318
    %p320 = scmp.ne.s32.totalorder %s311, %s312
    %p321 = scmp.eq.s32.totalorder %s24, 0
    %p322 = por %p320, %p321
    %p323 = scmp.ne.s32.totalorder %s311, %s312
    %p324 = scmp.eq.s32.totalorder %s25, 1
    %p325 = por %p323, %p324
    %p327 = scmp.ne.s32.totalorder %s312, %s326
    %p328 = scmp.eq.s32.totalorder %s25, 0
    %p329 = por %p327, %p328
    %s330 = ssub.s32 %s19, %s26
    %p331 = scmp.eq.s32.totalorder %s330, 0
    %s333 = sadd.s32 %s332, 1
    %s334 = scalar_select %p331, %s332, %s333
    %p337 = pneg %p331
    %p338 = scmp.eq.s32.totalorder %s19, 1
    %p339 = por %p337, %p338
    %p340 = scmp.ne.s32.totalorder %s332, %s335
    %p341 = scmp.eq.s32.totalorder %s19, 0
    %p342 = por %p340, %p341
    %p343 = scmp.ne.s32.totalorder %s332, %s335
    %p344 = scmp.eq.s32.totalorder %s24, 1
    %p345 = por %p343, %p344
    %p346 = scmp.ne.s32.totalorder %s335, %s336
    %p347 = scmp.eq.s32.totalorder %s24, 0
    %p348 = por %p346, %p347
    %p349 = scmp.ne.s32.totalorder %s335, %s336
    %p350 = scmp.eq.s32.totalorder %s25, 1
    %p351 = por %p349, %p350
    %p353 = scmp.ne.s32.totalorder %s336, %s352
    %p354 = scmp.eq.s32.totalorder %s25, 0
    %p355 = por %p353, %p354
    %p356 = scmp.le.s32.totalorder 1, %s19
    %p357 = scmp.lt.s32.totalorder %s19, 3
    %p358 = pnand %p356, %p357
    %p359 = pneg %p358
    // Predicated region
    $region9: #{implicit_function_forward.1} parent=5 // pred_check
      _
    $region10: #{implicit_function_forward.1} parent=5 // pred_check_branch
      %361 = sbr.rel (%p358) target = $region12
    $region11: #{implicit_function_forward.1} parent=5 // pred_region
      %s362 = ssub.s32 %s19, 1
      // Predicated region
      $region13: #{implicit_function_forward.1} parent=11 // pred_check
        %p363 = pneg %p196
      $region14: #{implicit_function_forward.1} parent=11 // pred_check_branch
        %365 = sbr.rel (%p363) target = $region16
      $region15: #{implicit_function_forward.1} parent=11 // pred_region
        _
      $region16: #{implicit_function_forward.1} parent=11 // pred_fallthru
        _
      // Predicated region
      $region17: #{implicit_function_forward.1} parent=11 // pred_check
        %p366 = pneg %p217
      $region18: #{implicit_function_forward.1} parent=11 // pred_check_branch
        %368 = sbr.rel (%p366) target = $region20
      $region19: #{implicit_function_forward.1} parent=11 // pred_region
        _
      $region20: #{implicit_function_forward.1} parent=11 // pred_fallthru
        _
      // Predicated region
      $region21: #{implicit_function_forward.1} parent=11 // pred_check
        %p369 = pneg %p238
      $region22: #{implicit_function_forward.1} parent=11 // pred_check_branch
        %371 = sbr.rel (%p369) target = $region24
      $region23: #{implicit_function_forward.1} parent=11 // pred_region
        _
      $region24: #{implicit_function_forward.1} parent=11 // pred_fallthru
        _
      // Predicated region
      $region25: #{implicit_function_forward.1} parent=11 // pred_check
        %p372 = pneg %p259
      $region26: #{implicit_function_forward.1} parent=11 // pred_check_branch
        %374 = sbr.rel (%p372) target = $region28
      $region27: #{implicit_function_forward.1} parent=11 // pred_region
        _
      $region28: #{implicit_function_forward.1} parent=11 // pred_fallthru
        _
      // Predicated region
      $region29: #{implicit_function_forward.1} parent=11 // pred_check
        %p375 = pneg %p280
      $region30: #{implicit_function_forward.1} parent=11 // pred_check_branch
        %377 = sbr.rel (%p375) target = $region32
      $region31: #{implicit_function_forward.1} parent=11 // pred_region
        _
      $region32: #{implicit_function_forward.1} parent=11 // pred_fallthru
        _
      // Predicated region
      $region33: #{implicit_function_forward.1} parent=11 // pred_check
        %p378 = pneg %p301
      $region34: #{implicit_function_forward.1} parent=11 // pred_check_branch
        %380 = sbr.rel (%p378) target = $region36
      $region35: #{implicit_function_forward.1} parent=11 // pred_region
        _
      $region36: #{implicit_function_forward.1} parent=11 // pred_fallthru
        _
      // Predicated region
      $region37: #{implicit_function_forward.1} parent=11 // pred_check
        %p381 = pneg %p322
      $region38: #{implicit_function_forward.1} parent=11 // pred_check_branch
        %383 = sbr.rel (%p381) target = $region40
      $region39: #{implicit_function_forward.1} parent=11 // pred_region
        _
      $region40: #{implicit_function_forward.1} parent=11 // pred_fallthru
        _
    $region12: #{implicit_function_forward.1} parent=5 // pred_fallthru
      _
    %p384 = scmp.lt.s32.totalorder %s19, 2
    // Predicated region
    $region41: #{implicit_function_forward.1} parent=5 // pred_check
      %p385 = pneg %p384
    $region42: #{implicit_function_forward.1} parent=5 // pred_check_branch
      %387 = sbr.rel (%p385) target = $region44
    $region43: #{implicit_function_forward.1} parent=5 // pred_region
      // Predicated region
      $region45: #{implicit_function_forward.1} parent=43 // pred_check
        %p388 = pneg %p39
      $region46: #{implicit_function_forward.1} parent=43 // pred_check_branch
        %390 = sbr.rel (%p388) target = $region48
      $region47: #{implicit_function_forward.1} parent=43 // pred_region
        %p391 = scmp.lt.s32.totalorder %s19, 1
        %s392 = scalar_select %p391, %s19, 1
        %s393 = smul.addr %s392, 2
        %s394 = smul.addr %s393, 8
        %s395 = scalar_lea.vmem %s0, %s394
      $region48: #{implicit_function_forward.1} parent=43 // pred_fallthru
        _
      // Predicated region
      $region49: #{implicit_function_forward.1} parent=43 // pred_check
        %p396 = pneg %p65
      $region50: #{implicit_function_forward.1} parent=43 // pred_check_branch
        %398 = sbr.rel (%p396) target = $region52
      $region51: #{implicit_function_forward.1} parent=43 // pred_region
        %p399 = scmp.lt.s32.totalorder %s19, 1
        %s400 = scalar_select %p399, %s19, 1
        %s401 = smul.addr %s400, 2
        %s402 = smul.addr %s401, 8
        %s403 = scalar_lea.vmem %s1, %s402
      $region52: #{implicit_function_forward.1} parent=43 // pred_fallthru
        _
      // Predicated region
      $region53: #{implicit_function_forward.1} parent=43 // pred_check
        %p404 = pneg %p91
      $region54: #{implicit_function_forward.1} parent=43 // pred_check_branch
        %406 = sbr.rel (%p404) target = $region56
      $region55: #{implicit_function_forward.1} parent=43 // pred_region
        %p407 = scmp.lt.s32.totalorder %s19, 1
        %s408 = scalar_select %p407, %s19, 1
        %s409 = smul.addr %s408, 4
        %s410 = smul.addr %s409, 8
        %s411 = scalar_lea.vmem %s2, %s410
      $region56: #{implicit_function_forward.1} parent=43 // pred_fallthru
        _
      // Predicated region
      $region57: #{implicit_function_forward.1} parent=43 // pred_check
        %p412 = pneg %p117
      $region58: #{implicit_function_forward.1} parent=43 // pred_check_branch
        %414 = sbr.rel (%p412) target = $region60
      $region59: #{implicit_function_forward.1} parent=43 // pred_region
        %p415 = scmp.lt.s32.totalorder %s19, 1
        %s416 = scalar_select %p415, %s19, 1
        %s417 = smul.addr %s416, 2
        %s418 = smul.addr %s417, 8
        %s419 = scalar_lea.vmem %s3, %s418
      $region60: #{implicit_function_forward.1} parent=43 // pred_fallthru
        _
      // Predicated region
      $region61: #{implicit_function_forward.1} parent=43 // pred_check
        %p420 = pneg %p143
      $region62: #{implicit_function_forward.1} parent=43 // pred_check_branch
        %422 = sbr.rel (%p420) target = $region64
      $region63: #{implicit_function_forward.1} parent=43 // pred_region
        %p423 = scmp.lt.s32.totalorder %s19, 1
        %s424 = scalar_select %p423, %s19, 1
        %s425 = smul.addr %s424, 4
        %s426 = smul.addr %s425, 8
        %s427 = scalar_lea.vmem %s4, %s426
      $region64: #{implicit_function_forward.1} parent=43 // pred_fallthru
        _
      // Predicated region
      $region65: #{implicit_function_forward.1} parent=43 // pred_check
        %p428 = pneg %p169
      $region66: #{implicit_function_forward.1} parent=43 // pred_check_branch
        %430 = sbr.rel (%p428) target = $region68
      $region67: #{implicit_function_forward.1} parent=43 // pred_region
        %p431 = scmp.lt.s32.totalorder %s19, 1
        %s432 = scalar_select %p431, %s19, 1
        %s433 = smul.addr %s432, 2
        %s434 = smul.addr %s433, 8
        %s435 = scalar_lea.vmem %s5, %s434
      $region68: #{implicit_function_forward.1} parent=43 // pred_fallthru
        _
    $region44: #{implicit_function_forward.1} parent=5 // pred_fallthru
      _
    %p436 = scmp.le.s32.totalorder 1, %s19
    %p437 = scmp.lt.s32.totalorder %s19, 3
    %p438 = pnand %p436, %p437
    %p439 = pneg %p438
    // Predicated region
    $region69: #{implicit_function_forward.1} parent=5 // pred_check
      _
    $region70: #{implicit_function_forward.1} parent=5 // pred_check_branch
      %441 = sbr.rel (%p438) target = $region72
    $region71: #{implicit_function_forward.1} parent=5 // pred_region
      %s442 = ssub.s32 %s19, 1
      %p443 = scmp.lt.s32.totalorder %s24, 1
      %s444 = scalar_select %p443, %s24, 1
      %s445 = smul.addr %s444, 2
      %s446 = smul.addr %s445, 8
      %s447 = scalar_lea.vmem %s0, %s446
      %p448 = pneg %p45
      %p449 = pneg %p42
      %p450 = scmp.lt.s32.totalorder %s24, 1
      %s451 = scalar_select %p450, %s24, 1
      %s452 = smul.addr %s451, 2
      %s453 = smul.addr %s452, 8
      %s454 = scalar_lea.vmem %s1, %s453
      %p455 = pneg %p71
      %p456 = pneg %p68
      %p457 = scmp.lt.s32.totalorder %s24, 1
      %s458 = scalar_select %p457, %s24, 1
      %s459 = smul.addr %s458, 4
      %s460 = smul.addr %s459, 8
      %s461 = scalar_lea.vmem %s2, %s460
      %p462 = pneg %p97
      %p463 = pneg %p94
      %p464 = scmp.lt.s32.totalorder %s24, 1
      %s465 = scalar_select %p464, %s24, 1
      %s466 = smul.addr %s465, 2
      %s467 = smul.addr %s466, 8
      %s468 = scalar_lea.vmem %s3, %s467
      %p469 = pneg %p123
      %p470 = pneg %p120
      %p471 = scmp.lt.s32.totalorder %s24, 1
      %s472 = scalar_select %p471, %s24, 1
      %s473 = smul.addr %s472, 4
      %s474 = smul.addr %s473, 8
      %s475 = scalar_lea.vmem %s4, %s474
      %p476 = pneg %p149
      %p477 = pneg %p146
      %p478 = scmp.lt.s32.totalorder %s24, 1
      %s479 = scalar_select %p478, %s24, 1
      %s480 = smul.addr %s479, 2
      %s481 = smul.addr %s480, 8
      %s482 = scalar_lea.vmem %s5, %s481
      %p483 = pneg %p175
      %p484 = pneg %p172
      %p485 = pneg %p196
      %p486 = pneg %p193
      %p487 = pneg %p217
      %p488 = pneg %p214
      %p489 = pneg %p238
      %p490 = pneg %p235
      %p491 = pneg %p259
      %p492 = pneg %p256
      %p493 = pneg %p280
      %p494 = pneg %p277
      %p495 = pneg %p301
      %p496 = pneg %p298
      %p497 = pneg %p322
      %p498 = pneg %p319
      %p499 = pneg %p348
      %p500 = pneg %p345
      %p501 = scmp.lt.s32.totalorder %s24, 1
      %s502 = scalar_select %p501, %s24, 1
      %s503 = smul.addr %s502, 2
      %s504 = smul.addr %s503, 8
      %s505 = scalar_lea.vmem %s13, %s504
      %p506 = scmp.lt.s32.totalorder %s24, 1
      %s507 = scalar_select %p506, %s24, 1
      %s508 = smul.addr %s507, 2
      %s509 = smul.addr %s508, 8
      %s510 = scalar_lea.vmem %s0, %s509
      %p511 = scmp.lt.s32.totalorder %s24, 1
      %s512 = scalar_select %p511, %s24, 1
      %s513 = smul.addr %s512, 2
      %s514 = smul.addr %s513, 8
      %s515 = scalar_lea.vmem %s1, %s514
      %p516 = scmp.lt.s32.totalorder %s24, 1
      %s517 = scalar_select %p516, %s24, 1
      %s518 = smul.addr %s517, 4
      %s519 = smul.addr %s518, 8
      %s520 = scalar_lea.vmem %s2, %s519
      %p521 = scmp.lt.s32.totalorder %s24, 1
      %s522 = scalar_select %p521, %s24, 1
      %s523 = smul.addr %s522, 2
      %s524 = smul.addr %s523, 8
      %s525 = scalar_lea.vmem %s3, %s524
      %p526 = scmp.lt.s32.totalorder %s24, 1
      %s527 = scalar_select %p526, %s24, 1
      %s528 = smul.addr %s527, 4
      %s529 = smul.addr %s528, 8
      %s530 = scalar_lea.vmem %s4, %s529
      %p531 = scmp.lt.s32.totalorder %s24, 1
      %s532 = scalar_select %p531, %s24, 1
      %s533 = smul.addr %s532, 2
      %s534 = smul.addr %s533, 8
      %s535 = scalar_lea.vmem %s5, %s534
      %p536 = scmp.lt.s32.totalorder %s24, 1
      %s537 = scalar_select %p536, %s24, 1
      %s538 = smul.addr %s537, 2
      %s539 = smul.addr %s538, 8
      %s540 = scalar_lea.vmem %s13, %s539
      %v541 = vld [vmem:[%s510] sm:$0xff]
      %v542 = vld [vmem:[%s510 + $0x8] sm:$0xff]
      %543 = vst [vmem:[#allocation2] sm:$0xff] %v541
      %544 = vst [vmem:[#allocation2 + $0x8] sm:$0xff] %v542
      %v545 = vld [vmem:[%s515] sm:$0xff]
      %v546 = vld [vmem:[%s515 + $0x8] sm:$0xff]
      %547 = vst [vmem:[#allocation2 + $0x10] sm:$0xff] %v545
      %548 = vst [vmem:[#allocation2 + $0x18] sm:$0xff] %v546
      %v549 = vld [vmem:[%s12] ss:$8 sm:$0x3]
      %s550 = scalar_lea.vmem %s12, 1
      %v551 = vld [vmem:[%s550] ss:$8 sm:$0x3]
      %s552 = scalar_lea.vmem %s12, 2
      %v553 = vld [vmem:[%s552] ss:$8 sm:$0x3]
      %s554 = scalar_lea.vmem %s12, 3
      %v555 = vld [vmem:[%s554] ss:$8 sm:$0x3]
      %s556 = scalar_lea.vmem %s12, 4
      %v557 = vld [vmem:[%s556] ss:$8 sm:$0x3]
      %v558 = vsub.f32 1.0, %v549
      %v559 = vsub.f32 1.0, %v551
      %v560 = vsub.f32 1.0, %v553
      %v561 = vsub.f32 1.0, %v555
      %v562 = vld [vmem:[#allocation2] sm:$0xff]
      %v563 = vld [vmem:[#allocation2 + $0x8] sm:$0xff]
      %v564 = vld [vmem:[#allocation2 + $0x10] sm:$0xff]
      %v565 = vld [vmem:[#allocation2 + $0x18] sm:$0xff]
      %v566 = vld [vmem:[%s520] sm:$0xff]
      %v567 = vld [vmem:[%s520 + $0x8] sm:$0xff]
      %569 = vset.pattern.permute.xlu0 0
      %570 = vperm.xlu0 %569, %v566
      %v571 = vpop.permute.xlu0 %570
      %574 = vset.pattern.permute.xlu0 0
      %575 = vperm.xlu0 %574, %v567
      %v576 = vpop.permute.xlu0 %575
      %v578 = vmul.f32 %v562, %v571
      %v579 = vmul.f32 %v563, %v571
      %v580 = vmul.f32 %v564, %v576
      %v581 = vmul.f32 %v565, %v576
      %582 = vrot.lane.b32.xlu0 %v578, 113
      %v583 = vpop.permute.xlu0 %582
      %584 = vrot.lane.b32.xlu0 %v580, 113
      %v585 = vpop.permute.xlu0 %584
      %586 = vrot.lane.b32.xlu0 %v579, 113
      %v587 = vpop.permute.xlu0 %586
      %588 = vrot.lane.b32.xlu0 %v581, 113
      %v589 = vpop.permute.xlu0 %588
      %v590 = vlaneseq
      %v591 = vand.u32 %v590, 127
      %vm592 = vcmp.lt.s32.totalorder %v591, 113
      %v593 = vsel %vm592, %v583, %v587
      %v594 = vsel %vm592, %v585, %v589
      %v595 = vsel %vm592, %v587, %v583
      %v596 = vsel %vm592, %v589, %v585
      %v598 = vlaneseq
      %v599 = vshrl.u32 %v598, 7
      %v600 = vsub.s32 0, %v599
      %v601 = vrot.slane %v549, %v600
      %v602 = vlaneseq
      %v603 = vshrl.u32 %v602, 7
      %v604 = vsub.s32 1, %v603
      %v605 = vrot.slane %v549, %v604
      %v608 = vmul.f32 %v601, %v593
      %v609 = vmul.f32 %v605, %v595
      %v610 = vmul.f32 %v601, %v594
      %v611 = vmul.f32 %v605, %v596
      %612 = vrot.lane.b32.xlu0 %v578, 1
      %v613 = vpop.permute.xlu0 %612
      %614 = vrot.lane.b32.xlu0 %v580, 1
      %v615 = vpop.permute.xlu0 %614
      %616 = vrot.lane.b32.xlu0 %v579, 1
      %v617 = vpop.permute.xlu0 %616
      %618 = vrot.lane.b32.xlu0 %v581, 1
      %v619 = vpop.permute.xlu0 %618
      %vm620 = vcmp.lt.s32.totalorder %v591, 1
      %v621 = vsel %vm620, %v613, %v617
      %v622 = vsel %vm620, %v615, %v619
      %v623 = vsel %vm620, %v617, %v613
      %v624 = vsel %vm620, %v619, %v615
      %v626 = vlaneseq
      %v627 = vshrl.u32 %v626, 7
      %v628 = vsub.s32 0, %v627
      %v629 = vrot.slane %v558, %v628
      %v630 = vlaneseq
      %v631 = vshrl.u32 %v630, 7
      %v632 = vsub.s32 1, %v631
      %v633 = vrot.slane %v558, %v632
      %v636 = vmul.f32 %v629, %v623
      %v637 = vmul.f32 %v633, %v621
      %v638 = vmul.f32 %v629, %v624
      %v639 = vmul.f32 %v633, %v622
      %v640 = vadd.f32 %v608, %v636
      %v641 = vadd.f32 %v609, %v637
      %v642 = vadd.f32 %v610, %v638
      %v643 = vadd.f32 %v611, %v639
      %644 = vrot.lane.b32.xlu0 %v578, 15
      %v645 = vpop.permute.xlu0 %644
      %646 = vrot.lane.b32.xlu0 %v580, 15
      %v647 = vpop.permute.xlu0 %646
      %648 = vrot.lane.b32.xlu0 %v579, 15
      %v649 = vpop.permute.xlu0 %648
      %650 = vrot.lane.b32.xlu0 %v581, 15
      %v651 = vpop.permute.xlu0 %650
      %vm652 = vcmp.lt.s32.totalorder %v591, 15
      %v653 = vsel %vm652, %v645, %v649
      %v654 = vsel %vm652, %v647, %v651
      %v655 = vsel %vm652, %v649, %v645
      %v656 = vsel %vm652, %v651, %v647
      %v658 = vlaneseq
      %v659 = vshrl.u32 %v658, 7
      %v660 = vsub.s32 0, %v659
      %v661 = vrot.slane %v551, %v660
      %v662 = vlaneseq
      %v663 = vshrl.u32 %v662, 7
      %v664 = vsub.s32 1, %v663
      %v665 = vrot.slane %v551, %v664
      %v668 = vmul.f32 %v661, %v655
      %v669 = vmul.f32 %v665, %v653
      %v670 = vmul.f32 %v661, %v656
      %v671 = vmul.f32 %v665, %v654
      %672 = vrot.lane.b32.xlu0 %v578, 127
      %v673 = vpop.permute.xlu0 %672
      %674 = vrot.lane.b32.xlu0 %v580, 127
      %v675 = vpop.permute.xlu0 %674
      %676 = vrot.lane.b32.xlu0 %v579, 127
      %v677 = vpop.permute.xlu0 %676
      %678 = vrot.lane.b32.xlu0 %v581, 127
      %v679 = vpop.permute.xlu0 %678
      %vm680 = vcmp.lt.s32.totalorder %v591, 127
      %v681 = vsel %vm680, %v673, %v677
      %v682 = vsel %vm680, %v675, %v679
      %v683 = vsel %vm680, %v677, %v673
      %v684 = vsel %vm680, %v679, %v675
      %v686 = vlaneseq
      %v687 = vshrl.u32 %v686, 7
      %v688 = vsub.s32 0, %v687
      %v689 = vrot.slane %v559, %v688
      %v690 = vlaneseq
      %v691 = vshrl.u32 %v690, 7
      %v692 = vsub.s32 1, %v691
      %v693 = vrot.slane %v559, %v692
      %v696 = vmul.f32 %v689, %v681
      %v697 = vmul.f32 %v693, %v683
      %v698 = vmul.f32 %v689, %v682
      %v699 = vmul.f32 %v693, %v684
      %v700 = vadd.f32 %v668, %v696
      %v701 = vadd.f32 %v669, %v697
      %v702 = vadd.f32 %v670, %v698
      %v703 = vadd.f32 %v671, %v699
      %v704 = vmul.f32 %v601, %v623
      %v705 = vmul.f32 %v605, %v621
      %v706 = vmul.f32 %v601, %v624
      %v707 = vmul.f32 %v605, %v622
      %708 = vrot.lane.b32.xlu0 %v578, 17
      %v709 = vpop.permute.xlu0 %708
      %710 = vrot.lane.b32.xlu0 %v580, 17
      %v711 = vpop.permute.xlu0 %710
      %712 = vrot.lane.b32.xlu0 %v579, 17
      %v713 = vpop.permute.xlu0 %712
      %714 = vrot.lane.b32.xlu0 %v581, 17
      %v715 = vpop.permute.xlu0 %714
      %vm716 = vcmp.lt.s32.totalorder %v591, 17
      %v717 = vsel %vm716, %v709, %v713
      %v718 = vsel %vm716, %v711, %v715
      %v719 = vsel %vm716, %v713, %v709
      %v720 = vsel %vm716, %v715, %v711
      %v721 = vmul.f32 %v629, %v719
      %v722 = vmul.f32 %v633, %v717
      %v723 = vmul.f32 %v629, %v720
      %v724 = vmul.f32 %v633, %v718
      %v725 = vadd.f32 %v704, %v721
      %v726 = vadd.f32 %v705, %v722
      %v727 = vadd.f32 %v706, %v723
      %v728 = vadd.f32 %v707, %v724
      %729 = vrot.lane.b32.xlu0 %v578, 16
      %v730 = vpop.permute.xlu0 %729
      %731 = vrot.lane.b32.xlu0 %v580, 16
      %v732 = vpop.permute.xlu0 %731
      %733 = vrot.lane.b32.xlu0 %v579, 16
      %v734 = vpop.permute.xlu0 %733
      %735 = vrot.lane.b32.xlu0 %v581, 16
      %v736 = vpop.permute.xlu0 %735
      %vm737 = vcmp.lt.s32.totalorder %v591, 16
      %v738 = vsel %vm737, %v730, %v734
      %v739 = vsel %vm737, %v732, %v736
      %v740 = vsel %vm737, %v734, %v730
      %v741 = vsel %vm737, %v736, %v732
      %742 = vrot.lane.b32.xlu0 %v578, 31
      %v743 = vpop.permute.xlu0 %742
      %744 = vrot.lane.b32.xlu0 %v580, 31
      %v745 = vpop.permute.xlu0 %744
      %746 = vrot.lane.b32.xlu0 %v579, 31
      %v747 = vpop.permute.xlu0 %746
      %748 = vrot.lane.b32.xlu0 %v581, 31
      %v749 = vpop.permute.xlu0 %748
      %vm750 = vcmp.lt.s32.totalorder %v591, 31
      %v751 = vsel %vm750, %v743, %v747
      %v752 = vsel %vm750, %v745, %v749
      %v753 = vsel %vm750, %v747, %v743
      %v754 = vsel %vm750, %v749, %v745
      %v755 = vmul.f32 %v661, %v753
      %v756 = vmul.f32 %v665, %v751
      %v757 = vmul.f32 %v661, %v754
      %v758 = vmul.f32 %v665, %v752
      %v759 = vmul.f32 %v689, %v655
      %v760 = vmul.f32 %v693, %v653
      %v761 = vmul.f32 %v689, %v656
      %v762 = vmul.f32 %v693, %v654
      %v763 = vadd.f32 %v755, %v759
      %v764 = vadd.f32 %v756, %v760
      %v765 = vadd.f32 %v757, %v761
      %v766 = vadd.f32 %v758, %v762
      %767 = vrot.lane.b32.xlu0 %v578, 97
      %v768 = vpop.permute.xlu0 %767
      %769 = vrot.lane.b32.xlu0 %v580, 97
      %v770 = vpop.permute.xlu0 %769
      %771 = vrot.lane.b32.xlu0 %v579, 97
      %v772 = vpop.permute.xlu0 %771
      %773 = vrot.lane.b32.xlu0 %v581, 97
      %v774 = vpop.permute.xlu0 %773
      %vm775 = vcmp.lt.s32.totalorder %v591, 97
      %v776 = vsel %vm775, %v768, %v772
      %v777 = vsel %vm775, %v770, %v774
      %v778 = vsel %vm775, %v772, %v768
      %v779 = vsel %vm775, %v774, %v770
      %v780 = vmul.f32 %v601, %v776
      %v781 = vmul.f32 %v605, %v778
      %v782 = vmul.f32 %v601, %v777
      %v783 = vmul.f32 %v605, %v779
      %v784 = vmul.f32 %v629, %v593
      %v785 = vmul.f32 %v633, %v595
      %v786 = vmul.f32 %v629, %v594
      %v787 = vmul.f32 %v633, %v596
      %v788 = vadd.f32 %v780, %v784
      %v789 = vadd.f32 %v781, %v785
      %v790 = vadd.f32 %v782, %v786
      %v791 = vadd.f32 %v783, %v787
      %792 = vrot.lane.b32.xlu0 %v578, 112
      %v793 = vpop.permute.xlu0 %792
      %794 = vrot.lane.b32.xlu0 %v580, 112
      %v795 = vpop.permute.xlu0 %794
      %796 = vrot.lane.b32.xlu0 %v579, 112
      %v797 = vpop.permute.xlu0 %796
      %798 = vrot.lane.b32.xlu0 %v581, 112
      %v799 = vpop.permute.xlu0 %798
      %vm800 = vcmp.lt.s32.totalorder %v591, 112
      %v801 = vsel %vm800, %v793, %v797
      %v802 = vsel %vm800, %v795, %v799
      %v803 = vsel %vm800, %v797, %v793
      %v804 = vsel %vm800, %v799, %v795
      %v805 = vmul.f32 %v661, %v681
      %v806 = vmul.f32 %v665, %v683
      %v807 = vmul.f32 %v661, %v682
      %v808 = vmul.f32 %v665, %v684
      %809 = vrot.lane.b32.xlu0 %v578, 111
      %v810 = vpop.permute.xlu0 %809
      %811 = vrot.lane.b32.xlu0 %v580, 111
      %v812 = vpop.permute.xlu0 %811
      %813 = vrot.lane.b32.xlu0 %v579, 111
      %v814 = vpop.permute.xlu0 %813
      %815 = vrot.lane.b32.xlu0 %v581, 111
      %v816 = vpop.permute.xlu0 %815
      %vm817 = vcmp.lt.s32.totalorder %v591, 111
      %v818 = vsel %vm817, %v810, %v814
      %v819 = vsel %vm817, %v812, %v816
      %v820 = vsel %vm817, %v814, %v810
      %v821 = vsel %vm817, %v816, %v812
      %v822 = vmul.f32 %v689, %v818
      %v823 = vmul.f32 %v693, %v820
      %v824 = vmul.f32 %v689, %v819
      %v825 = vmul.f32 %v693, %v821
      %v826 = vadd.f32 %v805, %v822
      %v827 = vadd.f32 %v806, %v823
      %v828 = vadd.f32 %v807, %v824
      %v829 = vadd.f32 %v808, %v825
      %v831 = vlaneseq
      %v832 = vshrl.u32 %v831, 7
      %v833 = vsub.s32 0, %v832
      %v834 = vrot.slane %v553, %v833
      %v835 = vlaneseq
      %v836 = vshrl.u32 %v835, 7
      %v837 = vsub.s32 1, %v836
      %v838 = vrot.slane %v553, %v837
      %v841 = vmul.f32 %v834, %v640
      %v842 = vmul.f32 %v838, %v641
      %v843 = vmul.f32 %v834, %v642
      %v844 = vmul.f32 %v838, %v643
      %v846 = vlaneseq
      %v847 = vshrl.u32 %v846, 7
      %v848 = vsub.s32 0, %v847
      %v849 = vrot.slane %v560, %v848
      %v850 = vlaneseq
      %v851 = vshrl.u32 %v850, 7
      %v852 = vsub.s32 1, %v851
      %v853 = vrot.slane %v560, %v852
      %v856 = vmul.f32 %v849, %v725
      %v857 = vmul.f32 %v853, %v726
      %v858 = vmul.f32 %v849, %v727
      %v859 = vmul.f32 %v853, %v728
      %v860 = vadd.f32 %v841, %v856
      %v861 = vadd.f32 %v842, %v857
      %v862 = vadd.f32 %v843, %v858
      %v863 = vadd.f32 %v844, %v859
      %v864 = vld [vmem:[%s6] sm:$0xff]
      %v865 = vmul.f32 %v834, %v578
      %v866 = vmul.f32 %v838, %v579
      %v867 = vmul.f32 %v834, %v580
      %v868 = vmul.f32 %v838, %v581
      %v869 = vmul.f32 %v849, %v740
      %v870 = vmul.f32 %v853, %v738
      %v871 = vmul.f32 %v849, %v741
      %v872 = vmul.f32 %v853, %v739
      %v873 = vadd.f32 %v865, %v869
      %v874 = vadd.f32 %v866, %v870
      %v875 = vadd.f32 %v867, %v871
      %v876 = vadd.f32 %v868, %v872
      %s877 = scalar_lea.vmem %s6, 8
      %v878 = vld [vmem:[%s877] sm:$0xff]
      %vm879 = vcmask 130048
      %v881 = vsel %vm879, %v878, 0
      %883 = vmatprep.subr.mxu0 %v874
      %884 = vmatpush1.msra.mxu0 %v873
      %885 = vmatprep.subr.mxu0 %v876
      %886 = vmatpush1.msra.mxu0 %v875
      %887 = vmatprep.subr.mxu0 0.0
      %888 = vmatpush1.msra.mxu0 0.0
      %889 = vmatprep.subr.mxu0 0.0
      %890 = vmatpush1.msra.mxu0 0.0
      %891 = vmatprep.subr.mxu0 0.0
      %892 = vmatpush1.msra.mxu0 0.0
      %893 = vmatprep.subr.mxu0 0.0
      %894 = vmatpush1.msra.mxu0 0.0
      %895 = vmatprep.subr.mxu0 0.0
      %896 = vmatpush1.msra.mxu0 0.0
      %897 = vmatprep.subr.mxu0 0.0
      %898 = vmatpush1.msra.mxu0 0.0
      %899 = vmatprep.subr.mxu0 0.0
      %900 = vmatpush1.msra.mxu0 0.0
      %901 = vmatprep.subr.mxu0 0.0
      %902 = vmatpush1.msra.mxu0 0.0
      %903 = vmatprep.subr.mxu0 0.0
      %904 = vmatpush1.msra.mxu0 0.0
      %905 = vmatprep.subr.mxu0 0.0
      %906 = vmatpush1.msra.mxu0 0.0
      %907 = vmatprep.subr.mxu0 0.0
      %908 = vmatpush1.msra.mxu0 0.0
      %909 = vmatprep.subr.mxu0 0.0
      %910 = vmatpush1.msra.mxu0 0.0
      %911 = vmatprep.subr.mxu0 0.0
      %912 = vmatpush1.msra.mxu0 0.0
      %913 = vmatprep.subr.mxu0 0.0
      %914 = vmatpush1.msra.mxu0 0.0
      %915 = vmatprep.subr.mxu0 0.0
      %916 = vmatpush1.msra.mxu0 0.0
      %917 = vmatprep.subr.mxu0 0.0
      %918 = vmatpush1.msra.mxu0 0.0
      %919 = vmatprep.subr.mxu0 0.0
      %920 = vmatpush1.msra.mxu0 0.0
      %921 = vmatprep.subr.mxu0 0.0
      %922 = vmatpush1.msra.mxu0 0.0
      %923 = vmatprep.subr.mxu0 0.0
      %924 = vmatpush1.msra.mxu0 0.0
      %925 = vmatprep.subr.mxu0 0.0
      %926 = vmatpush1.msra.mxu0 0.0
      %927 = vmatprep.subr.mxu0 0.0
      %928 = vmatpush1.msra.mxu0 0.0
      %929 = vmatprep.subr.mxu0 0.0
      %930 = vmatpush1.msra.mxu0 0.0
      %931 = vmatprep.subr.mxu0 0.0
      %932 = vmatpush1.msra.mxu0 0.0
      %933 = vmatprep.subr.mxu0 0.0
      %934 = vmatpush1.msra.mxu0 0.0
      %935 = vmatprep.subr.mxu0 0.0
      %936 = vmatpush1.msra.mxu0 0.0
      %937 = vmatprep.subr.mxu0 0.0
      %938 = vmatpush1.msra.mxu0 0.0
      %939 = vmatprep.subr.mxu0 0.0
      %940 = vmatpush1.msra.mxu0 0.0
      %941 = vmatprep.subr.mxu0 0.0
      %942 = vmatpush1.msra.mxu0 0.0
      %943 = vmatprep.subr.mxu0 0.0
      %944 = vmatpush1.msra.mxu0 0.0
      %945 = vmatprep.subr.mxu0 0.0
      %946 = vmatpush1.msra.mxu0 0.0
      %947 = vmatprep.mubr.f32.mxu0 0.0
      %948 = vmatmul.mubr.f32.gmra.mrb[0].mxu0 %v881
      %v949 = vpop.f32.mrb[0].mxu0
      %v950 = vadd.f32 0.0, %v949
      %v951 = vpop.f32.mrb[0].mxu0
      %v952 = vadd.f32 0.0, %v951
      %953 = vdwg.mxu0
      %v955 = vsel %vm879, %v864, 0
      %957 = vmatprep.subr.mxu0 %v861
      %958 = vmatpush1.msra.mxu0 %v860
      %959 = vmatprep.subr.mxu0 %v863
      %960 = vmatpush1.msra.mxu0 %v862
      %961 = vmatprep.subr.mxu0 0.0
      %962 = vmatpush1.msra.mxu0 0.0
      %963 = vmatprep.subr.mxu0 0.0
      %964 = vmatpush1.msra.mxu0 0.0
      %965 = vmatprep.subr.mxu0 0.0
      %966 = vmatpush1.msra.mxu0 0.0
      %967 = vmatprep.subr.mxu0 0.0
      %968 = vmatpush1.msra.mxu0 0.0
      %969 = vmatprep.subr.mxu0 0.0
      %970 = vmatpush1.msra.mxu0 0.0
      %971 = vmatprep.subr.mxu0 0.0
      %972 = vmatpush1.msra.mxu0 0.0
      %973 = vmatprep.subr.mxu0 0.0
      %974 = vmatpush1.msra.mxu0 0.0
      %975 = vmatprep.subr.mxu0 0.0
      %976 = vmatpush1.msra.mxu0 0.0
      %977 = vmatprep.subr.mxu0 0.0
      %978 = vmatpush1.msra.mxu0 0.0
      %979 = vmatprep.subr.mxu0 0.0
      %980 = vmatpush1.msra.mxu0 0.0
      %981 = vmatprep.subr.mxu0 0.0
      %982 = vmatpush1.msra.mxu0 0.0
      %983 = vmatprep.subr.mxu0 0.0
      %984 = vmatpush1.msra.mxu0 0.0
      %985 = vmatprep.subr.mxu0 0.0
      %986 = vmatpush1.msra.mxu0 0.0
      %987 = vmatprep.subr.mxu0 0.0
      %988 = vmatpush1.msra.mxu0 0.0
      %989 = vmatprep.subr.mxu0 0.0
      %990 = vmatpush1.msra.mxu0 0.0
      %991 = vmatprep.subr.mxu0 0.0
      %992 = vmatpush1.msra.mxu0 0.0
      %993 = vmatprep.subr.mxu0 0.0
      %994 = vmatpush1.msra.mxu0 0.0
      %995 = vmatprep.subr.mxu0 0.0
      %996 = vmatpush1.msra.mxu0 0.0
      %997 = vmatprep.subr.mxu0 0.0
      %998 = vmatpush1.msra.mxu0 0.0
      %999 = vmatprep.subr.mxu0 0.0
      %1000 = vmatpush1.msra.mxu0 0.0
      %1001 = vmatprep.subr.mxu0 0.0
      %1002 = vmatpush1.msra.mxu0 0.0
      %1003 = vmatprep.subr.mxu0 0.0
      %1004 = vmatpush1.msra.mxu0 0.0
      %1005 = vmatprep.subr.mxu0 0.0
      %1006 = vmatpush1.msra.mxu0 0.0
      %1007 = vmatprep.subr.mxu0 0.0
      %1008 = vmatpush1.msra.mxu0 0.0
      %1009 = vmatprep.subr.mxu0 0.0
      %1010 = vmatpush1.msra.mxu0 0.0
      %1011 = vmatprep.subr.mxu0 0.0
      %1012 = vmatpush1.msra.mxu0 0.0
      %1013 = vmatprep.subr.mxu0 0.0
      %1014 = vmatpush1.msra.mxu0 0.0
      %1015 = vmatprep.subr.mxu0 0.0
      %1016 = vmatpush1.msra.mxu0 0.0
      %1017 = vmatprep.subr.mxu0 0.0
      %1018 = vmatpush1.msra.mxu0 0.0
      %1019 = vmatprep.subr.mxu0 0.0
      %1020 = vmatpush1.msra.mxu0 0.0
      %1021 = vmatprep.mubr.f32.mxu0 0.0
      %1022 = vmatmul.mubr.f32.gmra.mrb[0].mxu0 %v955
      %v1023 = vpop.f32.mrb[0].mxu0
      %v1024 = vadd.f32 %v950, %v1023
      %v1025 = vpop.f32.mrb[0].mxu0
      %v1026 = vadd.f32 %v952, %v1025
      %1027 = vdwg.mxu0
      %v1028 = vmul.f32 %v834, %v700
      %v1029 = vmul.f32 %v838, %v701
      %v1030 = vmul.f32 %v834, %v702
      %v1031 = vmul.f32 %v838, %v703
      %v1032 = vmul.f32 %v849, %v763
      %v1033 = vmul.f32 %v853, %v764
      %v1034 = vmul.f32 %v849, %v765
      %v1035 = vmul.f32 %v853, %v766
      %v1036 = vadd.f32 %v1028, %v1032
      %v1037 = vadd.f32 %v1029, %v1033
      %v1038 = vadd.f32 %v1030, %v1034
      %v1039 = vadd.f32 %v1031, %v1035
      %s1040 = scalar_lea.vmem %s6, 16
      %v1041 = vld [vmem:[%s1040] sm:$0xff]
      %v1043 = vsel %vm879, %v1041, 0
      %1045 = vmatprep.subr.mxu0 %v1037
      %1046 = vmatpush1.msra.mxu0 %v1036
      %1047 = vmatprep.subr.mxu0 %v1039
      %1048 = vmatpush1.msra.mxu0 %v1038
      %1049 = vmatprep.subr.mxu0 0.0
      %1050 = vmatpush1.msra.mxu0 0.0
      %1051 = vmatprep.subr.mxu0 0.0
      %1052 = vmatpush1.msra.mxu0 0.0
      %1053 = vmatprep.subr.mxu0 0.0
      %1054 = vmatpush1.msra.mxu0 0.0
      %1055 = vmatprep.subr.mxu0 0.0
      %1056 = vmatpush1.msra.mxu0 0.0
      %1057 = vmatprep.subr.mxu0 0.0
      %1058 = vmatpush1.msra.mxu0 0.0
      %1059 = vmatprep.subr.mxu0 0.0
      %1060 = vmatpush1.msra.mxu0 0.0
      %1061 = vmatprep.subr.mxu0 0.0
      %1062 = vmatpush1.msra.mxu0 0.0
      %1063 = vmatprep.subr.mxu0 0.0
      %1064 = vmatpush1.msra.mxu0 0.0
      %1065 = vmatprep.subr.mxu0 0.0
      %1066 = vmatpush1.msra.mxu0 0.0
      %1067 = vmatprep.subr.mxu0 0.0
      %1068 = vmatpush1.msra.mxu0 0.0
      %1069 = vmatprep.subr.mxu0 0.0
      %1070 = vmatpush1.msra.mxu0 0.0
      %1071 = vmatprep.subr.mxu0 0.0
      %1072 = vmatpush1.msra.mxu0 0.0
      %1073 = vmatprep.subr.mxu0 0.0
      %1074 = vmatpush1.msra.mxu0 0.0
      %1075 = vmatprep.subr.mxu0 0.0
      %1076 = vmatpush1.msra.mxu0 0.0
      %1077 = vmatprep.subr.mxu0 0.0
      %1078 = vmatpush1.msra.mxu0 0.0
      %1079 = vmatprep.subr.mxu0 0.0
      %1080 = vmatpush1.msra.mxu0 0.0
      %1081 = vmatprep.subr.mxu0 0.0
      %1082 = vmatpush1.msra.mxu0 0.0
      %1083 = vmatprep.subr.mxu0 0.0
      %1084 = vmatpush1.msra.mxu0 0.0
      %1085 = vmatprep.subr.mxu0 0.0
      %1086 = vmatpush1.msra.mxu0 0.0
      %1087 = vmatprep.subr.mxu0 0.0
      %1088 = vmatpush1.msra.mxu0 0.0
      %1089 = vmatprep.subr.mxu0 0.0
      %1090 = vmatpush1.msra.mxu0 0.0
      %1091 = vmatprep.subr.mxu0 0.0
      %1092 = vmatpush1.msra.mxu0 0.0
      %1093 = vmatprep.subr.mxu0 0.0
      %1094 = vmatpush1.msra.mxu0 0.0
      %1095 = vmatprep.subr.mxu0 0.0
      %1096 = vmatpush1.msra.mxu0 0.0
      %1097 = vmatprep.subr.mxu0 0.0
      %1098 = vmatpush1.msra.mxu0 0.0
      %1099 = vmatprep.subr.mxu0 0.0
      %1100 = vmatpush1.msra.mxu0 0.0
      %1101 = vmatprep.subr.mxu0 0.0
      %1102 = vmatpush1.msra.mxu0 0.0
      %1103 = vmatprep.subr.mxu0 0.0
      %1104 = vmatpush1.msra.mxu0 0.0
      %1105 = vmatprep.subr.mxu0 0.0
      %1106 = vmatpush1.msra.mxu0 0.0
      %1107 = vmatprep.subr.mxu0 0.0
      %1108 = vmatpush1.msra.mxu0 0.0
      %1109 = vmatprep.mubr.f32.mxu0 0.0
      %1110 = vmatmul.mubr.f32.gmra.mrb[0].mxu0 %v1043
      %v1111 = vpop.f32.mrb[0].mxu0
      %v1112 = vadd.f32 0.0, %v1111
      %v1113 = vpop.f32.mrb[0].mxu0
      %v1114 = vadd.f32 0.0, %v1113
      %1115 = vdwg.mxu0
      %v1116 = vadd.f32 %v1024, %v1112
      %v1117 = vadd.f32 %v1026, %v1114
      %s1118 = scalar_lea.vmem %s6, 24
      %v1119 = vld [vmem:[%s1118] sm:$0xff]
      %v1121 = vsel %vm879, %v1119, 0
      %1123 = vmatprep.subr.mxu0 %v641
      %1124 = vmatpush1.msra.mxu0 %v640
      %1125 = vmatprep.subr.mxu0 %v643
      %1126 = vmatpush1.msra.mxu0 %v642
      %1127 = vmatprep.subr.mxu0 0.0
      %1128 = vmatpush1.msra.mxu0 0.0
      %1129 = vmatprep.subr.mxu0 0.0
      %1130 = vmatpush1.msra.mxu0 0.0
      %1131 = vmatprep.subr.mxu0 0.0
      %1132 = vmatpush1.msra.mxu0 0.0
      %1133 = vmatprep.subr.mxu0 0.0
      %1134 = vmatpush1.msra.mxu0 0.0
      %1135 = vmatprep.subr.mxu0 0.0
      %1136 = vmatpush1.msra.mxu0 0.0
      %1137 = vmatprep.subr.mxu0 0.0
      %1138 = vmatpush1.msra.mxu0 0.0
      %1139 = vmatprep.subr.mxu0 0.0
      %1140 = vmatpush1.msra.mxu0 0.0
      %1141 = vmatprep.subr.mxu0 0.0
      %1142 = vmatpush1.msra.mxu0 0.0
      %1143 = vmatprep.subr.mxu0 0.0
      %1144 = vmatpush1.msra.mxu0 0.0
      %1145 = vmatprep.subr.mxu0 0.0
      %1146 = vmatpush1.msra.mxu0 0.0
      %1147 = vmatprep.subr.mxu0 0.0
      %1148 = vmatpush1.msra.mxu0 0.0
      %1149 = vmatprep.subr.mxu0 0.0
      %1150 = vmatpush1.msra.mxu0 0.0
      %1151 = vmatprep.subr.mxu0 0.0
      %1152 = vmatpush1.msra.mxu0 0.0
      %1153 = vmatprep.subr.mxu0 0.0
      %1154 = vmatpush1.msra.mxu0 0.0
      %1155 = vmatprep.subr.mxu0 0.0
      %1156 = vmatpush1.msra.mxu0 0.0
      %1157 = vmatprep.subr.mxu0 0.0
      %1158 = vmatpush1.msra.mxu0 0.0
      %1159 = vmatprep.subr.mxu0 0.0
      %1160 = vmatpush1.msra.mxu0 0.0
      %1161 = vmatprep.subr.mxu0 0.0
      %1162 = vmatpush1.msra.mxu0 0.0
      %1163 = vmatprep.subr.mxu0 0.0
      %1164 = vmatpush1.msra.mxu0 0.0
      %1165 = vmatprep.subr.mxu0 0.0
      %1166 = vmatpush1.msra.mxu0 0.0
      %1167 = vmatprep.subr.mxu0 0.0
      %1168 = vmatpush1.msra.mxu0 0.0
      %1169 = vmatprep.subr.mxu0 0.0
      %1170 = vmatpush1.msra.mxu0 0.0
      %1171 = vmatprep.subr.mxu0 0.0
      %1172 = vmatpush1.msra.mxu0 0.0
      %1173 = vmatprep.subr.mxu0 0.0
      %1174 = vmatpush1.msra.mxu0 0.0
      %1175 = vmatprep.subr.mxu0 0.0
      %1176 = vmatpush1.msra.mxu0 0.0
      %1177 = vmatprep.subr.mxu0 0.0
      %1178 = vmatpush1.msra.mxu0 0.0
      %1179 = vmatprep.subr.mxu0 0.0
      %1180 = vmatpush1.msra.mxu0 0.0
      %1181 = vmatprep.subr.mxu0 0.0
      %1182 = vmatpush1.msra.mxu0 0.0
      %1183 = vmatprep.subr.mxu0 0.0
      %1184 = vmatpush1.msra.mxu0 0.0
      %1185 = vmatprep.subr.mxu0 0.0
      %1186 = vmatpush1.msra.mxu0 0.0
      %1187 = vmatprep.mubr.f32.mxu0 0.0
      %1188 = vmatmul.mubr.f32.gmra.mrb[0].mxu0 %v1121
      %v1189 = vpop.f32.mrb[0].mxu0
      %v1190 = vadd.f32 0.0, %v1189
      %v1191 = vpop.f32.mrb[0].mxu0
      %v1192 = vadd.f32 0.0, %v1191
      %1193 = vdwg.mxu0
      %v1194 = vadd.f32 %v1116, %v1190
      %v1195 = vadd.f32 %v1117, %v1192
      %s1196 = scalar_lea.vmem %s6, 32
      %v1197 = vld [vmem:[%s1196] sm:$0xff]
      %v1199 = vsel %vm879, %v1197, 0
      %1201 = vmatprep.subr.mxu0 %v579
      %1202 = vmatpush1.msra.mxu0 %v578
      %1203 = vmatprep.subr.mxu0 %v581
      %1204 = vmatpush1.msra.mxu0 %v580
      %1205 = vmatprep.subr.mxu0 0.0
      %1206 = vmatpush1.msra.mxu0 0.0
      %1207 = vmatprep.subr.mxu0 0.0
      %1208 = vmatpush1.msra.mxu0 0.0
      %1209 = vmatprep.subr.mxu0 0.0
      %1210 = vmatpush1.msra.mxu0 0.0
      %1211 = vmatprep.subr.mxu0 0.0
      %1212 = vmatpush1.msra.mxu0 0.0
      %1213 = vmatprep.subr.mxu0 0.0
      %1214 = vmatpush1.msra.mxu0 0.0
      %1215 = vmatprep.subr.mxu0 0.0
      %1216 = vmatpush1.msra.mxu0 0.0
      %1217 = vmatprep.subr.mxu0 0.0
      %1218 = vmatpush1.msra.mxu0 0.0
      %1219 = vmatprep.subr.mxu0 0.0
      %1220 = vmatpush1.msra.mxu0 0.0
      %1221 = vmatprep.subr.mxu0 0.0
      %1222 = vmatpush1.msra.mxu0 0.0
      %1223 = vmatprep.subr.mxu0 0.0
      %1224 = vmatpush1.msra.mxu0 0.0
      %1225 = vmatprep.subr.mxu0 0.0
      %1226 = vmatpush1.msra.mxu0 0.0
      %1227 = vmatprep.subr.mxu0 0.0
      %1228 = vmatpush1.msra.mxu0 0.0
      %1229 = vmatprep.subr.mxu0 0.0
      %1230 = vmatpush1.msra.mxu0 0.0
      %1231 = vmatprep.subr.mxu0 0.0
      %1232 = vmatpush1.msra.mxu0 0.0
      %1233 = vmatprep.subr.mxu0 0.0
      %1234 = vmatpush1.msra.mxu0 0.0
      %1235 = vmatprep.subr.mxu0 0.0
      %1236 = vmatpush1.msra.mxu0 0.0
      %1237 = vmatprep.subr.mxu0 0.0
      %1238 = vmatpush1.msra.mxu0 0.0
      %1239 = vmatprep.subr.mxu0 0.0
      %1240 = vmatpush1.msra.mxu0 0.0
      %1241 = vmatprep.subr.mxu0 0.0
      %1242 = vmatpush1.msra.mxu0 0.0
      %1243 = vmatprep.subr.mxu0 0.0
      %1244 = vmatpush1.msra.mxu0 0.0
      %1245 = vmatprep.subr.mxu0 0.0
      %1246 = vmatpush1.msra.mxu0 0.0
      %1247 = vmatprep.subr.mxu0 0.0
      %1248 = vmatpush1.msra.mxu0 0.0
      %1249 = vmatprep.subr.mxu0 0.0
      %1250 = vmatpush1.msra.mxu0 0.0
      %1251 = vmatprep.subr.mxu0 0.0
      %1252 = vmatpush1.msra.mxu0 0.0
      %1253 = vmatprep.subr.mxu0 0.0
      %1254 = vmatpush1.msra.mxu0 0.0
      %1255 = vmatprep.subr.mxu0 0.0
      %1256 = vmatpush1.msra.mxu0 0.0
      %1257 = vmatprep.subr.mxu0 0.0
      %1258 = vmatpush1.msra.mxu0 0.0
      %1259 = vmatprep.subr.mxu0 0.0
      %1260 = vmatpush1.msra.mxu0 0.0
      %1261 = vmatprep.subr.mxu0 0.0
      %1262 = vmatpush1.msra.mxu0 0.0
      %1263 = vmatprep.subr.mxu0 0.0
      %1264 = vmatpush1.msra.mxu0 0.0
      %1265 = vmatprep.mubr.f32.mxu0 0.0
      %1266 = vmatmul.mubr.f32.gmra.mrb[0].mxu0 %v1199
      %v1267 = vpop.f32.mrb[0].mxu0
      %v1268 = vadd.f32 0.0, %v1267
      %v1269 = vpop.f32.mrb[0].mxu0
      %v1270 = vadd.f32 0.0, %v1269
      %1271 = vdwg.mxu0
      %v1272 = vadd.f32 %v1194, %v1268
      %v1273 = vadd.f32 %v1195, %v1270
      %s1274 = scalar_lea.vmem %s6, 40
      %v1275 = vld [vmem:[%s1274] sm:$0xff]
      %v1277 = vsel %vm879, %v1275, 0
      %1279 = vmatprep.subr.mxu0 %v701
      %1280 = vmatpush1.msra.mxu0 %v700
      %1281 = vmatprep.subr.mxu0 %v703
      %1282 = vmatpush1.msra.mxu0 %v702
      %1283 = vmatprep.subr.mxu0 0.0
      %1284 = vmatpush1.msra.mxu0 0.0
      %1285 = vmatprep.subr.mxu0 0.0
      %1286 = vmatpush1.msra.mxu0 0.0
      %1287 = vmatprep.subr.mxu0 0.0
      %1288 = vmatpush1.msra.mxu0 0.0
      %1289 = vmatprep.subr.mxu0 0.0
      %1290 = vmatpush1.msra.mxu0 0.0
      %1291 = vmatprep.subr.mxu0 0.0
      %1292 = vmatpush1.msra.mxu0 0.0
      %1293 = vmatprep.subr.mxu0 0.0
      %1294 = vmatpush1.msra.mxu0 0.0
      %1295 = vmatprep.subr.mxu0 0.0
      %1296 = vmatpush1.msra.mxu0 0.0
      %1297 = vmatprep.subr.mxu0 0.0
      %1298 = vmatpush1.msra.mxu0 0.0
      %1299 = vmatprep.subr.mxu0 0.0
      %1300 = vmatpush1.msra.mxu0 0.0
      %1301 = vmatprep.subr.mxu0 0.0
      %1302 = vmatpush1.msra.mxu0 0.0
      %1303 = vmatprep.subr.mxu0 0.0
      %1304 = vmatpush1.msra.mxu0 0.0
      %1305 = vmatprep.subr.mxu0 0.0
      %1306 = vmatpush1.msra.mxu0 0.0
      %1307 = vmatprep.subr.mxu0 0.0
      %1308 = vmatpush1.msra.mxu0 0.0
      %1309 = vmatprep.subr.mxu0 0.0
      %1310 = vmatpush1.msra.mxu0 0.0
      %1311 = vmatprep.subr.mxu0 0.0
      %1312 = vmatpush1.msra.mxu0 0.0
      %1313 = vmatprep.subr.mxu0 0.0
      %1314 = vmatpush1.msra.mxu0 0.0
      %1315 = vmatprep.subr.mxu0 0.0
      %1316 = vmatpush1.msra.mxu0 0.0
      %1317 = vmatprep.subr.mxu0 0.0
      %1318 = vmatpush1.msra.mxu0 0.0
      %1319 = vmatprep.subr.mxu0 0.0
      %1320 = vmatpush1.msra.mxu0 0.0
      %1321 = vmatprep.subr.mxu0 0.0
      %1322 = vmatpush1.msra.mxu0 0.0
      %1323 = vmatprep.subr.mxu0 0.0
      %1324 = vmatpush1.msra.mxu0 0.0
      %1325 = vmatprep.subr.mxu0 0.0
      %1326 = vmatpush1.msra.mxu0 0.0
      %1327 = vmatprep.subr.mxu0 0.0
      %1328 = vmatpush1.msra.mxu0 0.0
      %1329 = vmatprep.subr.mxu0 0.0
      %1330 = vmatpush1.msra.mxu0 0.0
      %1331 = vmatprep.subr.mxu0 0.0
      %1332 = vmatpush1.msra.mxu0 0.0
      %1333 = vmatprep.subr.mxu0 0.0
      %1334 = vmatpush1.msra.mxu0 0.0
      %1335 = vmatprep.subr.mxu0 0.0
      %1336 = vmatpush1.msra.mxu0 0.0
      %1337 = vmatprep.subr.mxu0 0.0
      %1338 = vmatpush1.msra.mxu0 0.0
      %1339 = vmatprep.subr.mxu0 0.0
      %1340 = vmatpush1.msra.mxu0 0.0
      %1341 = vmatprep.subr.mxu0 0.0
      %1342 = vmatpush1.msra.mxu0 0.0
      %1343 = vmatprep.mubr.f32.mxu0 0.0
      %1344 = vmatmul.mubr.f32.gmra.mrb[0].mxu0 %v1277
      %v1345 = vpop.f32.mrb[0].mxu0
      %v1346 = vadd.f32 0.0, %v1345
      %v1347 = vpop.f32.mrb[0].mxu0
      %v1348 = vadd.f32 0.0, %v1347
      %1349 = vdwg.mxu0
      %v1350 = vadd.f32 %v1272, %v1346
      %v1351 = vadd.f32 %v1273, %v1348
      %v1353 = vlaneseq
      %v1354 = vshrl.u32 %v1353, 7
      %v1355 = vsub.s32 0, %v1354
      %v1356 = vrot.slane %v555, %v1355
      %v1357 = vlaneseq
      %v1358 = vshrl.u32 %v1357, 7
      %v1359 = vsub.s32 1, %v1358
      %v1360 = vrot.slane %v555, %v1359
      %v1363 = vmul.f32 %v1356, %v640
      %v1364 = vmul.f32 %v1360, %v641
      %v1365 = vmul.f32 %v1356, %v642
      %v1366 = vmul.f32 %v1360, %v643
      %v1368 = vlaneseq
      %v1369 = vshrl.u32 %v1368, 7
      %v1370 = vsub.s32 0, %v1369
      %v1371 = vrot.slane %v561, %v1370
      %v1372 = vlaneseq
      %v1373 = vshrl.u32 %v1372, 7
      %v1374 = vsub.s32 1, %v1373
      %v1375 = vrot.slane %v561, %v1374
      %v1378 = vmul.f32 %v1371, %v788
      %v1379 = vmul.f32 %v1375, %v789
      %v1380 = vmul.f32 %v1371, %v790
      %v1381 = vmul.f32 %v1375, %v791
      %v1382 = vadd.f32 %v1363, %v1378
      %v1383 = vadd.f32 %v1364, %v1379
      %v1384 = vadd.f32 %v1365, %v1380
      %v1385 = vadd.f32 %v1366, %v1381
      %s1386 = scalar_lea.vmem %s6, 48
      %v1387 = vld [vmem:[%s1386] sm:$0xff]
      %v1389 = vsel %vm879, %v1387, 0
      %1391 = vmatprep.subr.mxu0 %v1383
      %1392 = vmatpush1.msra.mxu0 %v1382
      %1393 = vmatprep.subr.mxu0 %v1385
      %1394 = vmatpush1.msra.mxu0 %v1384
      %1395 = vmatprep.subr.mxu0 0.0
      %1396 = vmatpush1.msra.mxu0 0.0
      %1397 = vmatprep.subr.mxu0 0.0
      %1398 = vmatpush1.msra.mxu0 0.0
      %1399 = vmatprep.subr.mxu0 0.0
      %1400 = vmatpush1.msra.mxu0 0.0
      %1401 = vmatprep.subr.mxu0 0.0
      %1402 = vmatpush1.msra.mxu0 0.0
      %1403 = vmatprep.subr.mxu0 0.0
      %1404 = vmatpush1.msra.mxu0 0.0
      %1405 = vmatprep.subr.mxu0 0.0
      %1406 = vmatpush1.msra.mxu0 0.0
      %1407 = vmatprep.subr.mxu0 0.0
      %1408 = vmatpush1.msra.mxu0 0.0
      %1409 = vmatprep.subr.mxu0 0.0
      %1410 = vmatpush1.msra.mxu0 0.0
      %1411 = vmatprep.subr.mxu0 0.0
      %1412 = vmatpush1.msra.mxu0 0.0
      %1413 = vmatprep.subr.mxu0 0.0
      %1414 = vmatpush1.msra.mxu0 0.0
      %1415 = vmatprep.subr.mxu0 0.0
      %1416 = vmatpush1.msra.mxu0 0.0
      %1417 = vmatprep.subr.mxu0 0.0
      %1418 = vmatpush1.msra.mxu0 0.0
      %1419 = vmatprep.subr.mxu0 0.0
      %1420 = vmatpush1.msra.mxu0 0.0
      %1421 = vmatprep.subr.mxu0 0.0
      %1422 = vmatpush1.msra.mxu0 0.0
      %1423 = vmatprep.subr.mxu0 0.0
      %1424 = vmatpush1.msra.mxu0 0.0
      %1425 = vmatprep.subr.mxu0 0.0
      %1426 = vmatpush1.msra.mxu0 0.0
      %1427 = vmatprep.subr.mxu0 0.0
      %1428 = vmatpush1.msra.mxu0 0.0
      %1429 = vmatprep.subr.mxu0 0.0
      %1430 = vmatpush1.msra.mxu0 0.0
      %1431 = vmatprep.subr.mxu0 0.0
      %1432 = vmatpush1.msra.mxu0 0.0
      %1433 = vmatprep.subr.mxu0 0.0
      %1434 = vmatpush1.msra.mxu0 0.0
      %1435 = vmatprep.subr.mxu0 0.0
      %1436 = vmatpush1.msra.mxu0 0.0
      %1437 = vmatprep.subr.mxu0 0.0
      %1438 = vmatpush1.msra.mxu0 0.0
      %1439 = vmatprep.subr.mxu0 0.0
      %1440 = vmatpush1.msra.mxu0 0.0
      %1441 = vmatprep.subr.mxu0 0.0
      %1442 = vmatpush1.msra.mxu0 0.0
      %1443 = vmatprep.subr.mxu0 0.0
      %1444 = vmatpush1.msra.mxu0 0.0
      %1445 = vmatprep.subr.mxu0 0.0
      %1446 = vmatpush1.msra.mxu0 0.0
      %1447 = vmatprep.subr.mxu0 0.0
      %1448 = vmatpush1.msra.mxu0 0.0
      %1449 = vmatprep.subr.mxu0 0.0
      %1450 = vmatpush1.msra.mxu0 0.0
      %1451 = vmatprep.subr.mxu0 0.0
      %1452 = vmatpush1.msra.mxu0 0.0
      %1453 = vmatprep.subr.mxu0 0.0
      %1454 = vmatpush1.msra.mxu0 0.0
      %1455 = vmatprep.mubr.f32.mxu0 0.0
      %1456 = vmatmul.mubr.f32.gmra.mrb[0].mxu0 %v1389
      %v1457 = vpop.f32.mrb[0].mxu0
      %v1458 = vadd.f32 0.0, %v1457
      %v1459 = vpop.f32.mrb[0].mxu0
      %v1460 = vadd.f32 0.0, %v1459
      %1461 = vdwg.mxu0
      %v1462 = vadd.f32 %v1350, %v1458
      %v1463 = vadd.f32 %v1351, %v1460
      %v1464 = vmul.f32 %v1356, %v578
      %v1465 = vmul.f32 %v1360, %v579
      %v1466 = vmul.f32 %v1356, %v580
      %v1467 = vmul.f32 %v1360, %v581
      %v1468 = vmul.f32 %v1371, %v801
      %v1469 = vmul.f32 %v1375, %v803
      %v1470 = vmul.f32 %v1371, %v802
      %v1471 = vmul.f32 %v1375, %v804
      %v1472 = vadd.f32 %v1464, %v1468
      %v1473 = vadd.f32 %v1465, %v1469
      %v1474 = vadd.f32 %v1466, %v1470
      %v1475 = vadd.f32 %v1467, %v1471
      %s1476 = scalar_lea.vmem %s6, 56
      %v1477 = vld [vmem:[%s1476] sm:$0xff]
      %v1479 = vsel %vm879, %v1477, 0
      %1481 = vmatprep.subr.mxu0 %v1473
      %1482 = vmatpush1.msra.mxu0 %v1472
      %1483 = vmatprep.subr.mxu0 %v1475
      %1484 = vmatpush1.msra.mxu0 %v1474
      %1485 = vmatprep.subr.mxu0 0.0
      %1486 = vmatpush1.msra.mxu0 0.0
      %1487 = vmatprep.subr.mxu0 0.0
      %1488 = vmatpush1.msra.mxu0 0.0
      %1489 = vmatprep.subr.mxu0 0.0
      %1490 = vmatpush1.msra.mxu0 0.0
      %1491 = vmatprep.subr.mxu0 0.0
      %1492 = vmatpush1.msra.mxu0 0.0
      %1493 = vmatprep.subr.mxu0 0.0
      %1494 = vmatpush1.msra.mxu0 0.0
      %1495 = vmatprep.subr.mxu0 0.0
      %1496 = vmatpush1.msra.mxu0 0.0
      %1497 = vmatprep.subr.mxu0 0.0
      %1498 = vmatpush1.msra.mxu0 0.0
      %1499 = vmatprep.subr.mxu0 0.0
      %1500 = vmatpush1.msra.mxu0 0.0
      %1501 = vmatprep.subr.mxu0 0.0
      %1502 = vmatpush1.msra.mxu0 0.0
      %1503 = vmatprep.subr.mxu0 0.0
      %1504 = vmatpush1.msra.mxu0 0.0
      %1505 = vmatprep.subr.mxu0 0.0
      %1506 = vmatpush1.msra.mxu0 0.0
      %1507 = vmatprep.subr.mxu0 0.0
      %1508 = vmatpush1.msra.mxu0 0.0
      %1509 = vmatprep.subr.mxu0 0.0
      %1510 = vmatpush1.msra.mxu0 0.0
      %1511 = vmatprep.subr.mxu0 0.0
      %1512 = vmatpush1.msra.mxu0 0.0
      %1513 = vmatprep.subr.mxu0 0.0
      %1514 = vmatpush1.msra.mxu0 0.0
      %1515 = vmatprep.subr.mxu0 0.0
      %1516 = vmatpush1.msra.mxu0 0.0
      %1517 = vmatprep.subr.mxu0 0.0
      %1518 = vmatpush1.msra.mxu0 0.0
      %1519 = vmatprep.subr.mxu0 0.0
      %1520 = vmatpush1.msra.mxu0 0.0
      %1521 = vmatprep.subr.mxu0 0.0
      %1522 = vmatpush1.msra.mxu0 0.0
      %1523 = vmatprep.subr.mxu0 0.0
      %1524 = vmatpush1.msra.mxu0 0.0
      %1525 = vmatprep.subr.mxu0 0.0
      %1526 = vmatpush1.msra.mxu0 0.0
      %1527 = vmatprep.subr.mxu0 0.0
      %1528 = vmatpush1.msra.mxu0 0.0
      %1529 = vmatprep.subr.mxu0 0.0
      %1530 = vmatpush1.msra.mxu0 0.0
      %1531 = vmatprep.subr.mxu0 0.0
      %1532 = vmatpush1.msra.mxu0 0.0
      %1533 = vmatprep.subr.mxu0 0.0
      %1534 = vmatpush1.msra.mxu0 0.0
      %1535 = vmatprep.subr.mxu0 0.0
      %1536 = vmatpush1.msra.mxu0 0.0
      %1537 = vmatprep.subr.mxu0 0.0
      %1538 = vmatpush1.msra.mxu0 0.0
      %1539 = vmatprep.subr.mxu0 0.0
      %1540 = vmatpush1.msra.mxu0 0.0
      %1541 = vmatprep.subr.mxu0 0.0
      %1542 = vmatpush1.msra.mxu0 0.0
      %1543 = vmatprep.subr.mxu0 0.0
      %1544 = vmatpush1.msra.mxu0 0.0
      %1545 = vmatprep.mubr.f32.mxu0 0.0
      %1546 = vmatmul.mubr.f32.gmra.mrb[0].mxu0 %v1479
      %v1547 = vpop.f32.mrb[0].mxu0
      %v1548 = vadd.f32 0.0, %v1547
      %v1549 = vpop.f32.mrb[0].mxu0
      %v1550 = vadd.f32 0.0, %v1549
      %1551 = vdwg.mxu0
      %v1552 = vadd.f32 %v1462, %v1548
      %v1553 = vadd.f32 %v1463, %v1550
      %v1554 = vmul.f32 %v1356, %v700
      %v1555 = vmul.f32 %v1360, %v701
      %v1556 = vmul.f32 %v1356, %v702
      %v1557 = vmul.f32 %v1360, %v703
      %v1558 = vmul.f32 %v1371, %v826
      %v1559 = vmul.f32 %v1375, %v827
      %v1560 = vmul.f32 %v1371, %v828
      %v1561 = vmul.f32 %v1375, %v829
      %v1562 = vadd.f32 %v1554, %v1558
      %v1563 = vadd.f32 %v1555, %v1559
      %v1564 = vadd.f32 %v1556, %v1560
      %v1565 = vadd.f32 %v1557, %v1561
      %s1566 = scalar_lea.vmem %s6, 64
      %v1567 = vld [vmem:[%s1566] sm:$0xff]
      %v1569 = vsel %vm879, %v1567, 0
      %1571 = vmatprep.subr.mxu0 %v1563
      %1572 = vmatpush1.msra.mxu0 %v1562
      %1573 = vmatprep.subr.mxu0 %v1565
      %1574 = vmatpush1.msra.mxu0 %v1564
      %1575 = vmatprep.subr.mxu0 0.0
      %1576 = vmatpush1.msra.mxu0 0.0
      %1577 = vmatprep.subr.mxu0 0.0
      %1578 = vmatpush1.msra.mxu0 0.0
      %1579 = vmatprep.subr.mxu0 0.0
      %1580 = vmatpush1.msra.mxu0 0.0
      %1581 = vmatprep.subr.mxu0 0.0
      %1582 = vmatpush1.msra.mxu0 0.0
      %1583 = vmatprep.subr.mxu0 0.0
      %1584 = vmatpush1.msra.mxu0 0.0
      %1585 = vmatprep.subr.mxu0 0.0
      %1586 = vmatpush1.msra.mxu0 0.0
      %1587 = vmatprep.subr.mxu0 0.0
      %1588 = vmatpush1.msra.mxu0 0.0
      %1589 = vmatprep.subr.mxu0 0.0
      %1590 = vmatpush1.msra.mxu0 0.0
      %1591 = vmatprep.subr.mxu0 0.0
      %1592 = vmatpush1.msra.mxu0 0.0
      %1593 = vmatprep.subr.mxu0 0.0
      %1594 = vmatpush1.msra.mxu0 0.0
      %1595 = vmatprep.subr.mxu0 0.0
      %1596 = vmatpush1.msra.mxu0 0.0
      %1597 = vmatprep.subr.mxu0 0.0
      %1598 = vmatpush1.msra.mxu0 0.0
      %1599 = vmatprep.subr.mxu0 0.0
      %1600 = vmatpush1.msra.mxu0 0.0
      %1601 = vmatprep.subr.mxu0 0.0
      %1602 = vmatpush1.msra.mxu0 0.0
      %1603 = vmatprep.subr.mxu0 0.0
      %1604 = vmatpush1.msra.mxu0 0.0
      %1605 = vmatprep.subr.mxu0 0.0
      %1606 = vmatpush1.msra.mxu0 0.0
      %1607 = vmatprep.subr.mxu0 0.0
      %1608 = vmatpush1.msra.mxu0 0.0
      %1609 = vmatprep.subr.mxu0 0.0
      %1610 = vmatpush1.msra.mxu0 0.0
      %1611 = vmatprep.subr.mxu0 0.0
      %1612 = vmatpush1.msra.mxu0 0.0
      %1613 = vmatprep.subr.mxu0 0.0
      %1614 = vmatpush1.msra.mxu0 0.0
      %1615 = vmatprep.subr.mxu0 0.0
      %1616 = vmatpush1.msra.mxu0 0.0
      %1617 = vmatprep.subr.mxu0 0.0
      %1618 = vmatpush1.msra.mxu0 0.0
      %1619 = vmatprep.subr.mxu0 0.0
      %1620 = vmatpush1.msra.mxu0 0.0
      %1621 = vmatprep.subr.mxu0 0.0
      %1622 = vmatpush1.msra.mxu0 0.0
      %1623 = vmatprep.subr.mxu0 0.0
      %1624 = vmatpush1.msra.mxu0 0.0
      %1625 = vmatprep.subr.mxu0 0.0
      %1626 = vmatpush1.msra.mxu0 0.0
      %1627 = vmatprep.subr.mxu0 0.0
      %1628 = vmatpush1.msra.mxu0 0.0
      %1629 = vmatprep.subr.mxu0 0.0
      %1630 = vmatpush1.msra.mxu0 0.0
      %1631 = vmatprep.subr.mxu0 0.0
      %1632 = vmatpush1.msra.mxu0 0.0
      %1633 = vmatprep.subr.mxu0 0.0
      %1634 = vmatpush1.msra.mxu0 0.0
      %1635 = vmatprep.mubr.f32.mxu0 0.0
      %1636 = vmatmul.mubr.f32.gmra.mrb[0].mxu0 %v1569
      %v1637 = vpop.f32.mrb[0].mxu0
      %v1638 = vadd.f32 0.0, %v1637
      %v1639 = vpop.f32.mrb[0].mxu0
      %v1640 = vadd.f32 0.0, %v1639
      %1641 = vdwg.mxu0
      %v1642 = vadd.f32 %v1552, %v1638
      %v1643 = vadd.f32 %v1553, %v1640
      %v1644 = vld [vmem:[%s525] sm:$0xff]
      %1646 = vset.pattern.permute.xlu0 0
      %1647 = vperm.xlu0 %1646, %v1644
      %v1648 = vpop.permute.xlu0 %1647
      %v1650 = vmul.f32 %v1642, %v1648
      %v1651 = vmul.f32 %v1643, %v1648
      %v1652 = vld [vmem:[%s7] sm:$0xff]
      %1654 = vset.pattern.permute.xlu0 0
      %1655 = vperm.xlu0 %1654, %v1652
      %v1656 = vpop.permute.xlu0 %1655
      %v1658 = vadd.f32 %v1650, %v1656
      %v1659 = vadd.f32 %v1651, %v1656
      %vm1660 = vcmp.ge.f32.partialorder %v1658, 0.0
      %vm1661 = vcmp.ge.f32.partialorder %v1659, 0.0
      %v1662 = vmul.f32 %v1658, 0.2
      %v1663 = vmul.f32 %v1659, 0.2
      %v1664 = vsel %vm1660, %v1658, %v1662
      %v1665 = vsel %vm1661, %v1659, %v1663
      %v1666 = vmul.f32 %v1664, 1.4142135
      %v1667 = vmul.f32 %v1665, 1.4142135
      %v1668 = vld [vmem:[%s8] sm:$0xff]
      %vm1669 = vcmask 64512
      %v1671 = vsel %vm1669, %v1668, 0
      %1673 = vmatprep.subr.mxu0 %v563
      %1674 = vmatpush1.msra.mxu0 %v562
      %1675 = vmatprep.subr.mxu0 0.0
      %1676 = vmatpush1.msra.mxu0 0.0
      %1677 = vmatprep.subr.mxu0 0.0
      %1678 = vmatpush1.msra.mxu0 0.0
      %1679 = vmatprep.subr.mxu0 0.0
      %1680 = vmatpush1.msra.mxu0 0.0
      %1681 = vmatprep.subr.mxu0 0.0
      %1682 = vmatpush1.msra.mxu0 0.0
      %1683 = vmatprep.subr.mxu0 0.0
      %1684 = vmatpush1.msra.mxu0 0.0
      %1685 = vmatprep.subr.mxu0 0.0
      %1686 = vmatpush1.msra.mxu0 0.0
      %1687 = vmatprep.subr.mxu0 0.0
      %1688 = vmatpush1.msra.mxu0 0.0
      %1689 = vmatprep.subr.mxu0 0.0
      %1690 = vmatpush1.msra.mxu0 0.0
      %1691 = vmatprep.subr.mxu0 0.0
      %1692 = vmatpush1.msra.mxu0 0.0
      %1693 = vmatprep.subr.mxu0 0.0
      %1694 = vmatpush1.msra.mxu0 0.0
      %1695 = vmatprep.subr.mxu0 0.0
      %1696 = vmatpush1.msra.mxu0 0.0
      %1697 = vmatprep.subr.mxu0 0.0
      %1698 = vmatpush1.msra.mxu0 0.0
      %1699 = vmatprep.subr.mxu0 0.0
      %1700 = vmatpush1.msra.mxu0 0.0
      %1701 = vmatprep.subr.mxu0 0.0
      %1702 = vmatpush1.msra.mxu0 0.0
      %1703 = vmatprep.subr.mxu0 0.0
      %1704 = vmatpush1.msra.mxu0 0.0
      %1705 = vmatprep.subr.mxu0 0.0
      %1706 = vmatpush1.msra.mxu0 0.0
      %1707 = vmatprep.subr.mxu0 0.0
      %1708 = vmatpush1.msra.mxu0 0.0
      %1709 = vmatprep.subr.mxu0 0.0
      %1710 = vmatpush1.msra.mxu0 0.0
      %1711 = vmatprep.subr.mxu0 0.0
      %1712 = vmatpush1.msra.mxu0 0.0
      %1713 = vmatprep.subr.mxu0 0.0
      %1714 = vmatpush1.msra.mxu0 0.0
      %1715 = vmatprep.subr.mxu0 0.0
      %1716 = vmatpush1.msra.mxu0 0.0
      %1717 = vmatprep.subr.mxu0 0.0
      %1718 = vmatpush1.msra.mxu0 0.0
      %1719 = vmatprep.subr.mxu0 0.0
      %1720 = vmatpush1.msra.mxu0 0.0
      %1721 = vmatprep.subr.mxu0 0.0
      %1722 = vmatpush1.msra.mxu0 0.0
      %1723 = vmatprep.subr.mxu0 0.0
      %1724 = vmatpush1.msra.mxu0 0.0
      %1725 = vmatprep.subr.mxu0 0.0
      %1726 = vmatpush1.msra.mxu0 0.0
      %1727 = vmatprep.subr.mxu0 0.0
      %1728 = vmatpush1.msra.mxu0 0.0
      %1729 = vmatprep.subr.mxu0 0.0
      %1730 = vmatpush1.msra.mxu0 0.0
      %1731 = vmatprep.subr.mxu0 0.0
      %1732 = vmatpush1.msra.mxu0 0.0
      %1733 = vmatprep.subr.mxu0 0.0
      %1734 = vmatpush1.msra.mxu0 0.0
      %1735 = vmatprep.subr.mxu0 0.0
      %1736 = vmatpush1.msra.mxu0 0.0
      %1737 = vmatprep.mubr.f32.mxu0 0.0
      %1738 = vmatmul.mubr.f32.gmra.mrb[0].mxu0 %v1671
      %v1739 = vpop.f32.mrb[0].mxu0
      %v1740 = vadd.f32 0.0, %v1739
      %v1741 = vpop.f32.mrb[0].mxu0
      %v1742 = vadd.f32 0.0, %v1741
      %1743 = vdwg.mxu0
      %v1744 = vadd.f32 %v1666, %v1740
      %v1745 = vadd.f32 %v1667, %v1742
      %v1746 = vld [vmem:[%s9] sm:$0xff]
      %1748 = vset.pattern.permute.xlu0 0
      %1749 = vperm.xlu0 %1748, %v1746
      %v1750 = vpop.permute.xlu0 %1749
      %v1752 = vadd.f32 %v1744, %v1750
      %v1753 = vadd.f32 %v1745, %v1750
      %1754 = vst [vmem:[#allocation2] sm:$0xff] %v1752
      %1755 = vst [vmem:[#allocation2 + $0x8] sm:$0xff] %v1753
      %v1756 = vld [vmem:[#allocation2] sm:$0xff]
      %v1757 = vld [vmem:[#allocation2 + $0x8] sm:$0xff]
      %v1758 = vld [vmem:[#allocation2 + $0x10] sm:$0xff]
      %v1759 = vld [vmem:[#allocation2 + $0x18] sm:$0xff]
      %v1760 = vld [vmem:[%s530] sm:$0xff]
      %v1761 = vld [vmem:[%s530 + $0x8] sm:$0xff]
      %1763 = vset.pattern.permute.xlu0 0
      %1764 = vperm.xlu0 %1763, %v1760
      %v1765 = vpop.permute.xlu0 %1764
      %1768 = vset.pattern.permute.xlu0 0
      %1769 = vperm.xlu0 %1768, %v1761
      %v1770 = vpop.permute.xlu0 %1769
      %v1772 = vmul.f32 %v1756, %v1765
      %v1773 = vmul.f32 %v1757, %v1765
      %v1774 = vmul.f32 %v1758, %v1770
      %v1775 = vmul.f32 %v1759, %v1770
      %v1776 = vld [vmem:[%s10] sm:$0xff]
      %1777 = vrot.lane.b32.xlu0 %v1772, 17
      %v1778 = vpop.permute.xlu0 %1777
      %1779 = vrot.lane.b32.xlu0 %v1774, 17
      %v1780 = vpop.permute.xlu0 %1779
      %1781 = vrot.lane.b32.xlu0 %v1773, 17
      %v1782 = vpop.permute.xlu0 %1781
      %1783 = vrot.lane.b32.xlu0 %v1775, 17
      %v1784 = vpop.permute.xlu0 %1783
      %v1785 = vsel %vm716, %v1778, %v1782
      %v1786 = vsel %vm716, %v1780, %v1784
      %v1787 = vsel %vm716, %v1782, %v1778
      %v1788 = vsel %vm716, %v1784, %v1780
      %s1789 = scalar_lea.vmem %s10, 8
      %v1790 = vld [vmem:[%s1789] sm:$0xff]
      %1791 = vrot.lane.b32.xlu0 %v1772, 16
      %v1792 = vpop.permute.xlu0 %1791
      %1793 = vrot.lane.b32.xlu0 %v1774, 16
      %v1794 = vpop.permute.xlu0 %1793
      %1795 = vrot.lane.b32.xlu0 %v1773, 16
      %v1796 = vpop.permute.xlu0 %1795
      %1797 = vrot.lane.b32.xlu0 %v1775, 16
      %v1798 = vpop.permute.xlu0 %1797
      %v1799 = vsel %vm737, %v1792, %v1796
      %v1800 = vsel %vm737, %v1794, %v1798
      %v1801 = vsel %vm737, %v1796, %v1792
      %v1802 = vsel %vm737, %v1798, %v1794
      %v1804 = vsel %vm879, %v1790, 0
      %1806 = vmatprep.subr.mxu0 %v1799
      %1807 = vmatpush1.msra.mxu0 %v1801
      %1808 = vmatprep.subr.mxu0 %v1800
      %1809 = vmatpush1.msra.mxu0 %v1802
      %1810 = vmatprep.subr.mxu0 0.0
      %1811 = vmatpush1.msra.mxu0 0.0
      %1812 = vmatprep.subr.mxu0 0.0
      %1813 = vmatpush1.msra.mxu0 0.0
      %1814 = vmatprep.subr.mxu0 0.0
      %1815 = vmatpush1.msra.mxu0 0.0
      %1816 = vmatprep.subr.mxu0 0.0
      %1817 = vmatpush1.msra.mxu0 0.0
      %1818 = vmatprep.subr.mxu0 0.0
      %1819 = vmatpush1.msra.mxu0 0.0
      %1820 = vmatprep.subr.mxu0 0.0
      %1821 = vmatpush1.msra.mxu0 0.0
      %1822 = vmatprep.subr.mxu0 0.0
      %1823 = vmatpush1.msra.mxu0 0.0
      %1824 = vmatprep.subr.mxu0 0.0
      %1825 = vmatpush1.msra.mxu0 0.0
      %1826 = vmatprep.subr.mxu0 0.0
      %1827 = vmatpush1.msra.mxu0 0.0
      %1828 = vmatprep.subr.mxu0 0.0
      %1829 = vmatpush1.msra.mxu0 0.0
      %1830 = vmatprep.subr.mxu0 0.0
      %1831 = vmatpush1.msra.mxu0 0.0
      %1832 = vmatprep.subr.mxu0 0.0
      %1833 = vmatpush1.msra.mxu0 0.0
      %1834 = vmatprep.subr.mxu0 0.0
      %1835 = vmatpush1.msra.mxu0 0.0
      %1836 = vmatprep.subr.mxu0 0.0
      %1837 = vmatpush1.msra.mxu0 0.0
      %1838 = vmatprep.subr.mxu0 0.0
      %1839 = vmatpush1.msra.mxu0 0.0
      %1840 = vmatprep.subr.mxu0 0.0
      %1841 = vmatpush1.msra.mxu0 0.0
      %1842 = vmatprep.subr.mxu0 0.0
      %1843 = vmatpush1.msra.mxu0 0.0
      %1844 = vmatprep.subr.mxu0 0.0
      %1845 = vmatpush1.msra.mxu0 0.0
      %1846 = vmatprep.subr.mxu0 0.0
      %1847 = vmatpush1.msra.mxu0 0.0
      %1848 = vmatprep.subr.mxu0 0.0
      %1849 = vmatpush1.msra.mxu0 0.0
      %1850 = vmatprep.subr.mxu0 0.0
      %1851 = vmatpush1.msra.mxu0 0.0
      %1852 = vmatprep.subr.mxu0 0.0
      %1853 = vmatpush1.msra.mxu0 0.0
      %1854 = vmatprep.subr.mxu0 0.0
      %1855 = vmatpush1.msra.mxu0 0.0
      %1856 = vmatprep.subr.mxu0 0.0
      %1857 = vmatpush1.msra.mxu0 0.0
      %1858 = vmatprep.subr.mxu0 0.0
      %1859 = vmatpush1.msra.mxu0 0.0
      %1860 = vmatprep.subr.mxu0 0.0
      %1861 = vmatpush1.msra.mxu0 0.0
      %1862 = vmatprep.subr.mxu0 0.0
      %1863 = vmatpush1.msra.mxu0 0.0
      %1864 = vmatprep.subr.mxu0 0.0
      %1865 = vmatpush1.msra.mxu0 0.0
      %1866 = vmatprep.subr.mxu0 0.0
      %1867 = vmatpush1.msra.mxu0 0.0
      %1868 = vmatprep.subr.mxu0 0.0
      %1869 = vmatpush1.msra.mxu0 0.0
      %1870 = vmatprep.mubr.f32.mxu0 0.0
      %1871 = vmatmul.mubr.f32.gmra.mrb[0].mxu0 %v1804
      %v1872 = vpop.f32.mrb[0].mxu0
      %v1873 = vadd.f32 0.0, %v1872
      %v1874 = vpop.f32.mrb[0].mxu0
      %v1875 = vadd.f32 0.0, %v1874
      %1876 = vdwg.mxu0
      %v1878 = vsel %vm879, %v1776, 0
      %1880 = vmatprep.subr.mxu0 %v1785
      %1881 = vmatpush1.msra.mxu0 %v1787
      %1882 = vmatprep.subr.mxu0 %v1786
      %1883 = vmatpush1.msra.mxu0 %v1788
      %1884 = vmatprep.subr.mxu0 0.0
      %1885 = vmatpush1.msra.mxu0 0.0
      %1886 = vmatprep.subr.mxu0 0.0
      %1887 = vmatpush1.msra.mxu0 0.0
      %1888 = vmatprep.subr.mxu0 0.0
      %1889 = vmatpush1.msra.mxu0 0.0
      %1890 = vmatprep.subr.mxu0 0.0
      %1891 = vmatpush1.msra.mxu0 0.0
      %1892 = vmatprep.subr.mxu0 0.0
      %1893 = vmatpush1.msra.mxu0 0.0
      %1894 = vmatprep.subr.mxu0 0.0
      %1895 = vmatpush1.msra.mxu0 0.0
      %1896 = vmatprep.subr.mxu0 0.0
      %1897 = vmatpush1.msra.mxu0 0.0
      %1898 = vmatprep.subr.mxu0 0.0
      %1899 = vmatpush1.msra.mxu0 0.0
      %1900 = vmatprep.subr.mxu0 0.0
      %1901 = vmatpush1.msra.mxu0 0.0
      %1902 = vmatprep.subr.mxu0 0.0
      %1903 = vmatpush1.msra.mxu0 0.0
      %1904 = vmatprep.subr.mxu0 0.0
      %1905 = vmatpush1.msra.mxu0 0.0
      %1906 = vmatprep.subr.mxu0 0.0
      %1907 = vmatpush1.msra.mxu0 0.0
      %1908 = vmatprep.subr.mxu0 0.0
      %1909 = vmatpush1.msra.mxu0 0.0
      %1910 = vmatprep.subr.mxu0 0.0
      %1911 = vmatpush1.msra.mxu0 0.0
      %1912 = vmatprep.subr.mxu0 0.0
      %1913 = vmatpush1.msra.mxu0 0.0
      %1914 = vmatprep.subr.mxu0 0.0
      %1915 = vmatpush1.msra.mxu0 0.0
      %1916 = vmatprep.subr.mxu0 0.0
      %1917 = vmatpush1.msra.mxu0 0.0
      %1918 = vmatprep.subr.mxu0 0.0
      %1919 = vmatpush1.msra.mxu0 0.0
      %1920 = vmatprep.subr.mxu0 0.0
      %1921 = vmatpush1.msra.mxu0 0.0
      %1922 = vmatprep.subr.mxu0 0.0
      %1923 = vmatpush1.msra.mxu0 0.0
      %1924 = vmatprep.subr.mxu0 0.0
      %1925 = vmatpush1.msra.mxu0 0.0
      %1926 = vmatprep.subr.mxu0 0.0
      %1927 = vmatpush1.msra.mxu0 0.0
      %1928 = vmatprep.subr.mxu0 0.0
      %1929 = vmatpush1.msra.mxu0 0.0
      %1930 = vmatprep.subr.mxu0 0.0
      %1931 = vmatpush1.msra.mxu0 0.0
      %1932 = vmatprep.subr.mxu0 0.0
      %1933 = vmatpush1.msra.mxu0 0.0
      %1934 = vmatprep.subr.mxu0 0.0
      %1935 = vmatpush1.msra.mxu0 0.0
      %1936 = vmatprep.subr.mxu0 0.0
      %1937 = vmatpush1.msra.mxu0 0.0
      %1938 = vmatprep.subr.mxu0 0.0
      %1939 = vmatpush1.msra.mxu0 0.0
      %1940 = vmatprep.subr.mxu0 0.0
      %1941 = vmatpush1.msra.mxu0 0.0
      %1942 = vmatprep.subr.mxu0 0.0
      %1943 = vmatpush1.msra.mxu0 0.0
      %1944 = vmatprep.mubr.f32.mxu0 0.0
      %1945 = vmatmul.mubr.f32.gmra.mrb[0].mxu0 %v1878
      %v1946 = vpop.f32.mrb[0].mxu0
      %v1947 = vadd.f32 %v1873, %v1946
      %v1948 = vpop.f32.mrb[0].mxu0
      %v1949 = vadd.f32 %v1875, %v1948
      %1950 = vdwg.mxu0
      %s1951 = scalar_lea.vmem %s10, 16
      %v1952 = vld [vmem:[%s1951] sm:$0xff]
      %1953 = vrot.lane.b32.xlu0 %v1772, 15
      %v1954 = vpop.permute.xlu0 %1953
      %1955 = vrot.lane.b32.xlu0 %v1774, 15
      %v1956 = vpop.permute.xlu0 %1955
      %1957 = vrot.lane.b32.xlu0 %v1773, 15
      %v1958 = vpop.permute.xlu0 %1957
      %1959 = vrot.lane.b32.xlu0 %v1775, 15
      %v1960 = vpop.permute.xlu0 %1959
      %v1961 = vsel %vm652, %v1954, %v1958
      %v1962 = vsel %vm652, %v1956, %v1960
      %v1963 = vsel %vm652, %v1958, %v1954
      %v1964 = vsel %vm652, %v1960, %v1956
      %v1966 = vsel %vm879, %v1952, 0
      %1968 = vmatprep.subr.mxu0 %v1961
      %1969 = vmatpush1.msra.mxu0 %v1963
      %1970 = vmatprep.subr.mxu0 %v1962
      %1971 = vmatpush1.msra.mxu0 %v1964
      %1972 = vmatprep.subr.mxu0 0.0
      %1973 = vmatpush1.msra.mxu0 0.0
      %1974 = vmatprep.subr.mxu0 0.0
      %1975 = vmatpush1.msra.mxu0 0.0
      %1976 = vmatprep.subr.mxu0 0.0
      %1977 = vmatpush1.msra.mxu0 0.0
      %1978 = vmatprep.subr.mxu0 0.0
      %1979 = vmatpush1.msra.mxu0 0.0
      %1980 = vmatprep.subr.mxu0 0.0
      %1981 = vmatpush1.msra.mxu0 0.0
      %1982 = vmatprep.subr.mxu0 0.0
      %1983 = vmatpush1.msra.mxu0 0.0
      %1984 = vmatprep.subr.mxu0 0.0
      %1985 = vmatpush1.msra.mxu0 0.0
      %1986 = vmatprep.subr.mxu0 0.0
      %1987 = vmatpush1.msra.mxu0 0.0
      %1988 = vmatprep.subr.mxu0 0.0
      %1989 = vmatpush1.msra.mxu0 0.0
      %1990 = vmatprep.subr.mxu0 0.0
      %1991 = vmatpush1.msra.mxu0 0.0
      %1992 = vmatprep.subr.mxu0 0.0
      %1993 = vmatpush1.msra.mxu0 0.0
      %1994 = vmatprep.subr.mxu0 0.0
      %1995 = vmatpush1.msra.mxu0 0.0
      %1996 = vmatprep.subr.mxu0 0.0
      %1997 = vmatpush1.msra.mxu0 0.0
      %1998 = vmatprep.subr.mxu0 0.0
      %1999 = vmatpush1.msra.mxu0 0.0
      %2000 = vmatprep.subr.mxu0 0.0
      %2001 = vmatpush1.msra.mxu0 0.0
      %2002 = vmatprep.subr.mxu0 0.0
      %2003 = vmatpush1.msra.mxu0 0.0
      %2004 = vmatprep.subr.mxu0 0.0
      %2005 = vmatpush1.msra.mxu0 0.0
      %2006 = vmatprep.subr.mxu0 0.0
      %2007 = vmatpush1.msra.mxu0 0.0
      %2008 = vmatprep.subr.mxu0 0.0
      %2009 = vmatpush1.msra.mxu0 0.0
      %2010 = vmatprep.subr.mxu0 0.0
      %2011 = vmatpush1.msra.mxu0 0.0
      %2012 = vmatprep.subr.mxu0 0.0
      %2013 = vmatpush1.msra.mxu0 0.0
      %2014 = vmatprep.subr.mxu0 0.0
      %2015 = vmatpush1.msra.mxu0 0.0
      %2016 = vmatprep.subr.mxu0 0.0
      %2017 = vmatpush1.msra.mxu0 0.0
      %2018 = vmatprep.subr.mxu0 0.0
      %2019 = vmatpush1.msra.mxu0 0.0
      %2020 = vmatprep.subr.mxu0 0.0
      %2021 = vmatpush1.msra.mxu0 0.0
      %2022 = vmatprep.subr.mxu0 0.0
      %2023 = vmatpush1.msra.mxu0 0.0
      %2024 = vmatprep.subr.mxu0 0.0
      %2025 = vmatpush1.msra.mxu0 0.0
      %2026 = vmatprep.subr.mxu0 0.0
      %2027 = vmatpush1.msra.mxu0 0.0
      %2028 = vmatprep.subr.mxu0 0.0
      %2029 = vmatpush1.msra.mxu0 0.0
      %2030 = vmatprep.subr.mxu0 0.0
      %2031 = vmatpush1.msra.mxu0 0.0
      %2032 = vmatprep.mubr.f32.mxu0 0.0
      %2033 = vmatmul.mubr.f32.gmra.mrb[0].mxu0 %v1966
      %v2034 = vpop.f32.mrb[0].mxu0
      %v2035 = vadd.f32 0.0, %v2034
      %v2036 = vpop.f32.mrb[0].mxu0
      %v2037 = vadd.f32 0.0, %v2036
      %2038 = vdwg.mxu0
      %v2039 = vadd.f32 %v1947, %v2035
      %v2040 = vadd.f32 %v1949, %v2037
      %s2041 = scalar_lea.vmem %s10, 24
      %v2042 = vld [vmem:[%s2041] sm:$0xff]
      %2043 = vrot.lane.b32.xlu0 %v1772, 1
      %v2044 = vpop.permute.xlu0 %2043
      %2045 = vrot.lane.b32.xlu0 %v1774, 1
      %v2046 = vpop.permute.xlu0 %2045
      %2047 = vrot.lane.b32.xlu0 %v1773, 1
      %v2048 = vpop.permute.xlu0 %2047
      %2049 = vrot.lane.b32.xlu0 %v1775, 1
      %v2050 = vpop.permute.xlu0 %2049
      %v2051 = vsel %vm620, %v2044, %v2048
      %v2052 = vsel %vm620, %v2046, %v2050
      %v2053 = vsel %vm620, %v2048, %v2044
      %v2054 = vsel %vm620, %v2050, %v2046
      %v2056 = vsel %vm879, %v2042, 0
      %2058 = vmatprep.subr.mxu0 %v2051
      %2059 = vmatpush1.msra.mxu0 %v2053
      %2060 = vmatprep.subr.mxu0 %v2052
      %2061 = vmatpush1.msra.mxu0 %v2054
      %2062 = vmatprep.subr.mxu0 0.0
      %2063 = vmatpush1.msra.mxu0 0.0
      %2064 = vmatprep.subr.mxu0 0.0
      %2065 = vmatpush1.msra.mxu0 0.0
      %2066 = vmatprep.subr.mxu0 0.0
      %2067 = vmatpush1.msra.mxu0 0.0
      %2068 = vmatprep.subr.mxu0 0.0
      %2069 = vmatpush1.msra.mxu0 0.0
      %2070 = vmatprep.subr.mxu0 0.0
      %2071 = vmatpush1.msra.mxu0 0.0
      %2072 = vmatprep.subr.mxu0 0.0
      %2073 = vmatpush1.msra.mxu0 0.0
      %2074 = vmatprep.subr.mxu0 0.0
      %2075 = vmatpush1.msra.mxu0 0.0
      %2076 = vmatprep.subr.mxu0 0.0
      %2077 = vmatpush1.msra.mxu0 0.0
      %2078 = vmatprep.subr.mxu0 0.0
      %2079 = vmatpush1.msra.mxu0 0.0
      %2080 = vmatprep.subr.mxu0 0.0
      %2081 = vmatpush1.msra.mxu0 0.0
      %2082 = vmatprep.subr.mxu0 0.0
      %2083 = vmatpush1.msra.mxu0 0.0
      %2084 = vmatprep.subr.mxu0 0.0
      %2085 = vmatpush1.msra.mxu0 0.0
      %2086 = vmatprep.subr.mxu0 0.0
      %2087 = vmatpush1.msra.mxu0 0.0
      %2088 = vmatprep.subr.mxu0 0.0
      %2089 = vmatpush1.msra.mxu0 0.0
      %2090 = vmatprep.subr.mxu0 0.0
      %2091 = vmatpush1.msra.mxu0 0.0
      %2092 = vmatprep.subr.mxu0 0.0
      %2093 = vmatpush1.msra.mxu0 0.0
      %2094 = vmatprep.subr.mxu0 0.0
      %2095 = vmatpush1.msra.mxu0 0.0
      %2096 = vmatprep.subr.mxu0 0.0
      %2097 = vmatpush1.msra.mxu0 0.0
      %2098 = vmatprep.subr.mxu0 0.0
      %2099 = vmatpush1.msra.mxu0 0.0
      %2100 = vmatprep.subr.mxu0 0.0
      %2101 = vmatpush1.msra.mxu0 0.0
      %2102 = vmatprep.subr.mxu0 0.0
      %2103 = vmatpush1.msra.mxu0 0.0
      %2104 = vmatprep.subr.mxu0 0.0
      %2105 = vmatpush1.msra.mxu0 0.0
      %2106 = vmatprep.subr.mxu0 0.0
      %2107 = vmatpush1.msra.mxu0 0.0
      %2108 = vmatprep.subr.mxu0 0.0
      %2109 = vmatpush1.msra.mxu0 0.0
      %2110 = vmatprep.subr.mxu0 0.0
      %2111 = vmatpush1.msra.mxu0 0.0
      %2112 = vmatprep.subr.mxu0 0.0
      %2113 = vmatpush1.msra.mxu0 0.0
      %2114 = vmatprep.subr.mxu0 0.0
      %2115 = vmatpush1.msra.mxu0 0.0
      %2116 = vmatprep.subr.mxu0 0.0
      %2117 = vmatpush1.msra.mxu0 0.0
      %2118 = vmatprep.subr.mxu0 0.0
      %2119 = vmatpush1.msra.mxu0 0.0
      %2120 = vmatprep.subr.mxu0 0.0
      %2121 = vmatpush1.msra.mxu0 0.0
      %2122 = vmatprep.mubr.f32.mxu0 0.0
      %2123 = vmatmul.mubr.f32.gmra.mrb[0].mxu0 %v2056
      %v2124 = vpop.f32.mrb[0].mxu0
      %v2125 = vadd.f32 0.0, %v2124
      %v2126 = vpop.f32.mrb[0].mxu0
      %v2127 = vadd.f32 0.0, %v2126
      %2128 = vdwg.mxu0
      %v2129 = vadd.f32 %v2039, %v2125
      %v2130 = vadd.f32 %v2040, %v2127
      %s2131 = scalar_lea.vmem %s10, 32
      %v2132 = vld [vmem:[%s2131] sm:$0xff]
      %v2134 = vsel %vm879, %v2132, 0
      %2136 = vmatprep.subr.mxu0 %v1773
      %2137 = vmatpush1.msra.mxu0 %v1772
      %2138 = vmatprep.subr.mxu0 %v1775
      %2139 = vmatpush1.msra.mxu0 %v1774
      %2140 = vmatprep.subr.mxu0 0.0
      %2141 = vmatpush1.msra.mxu0 0.0
      %2142 = vmatprep.subr.mxu0 0.0
      %2143 = vmatpush1.msra.mxu0 0.0
      %2144 = vmatprep.subr.mxu0 0.0
      %2145 = vmatpush1.msra.mxu0 0.0
      %2146 = vmatprep.subr.mxu0 0.0
      %2147 = vmatpush1.msra.mxu0 0.0
      %2148 = vmatprep.subr.mxu0 0.0
      %2149 = vmatpush1.msra.mxu0 0.0
      %2150 = vmatprep.subr.mxu0 0.0
      %2151 = vmatpush1.msra.mxu0 0.0
      %2152 = vmatprep.subr.mxu0 0.0
      %2153 = vmatpush1.msra.mxu0 0.0
      %2154 = vmatprep.subr.mxu0 0.0
      %2155 = vmatpush1.msra.mxu0 0.0
      %2156 = vmatprep.subr.mxu0 0.0
      %2157 = vmatpush1.msra.mxu0 0.0
      %2158 = vmatprep.subr.mxu0 0.0
      %2159 = vmatpush1.msra.mxu0 0.0
      %2160 = vmatprep.subr.mxu0 0.0
      %2161 = vmatpush1.msra.mxu0 0.0
      %2162 = vmatprep.subr.mxu0 0.0
      %2163 = vmatpush1.msra.mxu0 0.0
      %2164 = vmatprep.subr.mxu0 0.0
      %2165 = vmatpush1.msra.mxu0 0.0
      %2166 = vmatprep.subr.mxu0 0.0
      %2167 = vmatpush1.msra.mxu0 0.0
      %2168 = vmatprep.subr.mxu0 0.0
      %2169 = vmatpush1.msra.mxu0 0.0
      %2170 = vmatprep.subr.mxu0 0.0
      %2171 = vmatpush1.msra.mxu0 0.0
      %2172 = vmatprep.subr.mxu0 0.0
      %2173 = vmatpush1.msra.mxu0 0.0
      %2174 = vmatprep.subr.mxu0 0.0
      %2175 = vmatpush1.msra.mxu0 0.0
      %2176 = vmatprep.subr.mxu0 0.0
      %2177 = vmatpush1.msra.mxu0 0.0
      %2178 = vmatprep.subr.mxu0 0.0
      %2179 = vmatpush1.msra.mxu0 0.0
      %2180 = vmatprep.subr.mxu0 0.0
      %2181 = vmatpush1.msra.mxu0 0.0
      %2182 = vmatprep.subr.mxu0 0.0
      %2183 = vmatpush1.msra.mxu0 0.0
      %2184 = vmatprep.subr.mxu0 0.0
      %2185 = vmatpush1.msra.mxu0 0.0
      %2186 = vmatprep.subr.mxu0 0.0
      %2187 = vmatpush1.msra.mxu0 0.0
      %2188 = vmatprep.subr.mxu0 0.0
      %2189 = vmatpush1.msra.mxu0 0.0
      %2190 = vmatprep.subr.mxu0 0.0
      %2191 = vmatpush1.msra.mxu0 0.0
      %2192 = vmatprep.subr.mxu0 0.0
      %2193 = vmatpush1.msra.mxu0 0.0
      %2194 = vmatprep.subr.mxu0 0.0
      %2195 = vmatpush1.msra.mxu0 0.0
      %2196 = vmatprep.subr.mxu0 0.0
      %2197 = vmatpush1.msra.mxu0 0.0
      %2198 = vmatprep.subr.mxu0 0.0
      %2199 = vmatpush1.msra.mxu0 0.0
      %2200 = vmatprep.mubr.f32.mxu0 0.0
      %2201 = vmatmul.mubr.f32.gmra.mrb[0].mxu0 %v2134
      %v2202 = vpop.f32.mrb[0].mxu0
      %v2203 = vadd.f32 0.0, %v2202
      %v2204 = vpop.f32.mrb[0].mxu0
      %v2205 = vadd.f32 0.0, %v2204
      %2206 = vdwg.mxu0
      %v2207 = vadd.f32 %v2129, %v2203
      %v2208 = vadd.f32 %v2130, %v2205
      %s2209 = scalar_lea.vmem %s10, 40
      %v2210 = vld [vmem:[%s2209] sm:$0xff]
      %2211 = vrot.lane.b32.xlu0 %v1772, 127
      %v2212 = vpop.permute.xlu0 %2211
      %2213 = vrot.lane.b32.xlu0 %v1774, 127
      %v2214 = vpop.permute.xlu0 %2213
      %2215 = vrot.lane.b32.xlu0 %v1773, 127
      %v2216 = vpop.permute.xlu0 %2215
      %2217 = vrot.lane.b32.xlu0 %v1775, 127
      %v2218 = vpop.permute.xlu0 %2217
      %v2219 = vsel %vm680, %v2212, %v2216
      %v2220 = vsel %vm680, %v2214, %v2218
      %v2221 = vsel %vm680, %v2216, %v2212
      %v2222 = vsel %vm680, %v2218, %v2214
      %v2224 = vsel %vm879, %v2210, 0
      %2226 = vmatprep.subr.mxu0 %v2221
      %2227 = vmatpush1.msra.mxu0 %v2219
      %2228 = vmatprep.subr.mxu0 %v2222
      %2229 = vmatpush1.msra.mxu0 %v2220
      %2230 = vmatprep.subr.mxu0 0.0
      %2231 = vmatpush1.msra.mxu0 0.0
      %2232 = vmatprep.subr.mxu0 0.0
      %2233 = vmatpush1.msra.mxu0 0.0
      %2234 = vmatprep.subr.mxu0 0.0
      %2235 = vmatpush1.msra.mxu0 0.0
      %2236 = vmatprep.subr.mxu0 0.0
      %2237 = vmatpush1.msra.mxu0 0.0
      %2238 = vmatprep.subr.mxu0 0.0
      %2239 = vmatpush1.msra.mxu0 0.0
      %2240 = vmatprep.subr.mxu0 0.0
      %2241 = vmatpush1.msra.mxu0 0.0
      %2242 = vmatprep.subr.mxu0 0.0
      %2243 = vmatpush1.msra.mxu0 0.0
      %2244 = vmatprep.subr.mxu0 0.0
      %2245 = vmatpush1.msra.mxu0 0.0
      %2246 = vmatprep.subr.mxu0 0.0
      %2247 = vmatpush1.msra.mxu0 0.0
      %2248 = vmatprep.subr.mxu0 0.0
      %2249 = vmatpush1.msra.mxu0 0.0
      %2250 = vmatprep.subr.mxu0 0.0
      %2251 = vmatpush1.msra.mxu0 0.0
      %2252 = vmatprep.subr.mxu0 0.0
      %2253 = vmatpush1.msra.mxu0 0.0
      %2254 = vmatprep.subr.mxu0 0.0
      %2255 = vmatpush1.msra.mxu0 0.0
      %2256 = vmatprep.subr.mxu0 0.0
      %2257 = vmatpush1.msra.mxu0 0.0
      %2258 = vmatprep.subr.mxu0 0.0
      %2259 = vmatpush1.msra.mxu0 0.0
      %2260 = vmatprep.subr.mxu0 0.0
      %2261 = vmatpush1.msra.mxu0 0.0
      %2262 = vmatprep.subr.mxu0 0.0
      %2263 = vmatpush1.msra.mxu0 0.0
      %2264 = vmatprep.subr.mxu0 0.0
      %2265 = vmatpush1.msra.mxu0 0.0
      %2266 = vmatprep.subr.mxu0 0.0
      %2267 = vmatpush1.msra.mxu0 0.0
      %2268 = vmatprep.subr.mxu0 0.0
      %2269 = vmatpush1.msra.mxu0 0.0
      %2270 = vmatprep.subr.mxu0 0.0
      %2271 = vmatpush1.msra.mxu0 0.0
      %2272 = vmatprep.subr.mxu0 0.0
      %2273 = vmatpush1.msra.mxu0 0.0
      %2274 = vmatprep.subr.mxu0 0.0
      %2275 = vmatpush1.msra.mxu0 0.0
      %2276 = vmatprep.subr.mxu0 0.0
      %2277 = vmatpush1.msra.mxu0 0.0
      %2278 = vmatprep.subr.mxu0 0.0
      %2279 = vmatpush1.msra.mxu0 0.0
      %2280 = vmatprep.subr.mxu0 0.0
      %2281 = vmatpush1.msra.mxu0 0.0
      %2282 = vmatprep.subr.mxu0 0.0
      %2283 = vmatpush1.msra.mxu0 0.0
      %2284 = vmatprep.subr.mxu0 0.0
      %2285 = vmatpush1.msra.mxu0 0.0
      %2286 = vmatprep.subr.mxu0 0.0
      %2287 = vmatpush1.msra.mxu0 0.0
      %2288 = vmatprep.subr.mxu0 0.0
      %2289 = vmatpush1.msra.mxu0 0.0
      %2290 = vmatprep.mubr.f32.mxu0 0.0
      %2291 = vmatmul.mubr.f32.gmra.mrb[0].mxu0 %v2224
      %v2292 = vpop.f32.mrb[0].mxu0
      %v2293 = vadd.f32 0.0, %v2292
      %v2294 = vpop.f32.mrb[0].mxu0
      %v2295 = vadd.f32 0.0, %v2294
      %2296 = vdwg.mxu0
      %v2297 = vadd.f32 %v2207, %v2293
      %v2298 = vadd.f32 %v2208, %v2295
      %s2299 = scalar_lea.vmem %s10, 48
      %v2300 = vld [vmem:[%s2299] sm:$0xff]
      %2301 = vrot.lane.b32.xlu0 %v1772, 113
      %v2302 = vpop.permute.xlu0 %2301
      %2303 = vrot.lane.b32.xlu0 %v1774, 113
      %v2304 = vpop.permute.xlu0 %2303
      %2305 = vrot.lane.b32.xlu0 %v1773, 113
      %v2306 = vpop.permute.xlu0 %2305
      %2307 = vrot.lane.b32.xlu0 %v1775, 113
      %v2308 = vpop.permute.xlu0 %2307
      %v2309 = vsel %vm592, %v2302, %v2306
      %v2310 = vsel %vm592, %v2304, %v2308
      %v2311 = vsel %vm592, %v2306, %v2302
      %v2312 = vsel %vm592, %v2308, %v2304
      %v2314 = vsel %vm879, %v2300, 0
      %2316 = vmatprep.subr.mxu0 %v2311
      %2317 = vmatpush1.msra.mxu0 %v2309
      %2318 = vmatprep.subr.mxu0 %v2312
      %2319 = vmatpush1.msra.mxu0 %v2310
      %2320 = vmatprep.subr.mxu0 0.0
      %2321 = vmatpush1.msra.mxu0 0.0
      %2322 = vmatprep.subr.mxu0 0.0
      %2323 = vmatpush1.msra.mxu0 0.0
      %2324 = vmatprep.subr.mxu0 0.0
      %2325 = vmatpush1.msra.mxu0 0.0
      %2326 = vmatprep.subr.mxu0 0.0
      %2327 = vmatpush1.msra.mxu0 0.0
      %2328 = vmatprep.subr.mxu0 0.0
      %2329 = vmatpush1.msra.mxu0 0.0
      %2330 = vmatprep.subr.mxu0 0.0
      %2331 = vmatpush1.msra.mxu0 0.0
      %2332 = vmatprep.subr.mxu0 0.0
      %2333 = vmatpush1.msra.mxu0 0.0
      %2334 = vmatprep.subr.mxu0 0.0
      %2335 = vmatpush1.msra.mxu0 0.0
      %2336 = vmatprep.subr.mxu0 0.0
      %2337 = vmatpush1.msra.mxu0 0.0
      %2338 = vmatprep.subr.mxu0 0.0
      %2339 = vmatpush1.msra.mxu0 0.0
      %2340 = vmatprep.subr.mxu0 0.0
      %2341 = vmatpush1.msra.mxu0 0.0
      %2342 = vmatprep.subr.mxu0 0.0
      %2343 = vmatpush1.msra.mxu0 0.0
      %2344 = vmatprep.subr.mxu0 0.0
      %2345 = vmatpush1.msra.mxu0 0.0
      %2346 = vmatprep.subr.mxu0 0.0
      %2347 = vmatpush1.msra.mxu0 0.0
      %2348 = vmatprep.subr.mxu0 0.0
      %2349 = vmatpush1.msra.mxu0 0.0
      %2350 = vmatprep.subr.mxu0 0.0
      %2351 = vmatpush1.msra.mxu0 0.0
      %2352 = vmatprep.subr.mxu0 0.0
      %2353 = vmatpush1.msra.mxu0 0.0
      %2354 = vmatprep.subr.mxu0 0.0
      %2355 = vmatpush1.msra.mxu0 0.0
      %2356 = vmatprep.subr.mxu0 0.0
      %2357 = vmatpush1.msra.mxu0 0.0
      %2358 = vmatprep.subr.mxu0 0.0
      %2359 = vmatpush1.msra.mxu0 0.0
      %2360 = vmatprep.subr.mxu0 0.0
      %2361 = vmatpush1.msra.mxu0 0.0
      %2362 = vmatprep.subr.mxu0 0.0
      %2363 = vmatpush1.msra.mxu0 0.0
      %2364 = vmatprep.subr.mxu0 0.0
      %2365 = vmatpush1.msra.mxu0 0.0
      %2366 = vmatprep.subr.mxu0 0.0
      %2367 = vmatpush1.msra.mxu0 0.0
      %2368 = vmatprep.subr.mxu0 0.0
      %2369 = vmatpush1.msra.mxu0 0.0
      %2370 = vmatprep.subr.mxu0 0.0
      %2371 = vmatpush1.msra.mxu0 0.0
      %2372 = vmatprep.subr.mxu0 0.0
      %2373 = vmatpush1.msra.mxu0 0.0
      %2374 = vmatprep.subr.mxu0 0.0
      %2375 = vmatpush1.msra.mxu0 0.0
      %2376 = vmatprep.subr.mxu0 0.0
      %2377 = vmatpush1.msra.mxu0 0.0
      %2378 = vmatprep.subr.mxu0 0.0
      %2379 = vmatpush1.msra.mxu0 0.0
      %2380 = vmatprep.mubr.f32.mxu0 0.0
      %2381 = vmatmul.mubr.f32.gmra.mrb[0].mxu0 %v2314
      %v2382 = vpop.f32.mrb[0].mxu0
      %v2383 = vadd.f32 0.0, %v2382
      %v2384 = vpop.f32.mrb[0].mxu0
      %v2385 = vadd.f32 0.0, %v2384
      %2386 = vdwg.mxu0
      %v2387 = vadd.f32 %v2297, %v2383
      %v2388 = vadd.f32 %v2298, %v2385
      %s2389 = scalar_lea.vmem %s10, 56
      %v2390 = vld [vmem:[%s2389] sm:$0xff]
      %2391 = vrot.lane.b32.xlu0 %v1772, 112
      %v2392 = vpop.permute.xlu0 %2391
      %2393 = vrot.lane.b32.xlu0 %v1774, 112
      %v2394 = vpop.permute.xlu0 %2393
      %2395 = vrot.lane.b32.xlu0 %v1773, 112
      %v2396 = vpop.permute.xlu0 %2395
      %2397 = vrot.lane.b32.xlu0 %v1775, 112
      %v2398 = vpop.permute.xlu0 %2397
      %v2399 = vsel %vm800, %v2392, %v2396
      %v2400 = vsel %vm800, %v2394, %v2398
      %v2401 = vsel %vm800, %v2396, %v2392
      %v2402 = vsel %vm800, %v2398, %v2394
      %v2404 = vsel %vm879, %v2390, 0
      %2406 = vmatprep.subr.mxu0 %v2401
      %2407 = vmatpush1.msra.mxu0 %v2399
      %2408 = vmatprep.subr.mxu0 %v2402
      %2409 = vmatpush1.msra.mxu0 %v2400
      %2410 = vmatprep.subr.mxu0 0.0
      %2411 = vmatpush1.msra.mxu0 0.0
      %2412 = vmatprep.subr.mxu0 0.0
      %2413 = vmatpush1.msra.mxu0 0.0
      %2414 = vmatprep.subr.mxu0 0.0
      %2415 = vmatpush1.msra.mxu0 0.0
      %2416 = vmatprep.subr.mxu0 0.0
      %2417 = vmatpush1.msra.mxu0 0.0
      %2418 = vmatprep.subr.mxu0 0.0
      %2419 = vmatpush1.msra.mxu0 0.0
      %2420 = vmatprep.subr.mxu0 0.0
      %2421 = vmatpush1.msra.mxu0 0.0
      %2422 = vmatprep.subr.mxu0 0.0
      %2423 = vmatpush1.msra.mxu0 0.0
      %2424 = vmatprep.subr.mxu0 0.0
      %2425 = vmatpush1.msra.mxu0 0.0
      %2426 = vmatprep.subr.mxu0 0.0
      %2427 = vmatpush1.msra.mxu0 0.0
      %2428 = vmatprep.subr.mxu0 0.0
      %2429 = vmatpush1.msra.mxu0 0.0
      %2430 = vmatprep.subr.mxu0 0.0
      %2431 = vmatpush1.msra.mxu0 0.0
      %2432 = vmatprep.subr.mxu0 0.0
      %2433 = vmatpush1.msra.mxu0 0.0
      %2434 = vmatprep.subr.mxu0 0.0
      %2435 = vmatpush1.msra.mxu0 0.0
      %2436 = vmatprep.subr.mxu0 0.0
      %2437 = vmatpush1.msra.mxu0 0.0
      %2438 = vmatprep.subr.mxu0 0.0
      %2439 = vmatpush1.msra.mxu0 0.0
      %2440 = vmatprep.subr.mxu0 0.0
      %2441 = vmatpush1.msra.mxu0 0.0
      %2442 = vmatprep.subr.mxu0 0.0
      %2443 = vmatpush1.msra.mxu0 0.0
      %2444 = vmatprep.subr.mxu0 0.0
      %2445 = vmatpush1.msra.mxu0 0.0
      %2446 = vmatprep.subr.mxu0 0.0
      %2447 = vmatpush1.msra.mxu0 0.0
      %2448 = vmatprep.subr.mxu0 0.0
      %2449 = vmatpush1.msra.mxu0 0.0
      %2450 = vmatprep.subr.mxu0 0.0
      %2451 = vmatpush1.msra.mxu0 0.0
      %2452 = vmatprep.subr.mxu0 0.0
      %2453 = vmatpush1.msra.mxu0 0.0
      %2454 = vmatprep.subr.mxu0 0.0
      %2455 = vmatpush1.msra.mxu0 0.0
      %2456 = vmatprep.subr.mxu0 0.0
      %2457 = vmatpush1.msra.mxu0 0.0
      %2458 = vmatprep.subr.mxu0 0.0
      %2459 = vmatpush1.msra.mxu0 0.0
      %2460 = vmatprep.subr.mxu0 0.0
      %2461 = vmatpush1.msra.mxu0 0.0
      %2462 = vmatprep.subr.mxu0 0.0
      %2463 = vmatpush1.msra.mxu0 0.0
      %2464 = vmatprep.subr.mxu0 0.0
      %2465 = vmatpush1.msra.mxu0 0.0
      %2466 = vmatprep.subr.mxu0 0.0
      %2467 = vmatpush1.msra.mxu0 0.0
      %2468 = vmatprep.subr.mxu0 0.0
      %2469 = vmatpush1.msra.mxu0 0.0
      %2470 = vmatprep.mubr.f32.mxu0 0.0
      %2471 = vmatmul.mubr.f32.gmra.mrb[0].mxu0 %v2404
      %v2472 = vpop.f32.mrb[0].mxu0
      %v2473 = vadd.f32 0.0, %v2472
      %v2474 = vpop.f32.mrb[0].mxu0
      %v2475 = vadd.f32 0.0, %v2474
      %2476 = vdwg.mxu0
      %v2477 = vadd.f32 %v2387, %v2473
      %v2478 = vadd.f32 %v2388, %v2475
      %s2479 = scalar_lea.vmem %s10, 64
      %v2480 = vld [vmem:[%s2479] sm:$0xff]
      %2481 = vrot.lane.b32.xlu0 %v1772, 111
      %v2482 = vpop.permute.xlu0 %2481
      %2483 = vrot.lane.b32.xlu0 %v1774, 111
      %v2484 = vpop.permute.xlu0 %2483
      %2485 = vrot.lane.b32.xlu0 %v1773, 111
      %v2486 = vpop.permute.xlu0 %2485
      %2487 = vrot.lane.b32.xlu0 %v1775, 111
      %v2488 = vpop.permute.xlu0 %2487
      %v2489 = vsel %vm817, %v2482, %v2486
      %v2490 = vsel %vm817, %v2484, %v2488
      %v2491 = vsel %vm817, %v2486, %v2482
      %v2492 = vsel %vm817, %v2488, %v2484
      %v2494 = vsel %vm879, %v2480, 0
      %2496 = vmatprep.subr.mxu0 %v2491
      %2497 = vmatpush1.msra.mxu0 %v2489
      %2498 = vmatprep.subr.mxu0 %v2492
      %2499 = vmatpush1.msra.mxu0 %v2490
      %2500 = vmatprep.subr.mxu0 0.0
      %2501 = vmatpush1.msra.mxu0 0.0
      %2502 = vmatprep.subr.mxu0 0.0
      %2503 = vmatpush1.msra.mxu0 0.0
      %2504 = vmatprep.subr.mxu0 0.0
      %2505 = vmatpush1.msra.mxu0 0.0
      %2506 = vmatprep.subr.mxu0 0.0
      %2507 = vmatpush1.msra.mxu0 0.0
      %2508 = vmatprep.subr.mxu0 0.0
      %2509 = vmatpush1.msra.mxu0 0.0
      %2510 = vmatprep.subr.mxu0 0.0
      %2511 = vmatpush1.msra.mxu0 0.0
      %2512 = vmatprep.subr.mxu0 0.0
      %2513 = vmatpush1.msra.mxu0 0.0
      %2514 = vmatprep.subr.mxu0 0.0
      %2515 = vmatpush1.msra.mxu0 0.0
      %2516 = vmatprep.subr.mxu0 0.0
      %2517 = vmatpush1.msra.mxu0 0.0
      %2518 = vmatprep.subr.mxu0 0.0
      %2519 = vmatpush1.msra.mxu0 0.0
      %2520 = vmatprep.subr.mxu0 0.0
      %2521 = vmatpush1.msra.mxu0 0.0
      %2522 = vmatprep.subr.mxu0 0.0
      %2523 = vmatpush1.msra.mxu0 0.0
      %2524 = vmatprep.subr.mxu0 0.0
      %2525 = vmatpush1.msra.mxu0 0.0
      %2526 = vmatprep.subr.mxu0 0.0
      %2527 = vmatpush1.msra.mxu0 0.0
      %2528 = vmatprep.subr.mxu0 0.0
      %2529 = vmatpush1.msra.mxu0 0.0
      %2530 = vmatprep.subr.mxu0 0.0
      %2531 = vmatpush1.msra.mxu0 0.0
      %2532 = vmatprep.subr.mxu0 0.0
      %2533 = vmatpush1.msra.mxu0 0.0
      %2534 = vmatprep.subr.mxu0 0.0
      %2535 = vmatpush1.msra.mxu0 0.0
      %2536 = vmatprep.subr.mxu0 0.0
      %2537 = vmatpush1.msra.mxu0 0.0
      %2538 = vmatprep.subr.mxu0 0.0
      %2539 = vmatpush1.msra.mxu0 0.0
      %2540 = vmatprep.subr.mxu0 0.0
      %2541 = vmatpush1.msra.mxu0 0.0
      %2542 = vmatprep.subr.mxu0 0.0
      %2543 = vmatpush1.msra.mxu0 0.0
      %2544 = vmatprep.subr.mxu0 0.0
      %2545 = vmatpush1.msra.mxu0 0.0
      %2546 = vmatprep.subr.mxu0 0.0
      %2547 = vmatpush1.msra.mxu0 0.0
      %2548 = vmatprep.subr.mxu0 0.0
      %2549 = vmatpush1.msra.mxu0 0.0
      %2550 = vmatprep.subr.mxu0 0.0
      %2551 = vmatpush1.msra.mxu0 0.0
      %2552 = vmatprep.subr.mxu0 0.0
      %2553 = vmatpush1.msra.mxu0 0.0
      %2554 = vmatprep.subr.mxu0 0.0
      %2555 = vmatpush1.msra.mxu0 0.0
      %2556 = vmatprep.subr.mxu0 0.0
      %2557 = vmatpush1.msra.mxu0 0.0
      %2558 = vmatprep.subr.mxu0 0.0
      %2559 = vmatpush1.msra.mxu0 0.0
      %2560 = vmatprep.mubr.f32.mxu0 0.0
      %2561 = vmatmul.mubr.f32.gmra.mrb[0].mxu0 %v2494
      %v2562 = vpop.f32.mrb[0].mxu0
      %v2563 = vadd.f32 0.0, %v2562
      %v2564 = vpop.f32.mrb[0].mxu0
      %v2565 = vadd.f32 0.0, %v2564
      %2566 = vdwg.mxu0
      %v2567 = vadd.f32 %v2477, %v2563
      %v2568 = vadd.f32 %v2478, %v2565
      %v2569 = vld [vmem:[%s535] sm:$0xff]
      %2571 = vset.pattern.permute.xlu0 0
      %2572 = vperm.xlu0 %2571, %v2569
      %v2573 = vpop.permute.xlu0 %2572
      %v2575 = vmul.f32 %v2567, %v2573
      %v2576 = vmul.f32 %v2568, %v2573
      %v2577 = vld [vmem:[%s11] sm:$0xff]
      %2579 = vset.pattern.permute.xlu0 0
      %2580 = vperm.xlu0 %2579, %v2577
      %v2581 = vpop.permute.xlu0 %2580
      %v2583 = vadd.f32 %v2575, %v2581
      %v2584 = vadd.f32 %v2576, %v2581
      %vm2585 = vcmp.ge.f32.partialorder %v2583, 0.0
      %vm2586 = vcmp.ge.f32.partialorder %v2584, 0.0
      %v2587 = vmul.f32 %v2583, 0.2
      %v2588 = vmul.f32 %v2584, 0.2
      %v2589 = vsel %vm2585, %v2583, %v2587
      %v2590 = vsel %vm2586, %v2584, %v2588
      %v2591 = vmul.f32 %v2589, 1.4142135
      %v2592 = vmul.f32 %v2590, 1.4142135
      %v2594 = vlaneseq
      %v2595 = vshrl.u32 %v2594, 7
      %v2596 = vsub.s32 0, %v2595
      %v2597 = vrot.slane %v557, %v2596
      %v2598 = vlaneseq
      %v2599 = vshrl.u32 %v2598, 7
      %v2600 = vsub.s32 1, %v2599
      %v2601 = vrot.slane %v557, %v2600
      %v2604 = vmul.f32 %v2591, %v2597
      %v2605 = vmul.f32 %v2592, %v2601
      %2606 = vst [vmem:[#allocation2] sm:$0xff] %v2604
      %2607 = vst [vmem:[#allocation2 + $0x8] sm:$0xff] %v2605
      %s2608 = scalar_lea.vmem %s12, 16
      %v2609 = vld [vmem:[%s2608] ss:$8 sm:$0x3]
      %s2610 = scalar_lea.vmem %s2608, 1
      %v2611 = vld [vmem:[%s2610] ss:$8 sm:$0x3]
      %s2612 = scalar_lea.vmem %s2608, 2
      %v2613 = vld [vmem:[%s2612] ss:$8 sm:$0x3]
      %s2614 = scalar_lea.vmem %s2608, 3
      %v2615 = vld [vmem:[%s2614] ss:$8 sm:$0x3]
      %s2616 = scalar_lea.vmem %s2608, 4
      %v2617 = vld [vmem:[%s2616] ss:$8 sm:$0x3]
      %v2618 = vsub.f32 1.0, %v2609
      %v2619 = vsub.f32 1.0, %v2611
      %v2620 = vsub.f32 1.0, %v2613
      %v2621 = vsub.f32 1.0, %v2615
      %v2622 = vld [vmem:[#allocation2] sm:$0xff]
      %v2623 = vld [vmem:[#allocation2 + $0x8] sm:$0xff]
      %v2624 = vld [vmem:[#allocation2 + $0x10] sm:$0xff]
      %v2625 = vld [vmem:[#allocation2 + $0x18] sm:$0xff]
      %s2626 = scalar_lea.vmem %s520, 16
      %v2627 = vld [vmem:[%s2626] sm:$0xff]
      %v2628 = vld [vmem:[%s2626 + $0x8] sm:$0xff]
      %2630 = vset.pattern.permute.xlu0 0
      %2631 = vperm.xlu0 %2630, %v2627
      %v2632 = vpop.permute.xlu0 %2631
      %2635 = vset.pattern.permute.xlu0 0
      %2636 = vperm.xlu0 %2635, %v2628
      %v2637 = vpop.permute.xlu0 %2636
      %v2639 = vmul.f32 %v2622, %v2632
      %v2640 = vmul.f32 %v2623, %v2632
      %v2641 = vmul.f32 %v2624, %v2637
      %v2642 = vmul.f32 %v2625, %v2637
      %2643 = vrot.lane.b32.xlu0 %v2639, 115
      %v2644 = vpop.permute.xlu0 %2643
      %2645 = vrot.lane.b32.xlu0 %v2641, 115
      %v2646 = vpop.permute.xlu0 %2645
      %2647 = vrot.lane.b32.xlu0 %v2640, 115
      %v2648 = vpop.permute.xlu0 %2647
      %2649 = vrot.lane.b32.xlu0 %v2642, 115
      %v2650 = vpop.permute.xlu0 %2649
      %vm2651 = vcmp.lt.s32.totalorder %v591, 115
      %v2652 = vsel %vm2651, %v2644, %v2648
      %v2653 = vsel %vm2651, %v2646, %v2650
      %v2654 = vsel %vm2651, %v2648, %v2644
      %v2655 = vsel %vm2651, %v2650, %v2646
      %v2657 = vlaneseq
      %v2658 = vshrl.u32 %v2657, 7
      %v2659 = vsub.s32 0, %v2658
      %v2660 = vrot.slane %v2609, %v2659
      %v2661 = vlaneseq
      %v2662 = vshrl.u32 %v2661, 7
      %v2663 = vsub.s32 1, %v2662
      %v2664 = vrot.slane %v2609, %v2663
      %v2667 = vmul.f32 %v2660, %v2652
      %v2668 = vmul.f32 %v2664, %v2654
      %v2669 = vmul.f32 %v2660, %v2653
      %v2670 = vmul.f32 %v2664, %v2655
      %2671 = vrot.lane.b32.xlu0 %v2639, 1
      %v2672 = vpop.permute.xlu0 %2671
      %2673 = vrot.lane.b32.xlu0 %v2641, 1
      %v2674 = vpop.permute.xlu0 %2673
      %2675 = vrot.lane.b32.xlu0 %v2640, 1
      %v2676 = vpop.permute.xlu0 %2675
      %2677 = vrot.lane.b32.xlu0 %v2642, 1
      %v2678 = vpop.permute.xlu0 %2677
      %v2679 = vsel %vm620, %v2672, %v2676
      %v2680 = vsel %vm620, %v2674, %v2678
      %v2681 = vsel %vm620, %v2676, %v2672
      %v2682 = vsel %vm620, %v2678, %v2674
      %v2684 = vlaneseq
      %v2685 = vshrl.u32 %v2684, 7
      %v2686 = vsub.s32 0, %v2685
      %v2687 = vrot.slane %v2618, %v2686
      %v2688 = vlaneseq
      %v2689 = vshrl.u32 %v2688, 7
      %v2690 = vsub.s32 1, %v2689
      %v2691 = vrot.slane %v2618, %v2690
      %v2694 = vmul.f32 %v2687, %v2681
      %v2695 = vmul.f32 %v2691, %v2679
      %v2696 = vmul.f32 %v2687, %v2682
      %v2697 = vmul.f32 %v2691, %v2680
      %v2698 = vadd.f32 %v2667, %v2694
      %v2699 = vadd.f32 %v2668, %v2695
      %v2700 = vadd.f32 %v2669, %v2696
      %v2701 = vadd.f32 %v2670, %v2697
      %2702 = vrot.lane.b32.xlu0 %v2639, 13
      %v2703 = vpop.permute.xlu0 %2702
      %2704 = vrot.lane.b32.xlu0 %v2641, 13
      %v2705 = vpop.permute.xlu0 %2704
      %2706 = vrot.lane.b32.xlu0 %v2640, 13
      %v2707 = vpop.permute.xlu0 %2706
      %2708 = vrot.lane.b32.xlu0 %v2642, 13
      %v2709 = vpop.permute.xlu0 %2708
      %vm2710 = vcmp.lt.s32.totalorder %v591, 13
      %v2711 = vsel %vm2710, %v2703, %v2707
      %v2712 = vsel %vm2710, %v2705, %v2709
      %v2713 = vsel %vm2710, %v2707, %v2703
      %v2714 = vsel %vm2710, %v2709, %v2705
      %v2716 = vlaneseq
      %v2717 = vshrl.u32 %v2716, 7
      %v2718 = vsub.s32 0, %v2717
      %v2719 = vrot.slane %v2611, %v2718
      %v2720 = vlaneseq
      %v2721 = vshrl.u32 %v2720, 7
      %v2722 = vsub.s32 1, %v2721
      %v2723 = vrot.slane %v2611, %v2722
      %v2726 = vmul.f32 %v2719, %v2713
      %v2727 = vmul.f32 %v2723, %v2711
      %v2728 = vmul.f32 %v2719, %v2714
      %v2729 = vmul.f32 %v2723, %v2712
      %2730 = vrot.lane.b32.xlu0 %v2639, 127
      %v2731 = vpop.permute.xlu0 %2730
      %2732 = vrot.lane.b32.xlu0 %v2641, 127
      %v2733 = vpop.permute.xlu0 %2732
      %2734 = vrot.lane.b32.xlu0 %v2640, 127
      %v2735 = vpop.permute.xlu0 %2734
      %2736 = vrot.lane.b32.xlu0 %v2642, 127
      %v2737 = vpop.permute.xlu0 %2736
      %v2738 = vsel %vm680, %v2731, %v2735
      %v2739 = vsel %vm680, %v2733, %v2737
      %v2740 = vsel %vm680, %v2735, %v2731
      %v2741 = vsel %vm680, %v2737, %v2733
      %v2743 = vlaneseq
      %v2744 = vshrl.u32 %v2743, 7
      %v2745 = vsub.s32 0, %v2744
      %v2746 = vrot.slane %v2619, %v2745
      %v2747 = vlaneseq
      %v2748 = vshrl.u32 %v2747, 7
      %v2749 = vsub.s32 1, %v2748
      %v2750 = vrot.slane %v2619, %v2749
      %v2753 = vmul.f32 %v2746, %v2738
      %v2754 = vmul.f32 %v2750, %v2740
      %v2755 = vmul.f32 %v2746, %v2739
      %v2756 = vmul.f32 %v2750, %v2741
      %v2757 = vadd.f32 %v2726, %v2753
      %v2758 = vadd.f32 %v2727, %v2754
      %v2759 = vadd.f32 %v2728, %v2755
      %v2760 = vadd.f32 %v2729, %v2756
      %2761 = vrot.lane.b32.xlu0 %v2639, 3
      %v2762 = vpop.permute.xlu0 %2761
      %2763 = vrot.lane.b32.xlu0 %v2641, 3
      %v2764 = vpop.permute.xlu0 %2763
      %2765 = vrot.lane.b32.xlu0 %v2640, 3
      %v2766 = vpop.permute.xlu0 %2765
      %2767 = vrot.lane.b32.xlu0 %v2642, 3
      %v2768 = vpop.permute.xlu0 %2767
      %vm2769 = vcmp.lt.s32.totalorder %v591, 3
      %v2770 = vsel %vm2769, %v2762, %v2766
      %v2771 = vsel %vm2769, %v2764, %v2768
      %v2772 = vsel %vm2769, %v2766, %v2762
      %v2773 = vsel %vm2769, %v2768, %v2764
      %v2774 = vmul.f32 %v2660, %v2772
      %v2775 = vmul.f32 %v2664, %v2770
      %v2776 = vmul.f32 %v2660, %v2773
      %v2777 = vmul.f32 %v2664, %v2771
      %2778 = vrot.lane.b32.xlu0 %v2639, 17
      %v2779 = vpop.permute.xlu0 %2778
      %2780 = vrot.lane.b32.xlu0 %v2641, 17
      %v2781 = vpop.permute.xlu0 %2780
      %2782 = vrot.lane.b32.xlu0 %v2640, 17
      %v2783 = vpop.permute.xlu0 %2782
      %2784 = vrot.lane.b32.xlu0 %v2642, 17
      %v2785 = vpop.permute.xlu0 %2784
      %v2786 = vsel %vm716, %v2779, %v2783
      %v2787 = vsel %vm716, %v2781, %v2785
      %v2788 = vsel %vm716, %v2783, %v2779
      %v2789 = vsel %vm716, %v2785, %v2781
      %v2790 = vmul.f32 %v2687, %v2788
      %v2791 = vmul.f32 %v2691, %v2786
      %v2792 = vmul.f32 %v2687, %v2789
      %v2793 = vmul.f32 %v2691, %v2787
      %v2794 = vadd.f32 %v2774, %v2790
      %v2795 = vadd.f32 %v2775, %v2791
      %v2796 = vadd.f32 %v2776, %v2792
      %v2797 = vadd.f32 %v2777, %v2793
      %2798 = vrot.lane.b32.xlu0 %v2639, 16
      %v2799 = vpop.permute.xlu0 %2798
      %2800 = vrot.lane.b32.xlu0 %v2641, 16
      %v2801 = vpop.permute.xlu0 %2800
      %2802 = vrot.lane.b32.xlu0 %v2640, 16
      %v2803 = vpop.permute.xlu0 %2802
      %2804 = vrot.lane.b32.xlu0 %v2642, 16
      %v2805 = vpop.permute.xlu0 %2804
      %v2806 = vsel %vm737, %v2799, %v2803
      %v2807 = vsel %vm737, %v2801, %v2805
      %v2808 = vsel %vm737, %v2803, %v2799
      %v2809 = vsel %vm737, %v2805, %v2801
      %2810 = vrot.lane.b32.xlu0 %v2639, 29
      %v2811 = vpop.permute.xlu0 %2810
      %2812 = vrot.lane.b32.xlu0 %v2641, 29
      %v2813 = vpop.permute.xlu0 %2812
      %2814 = vrot.lane.b32.xlu0 %v2640, 29
      %v2815 = vpop.permute.xlu0 %2814
      %2816 = vrot.lane.b32.xlu0 %v2642, 29
      %v2817 = vpop.permute.xlu0 %2816
      %vm2818 = vcmp.lt.s32.totalorder %v591, 29
      %v2819 = vsel %vm2818, %v2811, %v2815
      %v2820 = vsel %vm2818, %v2813, %v2817
      %v2821 = vsel %vm2818, %v2815, %v2811
      %v2822 = vsel %vm2818, %v2817, %v2813
      %v2823 = vmul.f32 %v2719, %v2821
      %v2824 = vmul.f32 %v2723, %v2819
      %v2825 = vmul.f32 %v2719, %v2822
      %v2826 = vmul.f32 %v2723, %v2820
      %2827 = vrot.lane.b32.xlu0 %v2639, 15
      %v2828 = vpop.permute.xlu0 %2827
      %2829 = vrot.lane.b32.xlu0 %v2641, 15
      %v2830 = vpop.permute.xlu0 %2829
      %2831 = vrot.lane.b32.xlu0 %v2640, 15
      %v2832 = vpop.permute.xlu0 %2831
      %2833 = vrot.lane.b32.xlu0 %v2642, 15
      %v2834 = vpop.permute.xlu0 %2833
      %v2835 = vsel %vm652, %v2828, %v2832
      %v2836 = vsel %vm652, %v2830, %v2834
      %v2837 = vsel %vm652, %v2832, %v2828
      %v2838 = vsel %vm652, %v2834, %v2830
      %v2839 = vmul.f32 %v2746, %v2837
      %v2840 = vmul.f32 %v2750, %v2835
      %v2841 = vmul.f32 %v2746, %v2838
      %v2842 = vmul.f32 %v2750, %v2836
      %v2843 = vadd.f32 %v2823, %v2839
      %v2844 = vadd.f32 %v2824, %v2840
      %v2845 = vadd.f32 %v2825, %v2841
      %v2846 = vadd.f32 %v2826, %v2842
      %2847 = vrot.lane.b32.xlu0 %v2639, 99
      %v2848 = vpop.permute.xlu0 %2847
      %2849 = vrot.lane.b32.xlu0 %v2641, 99
      %v2850 = vpop.permute.xlu0 %2849
      %2851 = vrot.lane.b32.xlu0 %v2640, 99
      %v2852 = vpop.permute.xlu0 %2851
      %2853 = vrot.lane.b32.xlu0 %v2642, 99
      %v2854 = vpop.permute.xlu0 %2853
      %vm2855 = vcmp.lt.s32.totalorder %v591, 99
      %v2856 = vsel %vm2855, %v2848, %v2852
      %v2857 = vsel %vm2855, %v2850, %v2854
      %v2858 = vsel %vm2855, %v2852, %v2848
      %v2859 = vsel %vm2855, %v2854, %v2850
      %v2860 = vmul.f32 %v2660, %v2856
      %v2861 = vmul.f32 %v2664, %v2858
      %v2862 = vmul.f32 %v2660, %v2857
      %v2863 = vmul.f32 %v2664, %v2859
      %2864 = vrot.lane.b32.xlu0 %v2639, 113
      %v2865 = vpop.permute.xlu0 %2864
      %2866 = vrot.lane.b32.xlu0 %v2641, 113
      %v2867 = vpop.permute.xlu0 %2866
      %2868 = vrot.lane.b32.xlu0 %v2640, 113
      %v2869 = vpop.permute.xlu0 %2868
      %2870 = vrot.lane.b32.xlu0 %v2642, 113
      %v2871 = vpop.permute.xlu0 %2870
      %v2872 = vsel %vm592, %v2865, %v2869
      %v2873 = vsel %vm592, %v2867, %v2871
      %v2874 = vsel %vm592, %v2869, %v2865
      %v2875 = vsel %vm592, %v2871, %v2867
      %v2876 = vmul.f32 %v2687, %v2872
      %v2877 = vmul.f32 %v2691, %v2874
      %v2878 = vmul.f32 %v2687, %v2873
      %v2879 = vmul.f32 %v2691, %v2875
      %v2880 = vadd.f32 %v2860, %v2876
      %v2881 = vadd.f32 %v2861, %v2877
      %v2882 = vadd.f32 %v2862, %v2878
      %v2883 = vadd.f32 %v2863, %v2879
      %2884 = vrot.lane.b32.xlu0 %v2639, 112
      %v2885 = vpop.permute.xlu0 %2884
      %2886 = vrot.lane.b32.xlu0 %v2641, 112
      %v2887 = vpop.permute.xlu0 %2886
      %2888 = vrot.lane.b32.xlu0 %v2640, 112
      %v2889 = vpop.permute.xlu0 %2888
      %2890 = vrot.lane.b32.xlu0 %v2642, 112
      %v2891 = vpop.permute.xlu0 %2890
      %v2892 = vsel %vm800, %v2885, %v2889
      %v2893 = vsel %vm800, %v2887, %v2891
      %v2894 = vsel %vm800, %v2889, %v2885
      %v2895 = vsel %vm800, %v2891, %v2887
      %2896 = vrot.lane.b32.xlu0 %v2639, 125
      %v2897 = vpop.permute.xlu0 %2896
      %2898 = vrot.lane.b32.xlu0 %v2641, 125
      %v2899 = vpop.permute.xlu0 %2898
      %2900 = vrot.lane.b32.xlu0 %v2640, 125
      %v2901 = vpop.permute.xlu0 %2900
      %2902 = vrot.lane.b32.xlu0 %v2642, 125
      %v2903 = vpop.permute.xlu0 %2902
      %vm2904 = vcmp.lt.s32.totalorder %v591, 125
      %v2905 = vsel %vm2904, %v2897, %v2901
      %v2906 = vsel %vm2904, %v2899, %v2903
      %v2907 = vsel %vm2904, %v2901, %v2897
      %v2908 = vsel %vm2904, %v2903, %v2899
      %v2909 = vmul.f32 %v2719, %v2905
      %v2910 = vmul.f32 %v2723, %v2907
      %v2911 = vmul.f32 %v2719, %v2906
      %v2912 = vmul.f32 %v2723, %v2908
      %2913 = vrot.lane.b32.xlu0 %v2639, 111
      %v2914 = vpop.permute.xlu0 %2913
      %2915 = vrot.lane.b32.xlu0 %v2641, 111
      %v2916 = vpop.permute.xlu0 %2915
      %2917 = vrot.lane.b32.xlu0 %v2640, 111
      %v2918 = vpop.permute.xlu0 %2917
      %2919 = vrot.lane.b32.xlu0 %v2642, 111
      %v2920 = vpop.permute.xlu0 %2919
      %v2921 = vsel %vm817, %v2914, %v2918
      %v2922 = vsel %vm817, %v2916, %v2920
      %v2923 = vsel %vm817, %v2918, %v2914
      %v2924 = vsel %vm817, %v2920, %v2916
      %v2925 = vmul.f32 %v2746, %v2921
      %v2926 = vmul.f32 %v2750, %v2923
      %v2927 = vmul.f32 %v2746, %v2922
      %v2928 = vmul.f32 %v2750, %v2924
      %v2929 = vadd.f32 %v2909, %v2925
      %v2930 = vadd.f32 %v2910, %v2926
      %v2931 = vadd.f32 %v2911, %v2927
      %v2932 = vadd.f32 %v2912, %v2928
      %v2934 = vlaneseq
      %v2935 = vshrl.u32 %v2934, 7
      %v2936 = vsub.s32 0, %v2935
      %v2937 = vrot.slane %v2613, %v2936
      %v2938 = vlaneseq
      %v2939 = vshrl.u32 %v2938, 7
      %v2940 = vsub.s32 1, %v2939
      %v2941 = vrot.slane %v2613, %v2940
      %v2944 = vmul.f32 %v2937, %v2698
      %v2945 = vmul.f32 %v2941, %v2699
      %v2946 = vmul.f32 %v2937, %v2700
      %v2947 = vmul.f32 %v2941, %v2701
      %v2949 = vlaneseq
      %v2950 = vshrl.u32 %v2949, 7
      %v2951 = vsub.s32 0, %v2950
      %v2952 = vrot.slane %v2620, %v2951
      %v2953 = vlaneseq
      %v2954 = vshrl.u32 %v2953, 7
      %v2955 = vsub.s32 1, %v2954
      %v2956 = vrot.slane %v2620, %v2955
      %v2959 = vmul.f32 %v2952, %v2794
      %v2960 = vmul.f32 %v2956, %v2795
      %v2961 = vmul.f32 %v2952, %v2796
      %v2962 = vmul.f32 %v2956, %v2797
      %v2963 = vadd.f32 %v2944, %v2959
      %v2964 = vadd.f32 %v2945, %v2960
      %v2965 = vadd.f32 %v2946, %v2961
      %v2966 = vadd.f32 %v2947, %v2962
      %s2967 = scalar_lea.vmem %s6, 72
      %v2968 = vld [vmem:[%s2967] sm:$0xff]
      %v2969 = vmul.f32 %v2937, %v2639
      %v2970 = vmul.f32 %v2941, %v2640
      %v2971 = vmul.f32 %v2937, %v2641
      %v2972 = vmul.f32 %v2941, %v2642
      %v2973 = vmul.f32 %v2952, %v2808
      %v2974 = vmul.f32 %v2956, %v2806
      %v2975 = vmul.f32 %v2952, %v2809
      %v2976 = vmul.f32 %v2956, %v2807
      %v2977 = vadd.f32 %v2969, %v2973
      %v2978 = vadd.f32 %v2970, %v2974
      %v2979 = vadd.f32 %v2971, %v2975
      %v2980 = vadd.f32 %v2972, %v2976
      %s2981 = scalar_lea.vmem %s6, 80
      %v2982 = vld [vmem:[%s2981] sm:$0xff]
      %v2984 = vsel %vm879, %v2982, 0
      %2986 = vmatprep.subr.mxu0 %v2978
      %2987 = vmatpush1.msra.mxu0 %v2977
      %2988 = vmatprep.subr.mxu0 %v2980
      %2989 = vmatpush1.msra.mxu0 %v2979
      %2990 = vmatprep.subr.mxu0 0.0
      %2991 = vmatpush1.msra.mxu0 0.0
      %2992 = vmatprep.subr.mxu0 0.0
      %2993 = vmatpush1.msra.mxu0 0.0
      %2994 = vmatprep.subr.mxu0 0.0
      %2995 = vmatpush1.msra.mxu0 0.0
      %2996 = vmatprep.subr.mxu0 0.0
      %2997 = vmatpush1.msra.mxu0 0.0
      %2998 = vmatprep.subr.mxu0 0.0
      %2999 = vmatpush1.msra.mxu0 0.0
      %3000 = vmatprep.subr.mxu0 0.0
      %3001 = vmatpush1.msra.mxu0 0.0
      %3002 = vmatprep.subr.mxu0 0.0
      %3003 = vmatpush1.msra.mxu0 0.0
      %3004 = vmatprep.subr.mxu0 0.0
      %3005 = vmatpush1.msra.mxu0 0.0
      %3006 = vmatprep.subr.mxu0 0.0
      %3007 = vmatpush1.msra.mxu0 0.0
      %3008 = vmatprep.subr.mxu0 0.0
      %3009 = vmatpush1.msra.mxu0 0.0
      %3010 = vmatprep.subr.mxu0 0.0
      %3011 = vmatpush1.msra.mxu0 0.0
      %3012 = vmatprep.subr.mxu0 0.0
      %3013 = vmatpush1.msra.mxu0 0.0
      %3014 = vmatprep.subr.mxu0 0.0
      %3015 = vmatpush1.msra.mxu0 0.0
      %3016 = vmatprep.subr.mxu0 0.0
      %3017 = vmatpush1.msra.mxu0 0.0
      %3018 = vmatprep.subr.mxu0 0.0
      %3019 = vmatpush1.msra.mxu0 0.0
      %3020 = vmatprep.subr.mxu0 0.0
      %3021 = vmatpush1.msra.mxu0 0.0
      %3022 = vmatprep.subr.mxu0 0.0
      %3023 = vmatpush1.msra.mxu0 0.0
      %3024 = vmatprep.subr.mxu0 0.0
      %3025 = vmatpush1.msra.mxu0 0.0
      %3026 = vmatprep.subr.mxu0 0.0
      %3027 = vmatpush1.msra.mxu0 0.0
      %3028 = vmatprep.subr.mxu0 0.0
      %3029 = vmatpush1.msra.mxu0 0.0
      %3030 = vmatprep.subr.mxu0 0.0
      %3031 = vmatpush1.msra.mxu0 0.0
      %3032 = vmatprep.subr.mxu0 0.0
      %3033 = vmatpush1.msra.mxu0 0.0
      %3034 = vmatprep.subr.mxu0 0.0
      %3035 = vmatpush1.msra.mxu0 0.0
      %3036 = vmatprep.subr.mxu0 0.0
      %3037 = vmatpush1.msra.mxu0 0.0
      %3038 = vmatprep.subr.mxu0 0.0
      %3039 = vmatpush1.msra.mxu0 0.0
      %3040 = vmatprep.subr.mxu0 0.0
      %3041 = vmatpush1.msra.mxu0 0.0
      %3042 = vmatprep.subr.mxu0 0.0
      %3043 = vmatpush1.msra.mxu0 0.0
      %3044 = vmatprep.subr.mxu0 0.0
      %3045 = vmatpush1.msra.mxu0 0.0
      %3046 = vmatprep.subr.mxu0 0.0
      %3047 = vmatpush1.msra.mxu0 0.0
      %3048 = vmatprep.subr.mxu0 0.0
      %3049 = vmatpush1.msra.mxu0 0.0
      %3050 = vmatprep.mubr.f32.mxu0 0.0
      %3051 = vmatmul.mubr.f32.gmra.mrb[0].mxu0 %v2984
      %v3052 = vpop.f32.mrb[0].mxu0
      %v3053 = vadd.f32 0.0, %v3052
      %v3054 = vpop.f32.mrb[0].mxu0
      %v3055 = vadd.f32 0.0, %v3054
      %3056 = vdwg.mxu0
      %v3058 = vsel %vm879, %v2968, 0
      %3060 = vmatprep.subr.mxu0 %v2964
      %3061 = vmatpush1.msra.mxu0 %v2963
      %3062 = vmatprep.subr.mxu0 %v2966
      %3063 = vmatpush1.msra.mxu0 %v2965
      %3064 = vmatprep.subr.mxu0 0.0
      %3065 = vmatpush1.msra.mxu0 0.0
      %3066 = vmatprep.subr.mxu0 0.0
      %3067 = vmatpush1.msra.mxu0 0.0
      %3068 = vmatprep.subr.mxu0 0.0
      %3069 = vmatpush1.msra.mxu0 0.0
      %3070 = vmatprep.subr.mxu0 0.0
      %3071 = vmatpush1.msra.mxu0 0.0
      %3072 = vmatprep.subr.mxu0 0.0
      %3073 = vmatpush1.msra.mxu0 0.0
      %3074 = vmatprep.subr.mxu0 0.0
      %3075 = vmatpush1.msra.mxu0 0.0
      %3076 = vmatprep.subr.mxu0 0.0
      %3077 = vmatpush1.msra.mxu0 0.0
      %3078 = vmatprep.subr.mxu0 0.0
      %3079 = vmatpush1.msra.mxu0 0.0
      %3080 = vmatprep.subr.mxu0 0.0
      %3081 = vmatpush1.msra.mxu0 0.0
      %3082 = vmatprep.subr.mxu0 0.0
      %3083 = vmatpush1.msra.mxu0 0.0
      %3084 = vmatprep.subr.mxu0 0.0
      %3085 = vmatpush1.msra.mxu0 0.0
      %3086 = vmatprep.subr.mxu0 0.0
      %3087 = vmatpush1.msra.mxu0 0.0
      %3088 = vmatprep.subr.mxu0 0.0
      %3089 = vmatpush1.msra.mxu0 0.0
      %3090 = vmatprep.subr.mxu0 0.0
      %3091 = vmatpush1.msra.mxu0 0.0
      %3092 = vmatprep.subr.mxu0 0.0
      %3093 = vmatpush1.msra.mxu0 0.0
      %3094 = vmatprep.subr.mxu0 0.0
      %3095 = vmatpush1.msra.mxu0 0.0
      %3096 = vmatprep.subr.mxu0 0.0
      %3097 = vmatpush1.msra.mxu0 0.0
      %3098 = vmatprep.subr.mxu0 0.0
      %3099 = vmatpush1.msra.mxu0 0.0
      %3100 = vmatprep.subr.mxu0 0.0
      %3101 = vmatpush1.msra.mxu0 0.0
      %3102 = vmatprep.subr.mxu0 0.0
      %3103 = vmatpush1.msra.mxu0 0.0
      %3104 = vmatprep.subr.mxu0 0.0
      %3105 = vmatpush1.msra.mxu0 0.0
      %3106 = vmatprep.subr.mxu0 0.0
      %3107 = vmatpush1.msra.mxu0 0.0
      %3108 = vmatprep.subr.mxu0 0.0
      %3109 = vmatpush1.msra.mxu0 0.0
      %3110 = vmatprep.subr.mxu0 0.0
      %3111 = vmatpush1.msra.mxu0 0.0
      %3112 = vmatprep.subr.mxu0 0.0
      %3113 = vmatpush1.msra.mxu0 0.0
      %3114 = vmatprep.subr.mxu0 0.0
      %3115 = vmatpush1.msra.mxu0 0.0
      %3116 = vmatprep.subr.mxu0 0.0
      %3117 = vmatpush1.msra.mxu0 0.0
      %3118 = vmatprep.subr.mxu0 0.0
      %3119 = vmatpush1.msra.mxu0 0.0
      %3120 = vmatprep.subr.mxu0 0.0
      %3121 = vmatpush1.msra.mxu0 0.0
      %3122 = vmatprep.subr.mxu0 0.0
      %3123 = vmatpush1.msra.mxu0 0.0
      %3124 = vmatprep.mubr.f32.mxu0 0.0
      %3125 = vmatmul.mubr.f32.gmra.mrb[0].mxu0 %v3058
      %v3126 = vpop.f32.mrb[0].mxu0
      %v3127 = vadd.f32 %v3053, %v3126
      %v3128 = vpop.f32.mrb[0].mxu0
      %v3129 = vadd.f32 %v3055, %v3128
      %3130 = vdwg.mxu0
      %v3131 = vmul.f32 %v2937, %v2757
      %v3132 = vmul.f32 %v2941, %v2758
      %v3133 = vmul.f32 %v2937, %v2759
      %v3134 = vmul.f32 %v2941, %v2760
      %v3135 = vmul.f32 %v2952, %v2843
      %v3136 = vmul.f32 %v2956, %v2844
      %v3137 = vmul.f32 %v2952, %v2845
      %v3138 = vmul.f32 %v2956, %v2846
      %v3139 = vadd.f32 %v3131, %v3135
      %v3140 = vadd.f32 %v3132, %v3136
      %v3141 = vadd.f32 %v3133, %v3137
      %v3142 = vadd.f32 %v3134, %v3138
      %s3143 = scalar_lea.vmem %s6, 88
      %v3144 = vld [vmem:[%s3143] sm:$0xff]
      %v3146 = vsel %vm879, %v3144, 0
      %3148 = vmatprep.subr.mxu0 %v3140
      %3149 = vmatpush1.msra.mxu0 %v3139
      %3150 = vmatprep.subr.mxu0 %v3142
      %3151 = vmatpush1.msra.mxu0 %v3141
      %3152 = vmatprep.subr.mxu0 0.0
      %3153 = vmatpush1.msra.mxu0 0.0
      %3154 = vmatprep.subr.mxu0 0.0
      %3155 = vmatpush1.msra.mxu0 0.0
      %3156 = vmatprep.subr.mxu0 0.0
      %3157 = vmatpush1.msra.mxu0 0.0
      %3158 = vmatprep.subr.mxu0 0.0
      %3159 = vmatpush1.msra.mxu0 0.0
      %3160 = vmatprep.subr.mxu0 0.0
      %3161 = vmatpush1.msra.mxu0 0.0
      %3162 = vmatprep.subr.mxu0 0.0
      %3163 = vmatpush1.msra.mxu0 0.0
      %3164 = vmatprep.subr.mxu0 0.0
      %3165 = vmatpush1.msra.mxu0 0.0
      %3166 = vmatprep.subr.mxu0 0.0
      %3167 = vmatpush1.msra.mxu0 0.0
      %3168 = vmatprep.subr.mxu0 0.0
      %3169 = vmatpush1.msra.mxu0 0.0
      %3170 = vmatprep.subr.mxu0 0.0
      %3171 = vmatpush1.msra.mxu0 0.0
      %3172 = vmatprep.subr.mxu0 0.0
      %3173 = vmatpush1.msra.mxu0 0.0
      %3174 = vmatprep.subr.mxu0 0.0
      %3175 = vmatpush1.msra.mxu0 0.0
      %3176 = vmatprep.subr.mxu0 0.0
      %3177 = vmatpush1.msra.mxu0 0.0
      %3178 = vmatprep.subr.mxu0 0.0
      %3179 = vmatpush1.msra.mxu0 0.0
      %3180 = vmatprep.subr.mxu0 0.0
      %3181 = vmatpush1.msra.mxu0 0.0
      %3182 = vmatprep.subr.mxu0 0.0
      %3183 = vmatpush1.msra.mxu0 0.0
      %3184 = vmatprep.subr.mxu0 0.0
      %3185 = vmatpush1.msra.mxu0 0.0
      %3186 = vmatprep.subr.mxu0 0.0
      %3187 = vmatpush1.msra.mxu0 0.0
      %3188 = vmatprep.subr.mxu0 0.0
      %3189 = vmatpush1.msra.mxu0 0.0
      %3190 = vmatprep.subr.mxu0 0.0
      %3191 = vmatpush1.msra.mxu0 0.0
      %3192 = vmatprep.subr.mxu0 0.0
      %3193 = vmatpush1.msra.mxu0 0.0
      %3194 = vmatprep.subr.mxu0 0.0
      %3195 = vmatpush1.msra.mxu0 0.0
      %3196 = vmatprep.subr.mxu0 0.0
      %3197 = vmatpush1.msra.mxu0 0.0
      %3198 = vmatprep.subr.mxu0 0.0
      %3199 = vmatpush1.msra.mxu0 0.0
      %3200 = vmatprep.subr.mxu0 0.0
      %3201 = vmatpush1.msra.mxu0 0.0
      %3202 = vmatprep.subr.mxu0 0.0
      %3203 = vmatpush1.msra.mxu0 0.0
      %3204 = vmatprep.subr.mxu0 0.0
      %3205 = vmatpush1.msra.mxu0 0.0
      %3206 = vmatprep.subr.mxu0 0.0
      %3207 = vmatpush1.msra.mxu0 0.0
      %3208 = vmatprep.subr.mxu0 0.0
      %3209 = vmatpush1.msra.mxu0 0.0
      %3210 = vmatprep.subr.mxu0 0.0
      %3211 = vmatpush1.msra.mxu0 0.0
      %3212 = vmatprep.mubr.f32.mxu0 0.0
      %3213 = vmatmul.mubr.f32.gmra.mrb[0].mxu0 %v3146
      %v3214 = vpop.f32.mrb[0].mxu0
      %v3215 = vadd.f32 0.0, %v3214
      %v3216 = vpop.f32.mrb[0].mxu0
      %v3217 = vadd.f32 0.0, %v3216
      %3218 = vdwg.mxu0
      %v3219 = vadd.f32 %v3127, %v3215
      %v3220 = vadd.f32 %v3129, %v3217
      %s3221 = scalar_lea.vmem %s6, 96
      %v3222 = vld [vmem:[%s3221] sm:$0xff]
      %v3224 = vsel %vm879, %v3222, 0
      %3226 = vmatprep.subr.mxu0 %v2699
      %3227 = vmatpush1.msra.mxu0 %v2698
      %3228 = vmatprep.subr.mxu0 %v2701
      %3229 = vmatpush1.msra.mxu0 %v2700
      %3230 = vmatprep.subr.mxu0 0.0
      %3231 = vmatpush1.msra.mxu0 0.0
      %3232 = vmatprep.subr.mxu0 0.0
      %3233 = vmatpush1.msra.mxu0 0.0
      %3234 = vmatprep.subr.mxu0 0.0
      %3235 = vmatpush1.msra.mxu0 0.0
      %3236 = vmatprep.subr.mxu0 0.0
      %3237 = vmatpush1.msra.mxu0 0.0
      %3238 = vmatprep.subr.mxu0 0.0
      %3239 = vmatpush1.msra.mxu0 0.0
      %3240 = vmatprep.subr.mxu0 0.0
      %3241 = vmatpush1.msra.mxu0 0.0
      %3242 = vmatprep.subr.mxu0 0.0
      %3243 = vmatpush1.msra.mxu0 0.0
      %3244 = vmatprep.subr.mxu0 0.0
      %3245 = vmatpush1.msra.mxu0 0.0
      %3246 = vmatprep.subr.mxu0 0.0
      %3247 = vmatpush1.msra.mxu0 0.0
      %3248 = vmatprep.subr.mxu0 0.0
      %3249 = vmatpush1.msra.mxu0 0.0
      %3250 = vmatprep.subr.mxu0 0.0
      %3251 = vmatpush1.msra.mxu0 0.0
      %3252 = vmatprep.subr.mxu0 0.0
      %3253 = vmatpush1.msra.mxu0 0.0
      %3254 = vmatprep.subr.mxu0 0.0
      %3255 = vmatpush1.msra.mxu0 0.0
      %3256 = vmatprep.subr.mxu0 0.0
      %3257 = vmatpush1.msra.mxu0 0.0
      %3258 = vmatprep.subr.mxu0 0.0
      %3259 = vmatpush1.msra.mxu0 0.0
      %3260 = vmatprep.subr.mxu0 0.0
      %3261 = vmatpush1.msra.mxu0 0.0
      %3262 = vmatprep.subr.mxu0 0.0
      %3263 = vmatpush1.msra.mxu0 0.0
      %3264 = vmatprep.subr.mxu0 0.0
      %3265 = vmatpush1.msra.mxu0 0.0
      %3266 = vmatprep.subr.mxu0 0.0
      %3267 = vmatpush1.msra.mxu0 0.0
      %3268 = vmatprep.subr.mxu0 0.0
      %3269 = vmatpush1.msra.mxu0 0.0
      %3270 = vmatprep.subr.mxu0 0.0
      %3271 = vmatpush1.msra.mxu0 0.0
      %3272 = vmatprep.subr.mxu0 0.0
      %3273 = vmatpush1.msra.mxu0 0.0
      %3274 = vmatprep.subr.mxu0 0.0
      %3275 = vmatpush1.msra.mxu0 0.0
      %3276 = vmatprep.subr.mxu0 0.0
      %3277 = vmatpush1.msra.mxu0 0.0
      %3278 = vmatprep.subr.mxu0 0.0
      %3279 = vmatpush1.msra.mxu0 0.0
      %3280 = vmatprep.subr.mxu0 0.0
      %3281 = vmatpush1.msra.mxu0 0.0
      %3282 = vmatprep.subr.mxu0 0.0
      %3283 = vmatpush1.msra.mxu0 0.0
      %3284 = vmatprep.subr.mxu0 0.0
      %3285 = vmatpush1.msra.mxu0 0.0
      %3286 = vmatprep.subr.mxu0 0.0
      %3287 = vmatpush1.msra.mxu0 0.0
      %3288 = vmatprep.subr.mxu0 0.0
      %3289 = vmatpush1.msra.mxu0 0.0
      %3290 = vmatprep.mubr.f32.mxu0 0.0
      %3291 = vmatmul.mubr.f32.gmra.mrb[0].mxu0 %v3224
      %v3292 = vpop.f32.mrb[0].mxu0
      %v3293 = vadd.f32 0.0, %v3292
      %v3294 = vpop.f32.mrb[0].mxu0
      %v3295 = vadd.f32 0.0, %v3294
      %3296 = vdwg.mxu0
      %v3297 = vadd.f32 %v3219, %v3293
      %v3298 = vadd.f32 %v3220, %v3295
      %s3299 = scalar_lea.vmem %s6, 104
      %v3300 = vld [vmem:[%s3299] sm:$0xff]
      %v3302 = vsel %vm879, %v3300, 0
      %3304 = vmatprep.subr.mxu0 %v2640
      %3305 = vmatpush1.msra.mxu0 %v2639
      %3306 = vmatprep.subr.mxu0 %v2642
      %3307 = vmatpush1.msra.mxu0 %v2641
      %3308 = vmatprep.subr.mxu0 0.0
      %3309 = vmatpush1.msra.mxu0 0.0
      %3310 = vmatprep.subr.mxu0 0.0
      %3311 = vmatpush1.msra.mxu0 0.0
      %3312 = vmatprep.subr.mxu0 0.0
      %3313 = vmatpush1.msra.mxu0 0.0
      %3314 = vmatprep.subr.mxu0 0.0
      %3315 = vmatpush1.msra.mxu0 0.0
      %3316 = vmatprep.subr.mxu0 0.0
      %3317 = vmatpush1.msra.mxu0 0.0
      %3318 = vmatprep.subr.mxu0 0.0
      %3319 = vmatpush1.msra.mxu0 0.0
      %3320 = vmatprep.subr.mxu0 0.0
      %3321 = vmatpush1.msra.mxu0 0.0
      %3322 = vmatprep.subr.mxu0 0.0
      %3323 = vmatpush1.msra.mxu0 0.0
      %3324 = vmatprep.subr.mxu0 0.0
      %3325 = vmatpush1.msra.mxu0 0.0
      %3326 = vmatprep.subr.mxu0 0.0
      %3327 = vmatpush1.msra.mxu0 0.0
      %3328 = vmatprep.subr.mxu0 0.0
      %3329 = vmatpush1.msra.mxu0 0.0
      %3330 = vmatprep.subr.mxu0 0.0
      %3331 = vmatpush1.msra.mxu0 0.0
      %3332 = vmatprep.subr.mxu0 0.0
      %3333 = vmatpush1.msra.mxu0 0.0
      %3334 = vmatprep.subr.mxu0 0.0
      %3335 = vmatpush1.msra.mxu0 0.0
      %3336 = vmatprep.subr.mxu0 0.0
      %3337 = vmatpush1.msra.mxu0 0.0
      %3338 = vmatprep.subr.mxu0 0.0
      %3339 = vmatpush1.msra.mxu0 0.0
      %3340 = vmatprep.subr.mxu0 0.0
      %3341 = vmatpush1.msra.mxu0 0.0
      %3342 = vmatprep.subr.mxu0 0.0
      %3343 = vmatpush1.msra.mxu0 0.0
      %3344 = vmatprep.subr.mxu0 0.0
      %3345 = vmatpush1.msra.mxu0 0.0
      %3346 = vmatprep.subr.mxu0 0.0
      %3347 = vmatpush1.msra.mxu0 0.0
      %3348 = vmatprep.subr.mxu0 0.0
      %3349 = vmatpush1.msra.mxu0 0.0
      %3350 = vmatprep.subr.mxu0 0.0
      %3351 = vmatpush1.msra.mxu0 0.0
      %3352 = vmatprep.subr.mxu0 0.0
      %3353 = vmatpush1.msra.mxu0 0.0
      %3354 = vmatprep.subr.mxu0 0.0
      %3355 = vmatpush1.msra.mxu0 0.0
      %3356 = vmatprep.subr.mxu0 0.0
      %3357 = vmatpush1.msra.mxu0 0.0
      %3358 = vmatprep.subr.mxu0 0.0
      %3359 = vmatpush1.msra.mxu0 0.0
      %3360 = vmatprep.subr.mxu0 0.0
      %3361 = vmatpush1.msra.mxu0 0.0
      %3362 = vmatprep.subr.mxu0 0.0
      %3363 = vmatpush1.msra.mxu0 0.0
      %3364 = vmatprep.subr.mxu0 0.0
      %3365 = vmatpush1.msra.mxu0 0.0
      %3366 = vmatprep.subr.mxu0 0.0
      %3367 = vmatpush1.msra.mxu0 0.0
      %3368 = vmatprep.mubr.f32.mxu0 0.0
      %3369 = vmatmul.mubr.f32.gmra.mrb[0].mxu0 %v3302
      %v3370 = vpop.f32.mrb[0].mxu0
      %v3371 = vadd.f32 0.0, %v3370
      %v3372 = vpop.f32.mrb[0].mxu0
      %v3373 = vadd.f32 0.0, %v3372
      %3374 = vdwg.mxu0
      %v3375 = vadd.f32 %v3297, %v3371
      %v3376 = vadd.f32 %v3298, %v3373
      %s3377 = scalar_lea.vmem %s6, 112
      %v3378 = vld [vmem:[%s3377] sm:$0xff]
      %v3380 = vsel %vm879, %v3378, 0
      %3382 = vmatprep.subr.mxu0 %v2758
      %3383 = vmatpush1.msra.mxu0 %v2757
      %3384 = vmatprep.subr.mxu0 %v2760
      %3385 = vmatpush1.msra.mxu0 %v2759
      %3386 = vmatprep.subr.mxu0 0.0
      %3387 = vmatpush1.msra.mxu0 0.0
      %3388 = vmatprep.subr.mxu0 0.0
      %3389 = vmatpush1.msra.mxu0 0.0
      %3390 = vmatprep.subr.mxu0 0.0
      %3391 = vmatpush1.msra.mxu0 0.0
      %3392 = vmatprep.subr.mxu0 0.0
      %3393 = vmatpush1.msra.mxu0 0.0
      %3394 = vmatprep.subr.mxu0 0.0
      %3395 = vmatpush1.msra.mxu0 0.0
      %3396 = vmatprep.subr.mxu0 0.0
      %3397 = vmatpush1.msra.mxu0 0.0
      %3398 = vmatprep.subr.mxu0 0.0
      %3399 = vmatpush1.msra.mxu0 0.0
      %3400 = vmatprep.subr.mxu0 0.0
      %3401 = vmatpush1.msra.mxu0 0.0
      %3402 = vmatprep.subr.mxu0 0.0
      %3403 = vmatpush1.msra.mxu0 0.0
      %3404 = vmatprep.subr.mxu0 0.0
      %3405 = vmatpush1.msra.mxu0 0.0
      %3406 = vmatprep.subr.mxu0 0.0
      %3407 = vmatpush1.msra.mxu0 0.0
      %3408 = vmatprep.subr.mxu0 0.0
      %3409 = vmatpush1.msra.mxu0 0.0
      %3410 = vmatprep.subr.mxu0 0.0
      %3411 = vmatpush1.msra.mxu0 0.0
      %3412 = vmatprep.subr.mxu0 0.0
      %3413 = vmatpush1.msra.mxu0 0.0
      %3414 = vmatprep.subr.mxu0 0.0
      %3415 = vmatpush1.msra.mxu0 0.0
      %3416 = vmatprep.subr.mxu0 0.0
      %3417 = vmatpush1.msra.mxu0 0.0
      %3418 = vmatprep.subr.mxu0 0.0
      %3419 = vmatpush1.msra.mxu0 0.0
      %3420 = vmatprep.subr.mxu0 0.0
      %3421 = vmatpush1.msra.mxu0 0.0
      %3422 = vmatprep.subr.mxu0 0.0
      %3423 = vmatpush1.msra.mxu0 0.0
      %3424 = vmatprep.subr.mxu0 0.0
      %3425 = vmatpush1.msra.mxu0 0.0
      %3426 = vmatprep.subr.mxu0 0.0
      %3427 = vmatpush1.msra.mxu0 0.0
      %3428 = vmatprep.subr.mxu0 0.0
      %3429 = vmatpush1.msra.mxu0 0.0
      %3430 = vmatprep.subr.mxu0 0.0
      %3431 = vmatpush1.msra.mxu0 0.0
      %3432 = vmatprep.subr.mxu0 0.0
      %3433 = vmatpush1.msra.mxu0 0.0
      %3434 = vmatprep.subr.mxu0 0.0
      %3435 = vmatpush1.msra.mxu0 0.0
      %3436 = vmatprep.subr.mxu0 0.0
      %3437 = vmatpush1.msra.mxu0 0.0
      %3438 = vmatprep.subr.mxu0 0.0
      %3439 = vmatpush1.msra.mxu0 0.0
      %3440 = vmatprep.subr.mxu0 0.0
      %3441 = vmatpush1.msra.mxu0 0.0
      %3442 = vmatprep.subr.mxu0 0.0
      %3443 = vmatpush1.msra.mxu0 0.0
      %3444 = vmatprep.subr.mxu0 0.0
      %3445 = vmatpush1.msra.mxu0 0.0
      %3446 = vmatprep.mubr.f32.mxu0 0.0
      %3447 = vmatmul.mubr.f32.gmra.mrb[0].mxu0 %v3380
      %v3448 = vpop.f32.mrb[0].mxu0
      %v3449 = vadd.f32 0.0, %v3448
      %v3450 = vpop.f32.mrb[0].mxu0
      %v3451 = vadd.f32 0.0, %v3450
      %3452 = vdwg.mxu0
      %v3453 = vadd.f32 %v3375, %v3449
      %v3454 = vadd.f32 %v3376, %v3451
      %v3456 = vlaneseq
      %v3457 = vshrl.u32 %v3456, 7
      %v3458 = vsub.s32 0, %v3457
      %v3459 = vrot.slane %v2615, %v3458
      %v3460 = vlaneseq
      %v3461 = vshrl.u32 %v3460, 7
      %v3462 = vsub.s32 1, %v3461
      %v3463 = vrot.slane %v2615, %v3462
      %v3466 = vmul.f32 %v3459, %v2698
      %v3467 = vmul.f32 %v3463, %v2699
      %v3468 = vmul.f32 %v3459, %v2700
      %v3469 = vmul.f32 %v3463, %v2701
      %v3471 = vlaneseq
      %v3472 = vshrl.u32 %v3471, 7
      %v3473 = vsub.s32 0, %v3472
      %v3474 = vrot.slane %v2621, %v3473
      %v3475 = vlaneseq
      %v3476 = vshrl.u32 %v3475, 7
      %v3477 = vsub.s32 1, %v3476
      %v3478 = vrot.slane %v2621, %v3477
      %v3481 = vmul.f32 %v3474, %v2880
      %v3482 = vmul.f32 %v3478, %v2881
      %v3483 = vmul.f32 %v3474, %v2882
      %v3484 = vmul.f32 %v3478, %v2883
      %v3485 = vadd.f32 %v3466, %v3481
      %v3486 = vadd.f32 %v3467, %v3482
      %v3487 = vadd.f32 %v3468, %v3483
      %v3488 = vadd.f32 %v3469, %v3484
      %s3489 = scalar_lea.vmem %s6, 120
      %v3490 = vld [vmem:[%s3489] sm:$0xff]
      %v3492 = vsel %vm879, %v3490, 0
      %3494 = vmatprep.subr.mxu0 %v3486
      %3495 = vmatpush1.msra.mxu0 %v3485
      %3496 = vmatprep.subr.mxu0 %v3488
      %3497 = vmatpush1.msra.mxu0 %v3487
      %3498 = vmatprep.subr.mxu0 0.0
      %3499 = vmatpush1.msra.mxu0 0.0
      %3500 = vmatprep.subr.mxu0 0.0
      %3501 = vmatpush1.msra.mxu0 0.0
      %3502 = vmatprep.subr.mxu0 0.0
      %3503 = vmatpush1.msra.mxu0 0.0
      %3504 = vmatprep.subr.mxu0 0.0
      %3505 = vmatpush1.msra.mxu0 0.0
      %3506 = vmatprep.subr.mxu0 0.0
      %3507 = vmatpush1.msra.mxu0 0.0
      %3508 = vmatprep.subr.mxu0 0.0
      %3509 = vmatpush1.msra.mxu0 0.0
      %3510 = vmatprep.subr.mxu0 0.0
      %3511 = vmatpush1.msra.mxu0 0.0
      %3512 = vmatprep.subr.mxu0 0.0
      %3513 = vmatpush1.msra.mxu0 0.0
      %3514 = vmatprep.subr.mxu0 0.0
      %3515 = vmatpush1.msra.mxu0 0.0
      %3516 = vmatprep.subr.mxu0 0.0
      %3517 = vmatpush1.msra.mxu0 0.0
      %3518 = vmatprep.subr.mxu0 0.0
      %3519 = vmatpush1.msra.mxu0 0.0
      %3520 = vmatprep.subr.mxu0 0.0
      %3521 = vmatpush1.msra.mxu0 0.0
      %3522 = vmatprep.subr.mxu0 0.0
      %3523 = vmatpush1.msra.mxu0 0.0
      %3524 = vmatprep.subr.mxu0 0.0
      %3525 = vmatpush1.msra.mxu0 0.0
      %3526 = vmatprep.subr.mxu0 0.0
      %3527 = vmatpush1.msra.mxu0 0.0
      %3528 = vmatprep.subr.mxu0 0.0
      %3529 = vmatpush1.msra.mxu0 0.0
      %3530 = vmatprep.subr.mxu0 0.0
      %3531 = vmatpush1.msra.mxu0 0.0
      %3532 = vmatprep.subr.mxu0 0.0
      %3533 = vmatpush1.msra.mxu0 0.0
      %3534 = vmatprep.subr.mxu0 0.0
      %3535 = vmatpush1.msra.mxu0 0.0
      %3536 = vmatprep.subr.mxu0 0.0
      %3537 = vmatpush1.msra.mxu0 0.0
      %3538 = vmatprep.subr.mxu0 0.0
      %3539 = vmatpush1.msra.mxu0 0.0
      %3540 = vmatprep.subr.mxu0 0.0
      %3541 = vmatpush1.msra.mxu0 0.0
      %3542 = vmatprep.subr.mxu0 0.0
      %3543 = vmatpush1.msra.mxu0 0.0
      %3544 = vmatprep.subr.mxu0 0.0
      %3545 = vmatpush1.msra.mxu0 0.0
      %3546 = vmatprep.subr.mxu0 0.0
      %3547 = vmatpush1.msra.mxu0 0.0
      %3548 = vmatprep.subr.mxu0 0.0
      %3549 = vmatpush1.msra.mxu0 0.0
      %3550 = vmatprep.subr.mxu0 0.0
      %3551 = vmatpush1.msra.mxu0 0.0
      %3552 = vmatprep.subr.mxu0 0.0
      %3553 = vmatpush1.msra.mxu0 0.0
      %3554 = vmatprep.subr.mxu0 0.0
      %3555 = vmatpush1.msra.mxu0 0.0
      %3556 = vmatprep.subr.mxu0 0.0
      %3557 = vmatpush1.msra.mxu0 0.0
      %3558 = vmatprep.mubr.f32.mxu0 0.0
      %3559 = vmatmul.mubr.f32.gmra.mrb[0].mxu0 %v3492
      %v3560 = vpop.f32.mrb[0].mxu0
      %v3561 = vadd.f32 0.0, %v3560
      %v3562 = vpop.f32.mrb[0].mxu0
      %v3563 = vadd.f32 0.0, %v3562
      %3564 = vdwg.mxu0
      %v3565 = vadd.f32 %v3453, %v3561
      %v3566 = vadd.f32 %v3454, %v3563
      %v3567 = vmul.f32 %v3459, %v2639
      %v3568 = vmul.f32 %v3463, %v2640
      %v3569 = vmul.f32 %v3459, %v2641
      %v3570 = vmul.f32 %v3463, %v2642
      %v3571 = vmul.f32 %v3474, %v2892
      %v3572 = vmul.f32 %v3478, %v2894
      %v3573 = vmul.f32 %v3474, %v2893
      %v3574 = vmul.f32 %v3478, %v2895
      %v3575 = vadd.f32 %v3567, %v3571
      %v3576 = vadd.f32 %v3568, %v3572
      %v3577 = vadd.f32 %v3569, %v3573
      %v3578 = vadd.f32 %v3570, %v3574
      %s3579 = scalar_lea.vmem %s6, 128
      %v3580 = vld [vmem:[%s3579] sm:$0xff]
      %v3582 = vsel %vm879, %v3580, 0
      %3584 = vmatprep.subr.mxu0 %v3576
      %3585 = vmatpush1.msra.mxu0 %v3575
      %3586 = vmatprep.subr.mxu0 %v3578
      %3587 = vmatpush1.msra.mxu0 %v3577
      %3588 = vmatprep.subr.mxu0 0.0
      %3589 = vmatpush1.msra.mxu0 0.0
      %3590 = vmatprep.subr.mxu0 0.0
      %3591 = vmatpush1.msra.mxu0 0.0
      %3592 = vmatprep.subr.mxu0 0.0
      %3593 = vmatpush1.msra.mxu0 0.0
      %3594 = vmatprep.subr.mxu0 0.0
      %3595 = vmatpush1.msra.mxu0 0.0
      %3596 = vmatprep.subr.mxu0 0.0
      %3597 = vmatpush1.msra.mxu0 0.0
      %3598 = vmatprep.subr.mxu0 0.0
      %3599 = vmatpush1.msra.mxu0 0.0
      %3600 = vmatprep.subr.mxu0 0.0
      %3601 = vmatpush1.msra.mxu0 0.0
      %3602 = vmatprep.subr.mxu0 0.0
      %3603 = vmatpush1.msra.mxu0 0.0
      %3604 = vmatprep.subr.mxu0 0.0
      %3605 = vmatpush1.msra.mxu0 0.0
      %3606 = vmatprep.subr.mxu0 0.0
      %3607 = vmatpush1.msra.mxu0 0.0
      %3608 = vmatprep.subr.mxu0 0.0
      %3609 = vmatpush1.msra.mxu0 0.0
      %3610 = vmatprep.subr.mxu0 0.0
      %3611 = vmatpush1.msra.mxu0 0.0
      %3612 = vmatprep.subr.mxu0 0.0
      %3613 = vmatpush1.msra.mxu0 0.0
      %3614 = vmatprep.subr.mxu0 0.0
      %3615 = vmatpush1.msra.mxu0 0.0
      %3616 = vmatprep.subr.mxu0 0.0
      %3617 = vmatpush1.msra.mxu0 0.0
      %3618 = vmatprep.subr.mxu0 0.0
      %3619 = vmatpush1.msra.mxu0 0.0
      %3620 = vmatprep.subr.mxu0 0.0
      %3621 = vmatpush1.msra.mxu0 0.0
      %3622 = vmatprep.subr.mxu0 0.0
      %3623 = vmatpush1.msra.mxu0 0.0
      %3624 = vmatprep.subr.mxu0 0.0
      %3625 = vmatpush1.msra.mxu0 0.0
      %3626 = vmatprep.subr.mxu0 0.0
      %3627 = vmatpush1.msra.mxu0 0.0
      %3628 = vmatprep.subr.mxu0 0.0
      %3629 = vmatpush1.msra.mxu0 0.0
      %3630 = vmatprep.subr.mxu0 0.0
      %3631 = vmatpush1.msra.mxu0 0.0
      %3632 = vmatprep.subr.mxu0 0.0
      %3633 = vmatpush1.msra.mxu0 0.0
      %3634 = vmatprep.subr.mxu0 0.0
      %3635 = vmatpush1.msra.mxu0 0.0
      %3636 = vmatprep.subr.mxu0 0.0
      %3637 = vmatpush1.msra.mxu0 0.0
      %3638 = vmatprep.subr.mxu0 0.0
      %3639 = vmatpush1.msra.mxu0 0.0
      %3640 = vmatprep.subr.mxu0 0.0
      %3641 = vmatpush1.msra.mxu0 0.0
      %3642 = vmatprep.subr.mxu0 0.0
      %3643 = vmatpush1.msra.mxu0 0.0
      %3644 = vmatprep.subr.mxu0 0.0
      %3645 = vmatpush1.msra.mxu0 0.0
      %3646 = vmatprep.subr.mxu0 0.0
      %3647 = vmatpush1.msra.mxu0 0.0
      %3648 = vmatprep.mubr.f32.mxu0 0.0
      %3649 = vmatmul.mubr.f32.gmra.mrb[0].mxu0 %v3582
      %v3650 = vpop.f32.mrb[0].mxu0
      %v3651 = vadd.f32 0.0, %v3650
      %v3652 = vpop.f32.mrb[0].mxu0
      %v3653 = vadd.f32 0.0, %v3652
      %3654 = vdwg.mxu0
      %v3655 = vadd.f32 %v3565, %v3651
      %v3656 = vadd.f32 %v3566, %v3653
      %v3657 = vmul.f32 %v3459, %v2757
      %v3658 = vmul.f32 %v3463, %v2758
      %v3659 = vmul.f32 %v3459, %v2759
      %v3660 = vmul.f32 %v3463, %v2760
      %v3661 = vmul.f32 %v3474, %v2929
      %v3662 = vmul.f32 %v3478, %v2930
      %v3663 = vmul.f32 %v3474, %v2931
      %v3664 = vmul.f32 %v3478, %v2932
      %v3665 = vadd.f32 %v3657, %v3661
      %v3666 = vadd.f32 %v3658, %v3662
      %v3667 = vadd.f32 %v3659, %v3663
      %v3668 = vadd.f32 %v3660, %v3664
      %s3669 = scalar_lea.vmem %s6, 136
      %v3670 = vld [vmem:[%s3669] sm:$0xff]
      %v3672 = vsel %vm879, %v3670, 0
      %3674 = vmatprep.subr.mxu0 %v3666
      %3675 = vmatpush1.msra.mxu0 %v3665
      %3676 = vmatprep.subr.mxu0 %v3668
      %3677 = vmatpush1.msra.mxu0 %v3667
      %3678 = vmatprep.subr.mxu0 0.0
      %3679 = vmatpush1.msra.mxu0 0.0
      %3680 = vmatprep.subr.mxu0 0.0
      %3681 = vmatpush1.msra.mxu0 0.0
      %3682 = vmatprep.subr.mxu0 0.0
      %3683 = vmatpush1.msra.mxu0 0.0
      %3684 = vmatprep.subr.mxu0 0.0
      %3685 = vmatpush1.msra.mxu0 0.0
      %3686 = vmatprep.subr.mxu0 0.0
      %3687 = vmatpush1.msra.mxu0 0.0
      %3688 = vmatprep.subr.mxu0 0.0
      %3689 = vmatpush1.msra.mxu0 0.0
      %3690 = vmatprep.subr.mxu0 0.0
      %3691 = vmatpush1.msra.mxu0 0.0
      %3692 = vmatprep.subr.mxu0 0.0
      %3693 = vmatpush1.msra.mxu0 0.0
      %3694 = vmatprep.subr.mxu0 0.0
      %3695 = vmatpush1.msra.mxu0 0.0
      %3696 = vmatprep.subr.mxu0 0.0
      %3697 = vmatpush1.msra.mxu0 0.0
      %3698 = vmatprep.subr.mxu0 0.0
      %3699 = vmatpush1.msra.mxu0 0.0
      %3700 = vmatprep.subr.mxu0 0.0
      %3701 = vmatpush1.msra.mxu0 0.0
      %3702 = vmatprep.subr.mxu0 0.0
      %3703 = vmatpush1.msra.mxu0 0.0
      %3704 = vmatprep.subr.mxu0 0.0
      %3705 = vmatpush1.msra.mxu0 0.0
      %3706 = vmatprep.subr.mxu0 0.0
      %3707 = vmatpush1.msra.mxu0 0.0
      %3708 = vmatprep.subr.mxu0 0.0
      %3709 = vmatpush1.msra.mxu0 0.0
      %3710 = vmatprep.subr.mxu0 0.0
      %3711 = vmatpush1.msra.mxu0 0.0
      %3712 = vmatprep.subr.mxu0 0.0
      %3713 = vmatpush1.msra.mxu0 0.0
      %3714 = vmatprep.subr.mxu0 0.0
      %3715 = vmatpush1.msra.mxu0 0.0
      %3716 = vmatprep.subr.mxu0 0.0
      %3717 = vmatpush1.msra.mxu0 0.0
      %3718 = vmatprep.subr.mxu0 0.0
      %3719 = vmatpush1.msra.mxu0 0.0
      %3720 = vmatprep.subr.mxu0 0.0
      %3721 = vmatpush1.msra.mxu0 0.0
      %3722 = vmatprep.subr.mxu0 0.0
      %3723 = vmatpush1.msra.mxu0 0.0
      %3724 = vmatprep.subr.mxu0 0.0
      %3725 = vmatpush1.msra.mxu0 0.0
      %3726 = vmatprep.subr.mxu0 0.0
      %3727 = vmatpush1.msra.mxu0 0.0
      %3728 = vmatprep.subr.mxu0 0.0
      %3729 = vmatpush1.msra.mxu0 0.0
      %3730 = vmatprep.subr.mxu0 0.0
      %3731 = vmatpush1.msra.mxu0 0.0
      %3732 = vmatprep.subr.mxu0 0.0
      %3733 = vmatpush1.msra.mxu0 0.0
      %3734 = vmatprep.subr.mxu0 0.0
      %3735 = vmatpush1.msra.mxu0 0.0
      %3736 = vmatprep.subr.mxu0 0.0
      %3737 = vmatpush1.msra.mxu0 0.0
      %3738 = vmatprep.mubr.f32.mxu0 0.0
      %3739 = vmatmul.mubr.f32.gmra.mrb[0].mxu0 %v3672
      %v3740 = vpop.f32.mrb[0].mxu0
      %v3741 = vadd.f32 0.0, %v3740
      %v3742 = vpop.f32.mrb[0].mxu0
      %v3743 = vadd.f32 0.0, %v3742
      %3744 = vdwg.mxu0
      %v3745 = vadd.f32 %v3655, %v3741
      %v3746 = vadd.f32 %v3656, %v3743
      %s3747 = scalar_lea.vmem %s525, 8
      %v3748 = vld [vmem:[%s3747] sm:$0xff]
      %3750 = vset.pattern.permute.xlu0 0
      %3751 = vperm.xlu0 %3750, %v3748
      %v3752 = vpop.permute.xlu0 %3751
      %v3754 = vmul.f32 %v3745, %v3752
      %v3755 = vmul.f32 %v3746, %v3752
      %s3756 = scalar_lea.vmem %s7, 8
      %v3757 = vld [vmem:[%s3756] sm:$0xff]
      %3759 = vset.pattern.permute.xlu0 0
      %3760 = vperm.xlu0 %3759, %v3757
      %v3761 = vpop.permute.xlu0 %3760
      %v3763 = vadd.f32 %v3754, %v3761
      %v3764 = vadd.f32 %v3755, %v3761
      %vm3765 = vcmp.ge.f32.partialorder %v3763, 0.0
      %vm3766 = vcmp.ge.f32.partialorder %v3764, 0.0
      %v3767 = vmul.f32 %v3763, 0.2
      %v3768 = vmul.f32 %v3764, 0.2
      %v3769 = vsel %vm3765, %v3763, %v3767
      %v3770 = vsel %vm3766, %v3764, %v3768
      %v3771 = vmul.f32 %v3769, 1.4142135
      %v3772 = vmul.f32 %v3770, 1.4142135
      %s3773 = scalar_lea.vmem %s8, 8
      %v3774 = vld [vmem:[%s3773] sm:$0xff]
      %v3776 = vsel %vm1669, %v3774, 0
      %3778 = vmatprep.subr.mxu0 %v2623
      %3779 = vmatpush1.msra.mxu0 %v2622
      %3780 = vmatprep.subr.mxu0 0.0
      %3781 = vmatpush1.msra.mxu0 0.0
      %3782 = vmatprep.subr.mxu0 0.0
      %3783 = vmatpush1.msra.mxu0 0.0
      %3784 = vmatprep.subr.mxu0 0.0
      %3785 = vmatpush1.msra.mxu0 0.0
      %3786 = vmatprep.subr.mxu0 0.0
      %3787 = vmatpush1.msra.mxu0 0.0
      %3788 = vmatprep.subr.mxu0 0.0
      %3789 = vmatpush1.msra.mxu0 0.0
      %3790 = vmatprep.subr.mxu0 0.0
      %3791 = vmatpush1.msra.mxu0 0.0
      %3792 = vmatprep.subr.mxu0 0.0
      %3793 = vmatpush1.msra.mxu0 0.0
      %3794 = vmatprep.subr.mxu0 0.0
      %3795 = vmatpush1.msra.mxu0 0.0
      %3796 = vmatprep.subr.mxu0 0.0
      %3797 = vmatpush1.msra.mxu0 0.0
      %3798 = vmatprep.subr.mxu0 0.0
      %3799 = vmatpush1.msra.mxu0 0.0
      %3800 = vmatprep.subr.mxu0 0.0
      %3801 = vmatpush1.msra.mxu0 0.0
      %3802 = vmatprep.subr.mxu0 0.0
      %3803 = vmatpush1.msra.mxu0 0.0
      %3804 = vmatprep.subr.mxu0 0.0
      %3805 = vmatpush1.msra.mxu0 0.0
      %3806 = vmatprep.subr.mxu0 0.0
      %3807 = vmatpush1.msra.mxu0 0.0
      %3808 = vmatprep.subr.mxu0 0.0
      %3809 = vmatpush1.msra.mxu0 0.0
      %3810 = vmatprep.subr.mxu0 0.0
      %3811 = vmatpush1.msra.mxu0 0.0
      %3812 = vmatprep.subr.mxu0 0.0
      %3813 = vmatpush1.msra.mxu0 0.0
      %3814 = vmatprep.subr.mxu0 0.0
      %3815 = vmatpush1.msra.mxu0 0.0
      %3816 = vmatprep.subr.mxu0 0.0
      %3817 = vmatpush1.msra.mxu0 0.0
      %3818 = vmatprep.subr.mxu0 0.0
      %3819 = vmatpush1.msra.mxu0 0.0
      %3820 = vmatprep.subr.mxu0 0.0
      %3821 = vmatpush1.msra.mxu0 0.0
      %3822 = vmatprep.subr.mxu0 0.0
      %3823 = vmatpush1.msra.mxu0 0.0
      %3824 = vmatprep.subr.mxu0 0.0
      %3825 = vmatpush1.msra.mxu0 0.0
      %3826 = vmatprep.subr.mxu0 0.0
      %3827 = vmatpush1.msra.mxu0 0.0
      %3828 = vmatprep.subr.mxu0 0.0
      %3829 = vmatpush1.msra.mxu0 0.0
      %3830 = vmatprep.subr.mxu0 0.0
      %3831 = vmatpush1.msra.mxu0 0.0
      %3832 = vmatprep.subr.mxu0 0.0
      %3833 = vmatpush1.msra.mxu0 0.0
      %3834 = vmatprep.subr.mxu0 0.0
      %3835 = vmatpush1.msra.mxu0 0.0
      %3836 = vmatprep.subr.mxu0 0.0
      %3837 = vmatpush1.msra.mxu0 0.0
      %3838 = vmatprep.subr.mxu0 0.0
      %3839 = vmatpush1.msra.mxu0 0.0
      %3840 = vmatprep.subr.mxu0 0.0
      %3841 = vmatpush1.msra.mxu0 0.0
      %3842 = vmatprep.mubr.f32.mxu0 0.0
      %3843 = vmatmul.mubr.f32.gmra.mrb[0].mxu0 %v3776
      %v3844 = vpop.f32.mrb[0].mxu0
      %v3845 = vadd.f32 0.0, %v3844
      %v3846 = vpop.f32.mrb[0].mxu0
      %v3847 = vadd.f32 0.0, %v3846
      %3848 = vdwg.mxu0
      %v3849 = vadd.f32 %v3771, %v3845
      %v3850 = vadd.f32 %v3772, %v3847
      %s3851 = scalar_lea.vmem %s9, 8
      %v3852 = vld [vmem:[%s3851] sm:$0xff]
      %3854 = vset.pattern.permute.xlu0 0
      %3855 = vperm.xlu0 %3854, %v3852
      %v3856 = vpop.permute.xlu0 %3855
      %v3858 = vadd.f32 %v3849, %v3856
      %v3859 = vadd.f32 %v3850, %v3856
      %3860 = vst [vmem:[#allocation2] sm:$0xff] %v3858
      %3861 = vst [vmem:[#allocation2 + $0x8] sm:$0xff] %v3859
      %v3862 = vld [vmem:[#allocation2] sm:$0xff]
      %v3863 = vld [vmem:[#allocation2 + $0x8] sm:$0xff]
      %v3864 = vld [vmem:[#allocation2 + $0x10] sm:$0xff]
      %v3865 = vld [vmem:[#allocation2 + $0x18] sm:$0xff]
      %s3866 = scalar_lea.vmem %s530, 16
      %v3867 = vld [vmem:[%s3866] sm:$0xff]
      %v3868 = vld [vmem:[%s3866 + $0x8] sm:$0xff]
      %3870 = vset.pattern.permute.xlu0 0
      %3871 = vperm.xlu0 %3870, %v3867
      %v3872 = vpop.permute.xlu0 %3871
      %3875 = vset.pattern.permute.xlu0 0
      %3876 = vperm.xlu0 %3875, %v3868
      %v3877 = vpop.permute.xlu0 %3876
      %v3879 = vmul.f32 %v3862, %v3872
      %v3880 = vmul.f32 %v3863, %v3872
      %v3881 = vmul.f32 %v3864, %v3877
      %v3882 = vmul.f32 %v3865, %v3877
      %s3883 = scalar_lea.vmem %s10, 72
      %v3884 = vld [vmem:[%s3883] sm:$0xff]
      %3885 = vrot.lane.b32.xlu0 %v3879, 17
      %v3886 = vpop.permute.xlu0 %3885
      %3887 = vrot.lane.b32.xlu0 %v3881, 17
      %v3888 = vpop.permute.xlu0 %3887
      %3889 = vrot.lane.b32.xlu0 %v3880, 17
      %v3890 = vpop.permute.xlu0 %3889
      %3891 = vrot.lane.b32.xlu0 %v3882, 17
      %v3892 = vpop.permute.xlu0 %3891
      %v3893 = vsel %vm716, %v3886, %v3890
      %v3894 = vsel %vm716, %v3888, %v3892
      %v3895 = vsel %vm716, %v3890, %v3886
      %v3896 = vsel %vm716, %v3892, %v3888
      %s3897 = scalar_lea.vmem %s10, 80
      %v3898 = vld [vmem:[%s3897] sm:$0xff]
      %3899 = vrot.lane.b32.xlu0 %v3879, 16
      %v3900 = vpop.permute.xlu0 %3899
      %3901 = vrot.lane.b32.xlu0 %v3881, 16
      %v3902 = vpop.permute.xlu0 %3901
      %3903 = vrot.lane.b32.xlu0 %v3880, 16
      %v3904 = vpop.permute.xlu0 %3903
      %3905 = vrot.lane.b32.xlu0 %v3882, 16
      %v3906 = vpop.permute.xlu0 %3905
      %v3907 = vsel %vm737, %v3900, %v3904
      %v3908 = vsel %vm737, %v3902, %v3906
      %v3909 = vsel %vm737, %v3904, %v3900
      %v3910 = vsel %vm737, %v3906, %v3902
      %v3912 = vsel %vm879, %v3898, 0
      %3914 = vmatprep.subr.mxu0 %v3907
      %3915 = vmatpush1.msra.mxu0 %v3909
      %3916 = vmatprep.subr.mxu0 %v3908
      %3917 = vmatpush1.msra.mxu0 %v3910
      %3918 = vmatprep.subr.mxu0 0.0
      %3919 = vmatpush1.msra.mxu0 0.0
      %3920 = vmatprep.subr.mxu0 0.0
      %3921 = vmatpush1.msra.mxu0 0.0
      %3922 = vmatprep.subr.mxu0 0.0
      %3923 = vmatpush1.msra.mxu0 0.0
      %3924 = vmatprep.subr.mxu0 0.0
      %3925 = vmatpush1.msra.mxu0 0.0
      %3926 = vmatprep.subr.mxu0 0.0
      %3927 = vmatpush1.msra.mxu0 0.0
      %3928 = vmatprep.subr.mxu0 0.0
      %3929 = vmatpush1.msra.mxu0 0.0
      %3930 = vmatprep.subr.mxu0 0.0
      %3931 = vmatpush1.msra.mxu0 0.0
      %3932 = vmatprep.subr.mxu0 0.0
      %3933 = vmatpush1.msra.mxu0 0.0
      %3934 = vmatprep.subr.mxu0 0.0
      %3935 = vmatpush1.msra.mxu0 0.0
      %3936 = vmatprep.subr.mxu0 0.0
      %3937 = vmatpush1.msra.mxu0 0.0
      %3938 = vmatprep.subr.mxu0 0.0
      %3939 = vmatpush1.msra.mxu0 0.0
      %3940 = vmatprep.subr.mxu0 0.0
      %3941 = vmatpush1.msra.mxu0 0.0
      %3942 = vmatprep.subr.mxu0 0.0
      %3943 = vmatpush1.msra.mxu0 0.0
      %3944 = vmatprep.subr.mxu0 0.0
      %3945 = vmatpush1.msra.mxu0 0.0
      %3946 = vmatprep.subr.mxu0 0.0
      %3947 = vmatpush1.msra.mxu0 0.0
      %3948 = vmatprep.subr.mxu0 0.0
      %3949 = vmatpush1.msra.mxu0 0.0
      %3950 = vmatprep.subr.mxu0 0.0
      %3951 = vmatpush1.msra.mxu0 0.0
      %3952 = vmatprep.subr.mxu0 0.0
      %3953 = vmatpush1.msra.mxu0 0.0
      %3954 = vmatprep.subr.mxu0 0.0
      %3955 = vmatpush1.msra.mxu0 0.0
      %3956 = vmatprep.subr.mxu0 0.0
      %3957 = vmatpush1.msra.mxu0 0.0
      %3958 = vmatprep.subr.mxu0 0.0
      %3959 = vmatpush1.msra.mxu0 0.0
      %3960 = vmatprep.subr.mxu0 0.0
      %3961 = vmatpush1.msra.mxu0 0.0
      %3962 = vmatprep.subr.mxu0 0.0
      %3963 = vmatpush1.msra.mxu0 0.0
      %3964 = vmatprep.subr.mxu0 0.0
      %3965 = vmatpush1.msra.mxu0 0.0
      %3966 = vmatprep.subr.mxu0 0.0
      %3967 = vmatpush1.msra.mxu0 0.0
      %3968 = vmatprep.subr.mxu0 0.0
      %3969 = vmatpush1.msra.mxu0 0.0
      %3970 = vmatprep.subr.mxu0 0.0
      %3971 = vmatpush1.msra.mxu0 0.0
      %3972 = vmatprep.subr.mxu0 0.0
      %3973 = vmatpush1.msra.mxu0 0.0
      %3974 = vmatprep.subr.mxu0 0.0
      %3975 = vmatpush1.msra.mxu0 0.0
      %3976 = vmatprep.subr.mxu0 0.0
      %3977 = vmatpush1.msra.mxu0 0.0
      %3978 = vmatprep.mubr.f32.mxu0 0.0
      %3979 = vmatmul.mubr.f32.gmra.mrb[0].mxu0 %v3912
      %v3980 = vpop.f32.mrb[0].mxu0
      %v3981 = vadd.f32 0.0, %v3980
      %v3982 = vpop.f32.mrb[0].mxu0
      %v3983 = vadd.f32 0.0, %v3982
      %3984 = vdwg.mxu0
      %v3986 = vsel %vm879, %v3884, 0
      %3988 = vmatprep.subr.mxu0 %v3893
      %3989 = vmatpush1.msra.mxu0 %v3895
      %3990 = vmatprep.subr.mxu0 %v3894
      %3991 = vmatpush1.msra.mxu0 %v3896
      %3992 = vmatprep.subr.mxu0 0.0
      %3993 = vmatpush1.msra.mxu0 0.0
      %3994 = vmatprep.subr.mxu0 0.0
      %3995 = vmatpush1.msra.mxu0 0.0
      %3996 = vmatprep.subr.mxu0 0.0
      %3997 = vmatpush1.msra.mxu0 0.0
      %3998 = vmatprep.subr.mxu0 0.0
      %3999 = vmatpush1.msra.mxu0 0.0
      %4000 = vmatprep.subr.mxu0 0.0
      %4001 = vmatpush1.msra.mxu0 0.0
      %4002 = vmatprep.subr.mxu0 0.0
      %4003 = vmatpush1.msra.mxu0 0.0
      %4004 = vmatprep.subr.mxu0 0.0
      %4005 = vmatpush1.msra.mxu0 0.0
      %4006 = vmatprep.subr.mxu0 0.0
      %4007 = vmatpush1.msra.mxu0 0.0
      %4008 = vmatprep.subr.mxu0 0.0
      %4009 = vmatpush1.msra.mxu0 0.0
      %4010 = vmatprep.subr.mxu0 0.0
      %4011 = vmatpush1.msra.mxu0 0.0
      %4012 = vmatprep.subr.mxu0 0.0
      %4013 = vmatpush1.msra.mxu0 0.0
      %4014 = vmatprep.subr.mxu0 0.0
      %4015 = vmatpush1.msra.mxu0 0.0
      %4016 = vmatprep.subr.mxu0 0.0
      %4017 = vmatpush1.msra.mxu0 0.0
      %4018 = vmatprep.subr.mxu0 0.0
      %4019 = vmatpush1.msra.mxu0 0.0
      %4020 = vmatprep.subr.mxu0 0.0
      %4021 = vmatpush1.msra.mxu0 0.0
      %4022 = vmatprep.subr.mxu0 0.0
      %4023 = vmatpush1.msra.mxu0 0.0
      %4024 = vmatprep.subr.mxu0 0.0
      %4025 = vmatpush1.msra.mxu0 0.0
      %4026 = vmatprep.subr.mxu0 0.0
      %4027 = vmatpush1.msra.mxu0 0.0
      %4028 = vmatprep.subr.mxu0 0.0
      %4029 = vmatpush1.msra.mxu0 0.0
      %4030 = vmatprep.subr.mxu0 0.0
      %4031 = vmatpush1.msra.mxu0 0.0
      %4032 = vmatprep.subr.mxu0 0.0
      %4033 = vmatpush1.msra.mxu0 0.0
      %4034 = vmatprep.subr.mxu0 0.0
      %4035 = vmatpush1.msra.mxu0 0.0
      %4036 = vmatprep.subr.mxu0 0.0
      %4037 = vmatpush1.msra.mxu0 0.0
      %4038 = vmatprep.subr.mxu0 0.0
      %4039 = vmatpush1.msra.mxu0 0.0
      %4040 = vmatprep.subr.mxu0 0.0
      %4041 = vmatpush1.msra.mxu0 0.0
      %4042 = vmatprep.subr.mxu0 0.0
      %4043 = vmatpush1.msra.mxu0 0.0
      %4044 = vmatprep.subr.mxu0 0.0
      %4045 = vmatpush1.msra.mxu0 0.0
      %4046 = vmatprep.subr.mxu0 0.0
      %4047 = vmatpush1.msra.mxu0 0.0
      %4048 = vmatprep.subr.mxu0 0.0
      %4049 = vmatpush1.msra.mxu0 0.0
      %4050 = vmatprep.subr.mxu0 0.0
      %4051 = vmatpush1.msra.mxu0 0.0
      %4052 = vmatprep.mubr.f32.mxu0 0.0
      %4053 = vmatmul.mubr.f32.gmra.mrb[0].mxu0 %v3986
      %v4054 = vpop.f32.mrb[0].mxu0
      %v4055 = vadd.f32 %v3981, %v4054
      %v4056 = vpop.f32.mrb[0].mxu0
      %v4057 = vadd.f32 %v3983, %v4056
      %4058 = vdwg.mxu0
      %s4059 = scalar_lea.vmem %s10, 88
      %v4060 = vld [vmem:[%s4059] sm:$0xff]
      %4061 = vrot.lane.b32.xlu0 %v3879, 15
      %v4062 = vpop.permute.xlu0 %4061
      %4063 = vrot.lane.b32.xlu0 %v3881, 15
      %v4064 = vpop.permute.xlu0 %4063
      %4065 = vrot.lane.b32.xlu0 %v3880, 15
      %v4066 = vpop.permute.xlu0 %4065
      %4067 = vrot.lane.b32.xlu0 %v3882, 15
      %v4068 = vpop.permute.xlu0 %4067
      %v4069 = vsel %vm652, %v4062, %v4066
      %v4070 = vsel %vm652, %v4064, %v4068
      %v4071 = vsel %vm652, %v4066, %v4062
      %v4072 = vsel %vm652, %v4068, %v4064
      %v4074 = vsel %vm879, %v4060, 0
      %4076 = vmatprep.subr.mxu0 %v4069
      %4077 = vmatpush1.msra.mxu0 %v4071
      %4078 = vmatprep.subr.mxu0 %v4070
      %4079 = vmatpush1.msra.mxu0 %v4072
      %4080 = vmatprep.subr.mxu0 0.0
      %4081 = vmatpush1.msra.mxu0 0.0
      %4082 = vmatprep.subr.mxu0 0.0
      %4083 = vmatpush1.msra.mxu0 0.0
      %4084 = vmatprep.subr.mxu0 0.0
      %4085 = vmatpush1.msra.mxu0 0.0
      %4086 = vmatprep.subr.mxu0 0.0
      %4087 = vmatpush1.msra.mxu0 0.0
      %4088 = vmatprep.subr.mxu0 0.0
      %4089 = vmatpush1.msra.mxu0 0.0
      %4090 = vmatprep.subr.mxu0 0.0
      %4091 = vmatpush1.msra.mxu0 0.0
      %4092 = vmatprep.subr.mxu0 0.0
      %4093 = vmatpush1.msra.mxu0 0.0
      %4094 = vmatprep.subr.mxu0 0.0
      %4095 = vmatpush1.msra.mxu0 0.0
      %4096 = vmatprep.subr.mxu0 0.0
      %4097 = vmatpush1.msra.mxu0 0.0
      %4098 = vmatprep.subr.mxu0 0.0
      %4099 = vmatpush1.msra.mxu0 0.0
      %4100 = vmatprep.subr.mxu0 0.0
      %4101 = vmatpush1.msra.mxu0 0.0
      %4102 = vmatprep.subr.mxu0 0.0
      %4103 = vmatpush1.msra.mxu0 0.0
      %4104 = vmatprep.subr.mxu0 0.0
      %4105 = vmatpush1.msra.mxu0 0.0
      %4106 = vmatprep.subr.mxu0 0.0
      %4107 = vmatpush1.msra.mxu0 0.0
      %4108 = vmatprep.subr.mxu0 0.0
      %4109 = vmatpush1.msra.mxu0 0.0
      %4110 = vmatprep.subr.mxu0 0.0
      %4111 = vmatpush1.msra.mxu0 0.0
      %4112 = vmatprep.subr.mxu0 0.0
      %4113 = vmatpush1.msra.mxu0 0.0
      %4114 = vmatprep.subr.mxu0 0.0
      %4115 = vmatpush1.msra.mxu0 0.0
      %4116 = vmatprep.subr.mxu0 0.0
      %4117 = vmatpush1.msra.mxu0 0.0
      %4118 = vmatprep.subr.mxu0 0.0
      %4119 = vmatpush1.msra.mxu0 0.0
      %4120 = vmatprep.subr.mxu0 0.0
      %4121 = vmatpush1.msra.mxu0 0.0
      %4122 = vmatprep.subr.mxu0 0.0
      %4123 = vmatpush1.msra.mxu0 0.0
      %4124 = vmatprep.subr.mxu0 0.0
      %4125 = vmatpush1.msra.mxu0 0.0
      %4126 = vmatprep.subr.mxu0 0.0
      %4127 = vmatpush1.msra.mxu0 0.0
      %4128 = vmatprep.subr.mxu0 0.0
      %4129 = vmatpush1.msra.mxu0 0.0
      %4130 = vmatprep.subr.mxu0 0.0
      %4131 = vmatpush1.msra.mxu0 0.0
      %4132 = vmatprep.subr.mxu0 0.0
      %4133 = vmatpush1.msra.mxu0 0.0
      %4134 = vmatprep.subr.mxu0 0.0
      %4135 = vmatpush1.msra.mxu0 0.0
      %4136 = vmatprep.subr.mxu0 0.0
      %4137 = vmatpush1.msra.mxu0 0.0
      %4138 = vmatprep.subr.mxu0 0.0
      %4139 = vmatpush1.msra.mxu0 0.0
      %4140 = vmatprep.mubr.f32.mxu0 0.0
      %4141 = vmatmul.mubr.f32.gmra.mrb[0].mxu0 %v4074
      %v4142 = vpop.f32.mrb[0].mxu0
      %v4143 = vadd.f32 0.0, %v4142
      %v4144 = vpop.f32.mrb[0].mxu0
      %v4145 = vadd.f32 0.0, %v4144
      %4146 = vdwg.mxu0
      %v4147 = vadd.f32 %v4055, %v4143
      %v4148 = vadd.f32 %v4057, %v4145
      %s4149 = scalar_lea.vmem %s10, 96
      %v4150 = vld [vmem:[%s4149] sm:$0xff]
      %4151 = vrot.lane.b32.xlu0 %v3879, 1
      %v4152 = vpop.permute.xlu0 %4151
      %4153 = vrot.lane.b32.xlu0 %v3881, 1
      %v4154 = vpop.permute.xlu0 %4153
      %4155 = vrot.lane.b32.xlu0 %v3880, 1
      %v4156 = vpop.permute.xlu0 %4155
      %4157 = vrot.lane.b32.xlu0 %v3882, 1
      %v4158 = vpop.permute.xlu0 %4157
      %v4159 = vsel %vm620, %v4152, %v4156
      %v4160 = vsel %vm620, %v4154, %v4158
      %v4161 = vsel %vm620, %v4156, %v4152
      %v4162 = vsel %vm620, %v4158, %v4154
      %v4164 = vsel %vm879, %v4150, 0
      %4166 = vmatprep.subr.mxu0 %v4159
      %4167 = vmatpush1.msra.mxu0 %v4161
      %4168 = vmatprep.subr.mxu0 %v4160
      %4169 = vmatpush1.msra.mxu0 %v4162
      %4170 = vmatprep.subr.mxu0 0.0
      %4171 = vmatpush1.msra.mxu0 0.0
      %4172 = vmatprep.subr.mxu0 0.0
      %4173 = vmatpush1.msra.mxu0 0.0
      %4174 = vmatprep.subr.mxu0 0.0
      %4175 = vmatpush1.msra.mxu0 0.0
      %4176 = vmatprep.subr.mxu0 0.0
      %4177 = vmatpush1.msra.mxu0 0.0
      %4178 = vmatprep.subr.mxu0 0.0
      %4179 = vmatpush1.msra.mxu0 0.0
      %4180 = vmatprep.subr.mxu0 0.0
      %4181 = vmatpush1.msra.mxu0 0.0
      %4182 = vmatprep.subr.mxu0 0.0
      %4183 = vmatpush1.msra.mxu0 0.0
      %4184 = vmatprep.subr.mxu0 0.0
      %4185 = vmatpush1.msra.mxu0 0.0
      %4186 = vmatprep.subr.mxu0 0.0
      %4187 = vmatpush1.msra.mxu0 0.0
      %4188 = vmatprep.subr.mxu0 0.0
      %4189 = vmatpush1.msra.mxu0 0.0
      %4190 = vmatprep.subr.mxu0 0.0
      %4191 = vmatpush1.msra.mxu0 0.0
      %4192 = vmatprep.subr.mxu0 0.0
      %4193 = vmatpush1.msra.mxu0 0.0
      %4194 = vmatprep.subr.mxu0 0.0
      %4195 = vmatpush1.msra.mxu0 0.0
      %4196 = vmatprep.subr.mxu0 0.0
      %4197 = vmatpush1.msra.mxu0 0.0
      %4198 = vmatprep.subr.mxu0 0.0
      %4199 = vmatpush1.msra.mxu0 0.0
      %4200 = vmatprep.subr.mxu0 0.0
      %4201 = vmatpush1.msra.mxu0 0.0
      %4202 = vmatprep.subr.mxu0 0.0
      %4203 = vmatpush1.msra.mxu0 0.0
      %4204 = vmatprep.subr.mxu0 0.0
      %4205 = vmatpush1.msra.mxu0 0.0
      %4206 = vmatprep.subr.mxu0 0.0
      %4207 = vmatpush1.msra.mxu0 0.0
      %4208 = vmatprep.subr.mxu0 0.0
      %4209 = vmatpush1.msra.mxu0 0.0
      %4210 = vmatprep.subr.mxu0 0.0
      %4211 = vmatpush1.msra.mxu0 0.0
      %4212 = vmatprep.subr.mxu0 0.0
      %4213 = vmatpush1.msra.mxu0 0.0
      %4214 = vmatprep.subr.mxu0 0.0
      %4215 = vmatpush1.msra.mxu0 0.0
      %4216 = vmatprep.subr.mxu0 0.0
      %4217 = vmatpush1.msra.mxu0 0.0
      %4218 = vmatprep.subr.mxu0 0.0
      %4219 = vmatpush1.msra.mxu0 0.0
      %4220 = vmatprep.subr.mxu0 0.0
      %4221 = vmatpush1.msra.mxu0 0.0
      %4222 = vmatprep.subr.mxu0 0.0
      %4223 = vmatpush1.msra.mxu0 0.0
      %4224 = vmatprep.subr.mxu0 0.0
      %4225 = vmatpush1.msra.mxu0 0.0
      %4226 = vmatprep.subr.mxu0 0.0
      %4227 = vmatpush1.msra.mxu0 0.0
      %4228 = vmatprep.subr.mxu0 0.0
      %4229 = vmatpush1.msra.mxu0 0.0
      %4230 = vmatprep.mubr.f32.mxu0 0.0
      %4231 = vmatmul.mubr.f32.gmra.mrb[0].mxu0 %v4164
      %v4232 = vpop.f32.mrb[0].mxu0
      %v4233 = vadd.f32 0.0, %v4232
      %v4234 = vpop.f32.mrb[0].mxu0
      %v4235 = vadd.f32 0.0, %v4234
      %4236 = vdwg.mxu0
      %v4237 = vadd.f32 %v4147, %v4233
      %v4238 = vadd.f32 %v4148, %v4235
      %s4239 = scalar_lea.vmem %s10, 104
      %v4240 = vld [vmem:[%s4239] sm:$0xff]
      %v4242 = vsel %vm879, %v4240, 0
      %4244 = vmatprep.subr.mxu0 %v3880
      %4245 = vmatpush1.msra.mxu0 %v3879
      %4246 = vmatprep.subr.mxu0 %v3882
      %4247 = vmatpush1.msra.mxu0 %v3881
      %4248 = vmatprep.subr.mxu0 0.0
      %4249 = vmatpush1.msra.mxu0 0.0
      %4250 = vmatprep.subr.mxu0 0.0
      %4251 = vmatpush1.msra.mxu0 0.0
      %4252 = vmatprep.subr.mxu0 0.0
      %4253 = vmatpush1.msra.mxu0 0.0
      %4254 = vmatprep.subr.mxu0 0.0
      %4255 = vmatpush1.msra.mxu0 0.0
      %4256 = vmatprep.subr.mxu0 0.0
      %4257 = vmatpush1.msra.mxu0 0.0
      %4258 = vmatprep.subr.mxu0 0.0
      %4259 = vmatpush1.msra.mxu0 0.0
      %4260 = vmatprep.subr.mxu0 0.0
      %4261 = vmatpush1.msra.mxu0 0.0
      %4262 = vmatprep.subr.mxu0 0.0
      %4263 = vmatpush1.msra.mxu0 0.0
      %4264 = vmatprep.subr.mxu0 0.0
      %4265 = vmatpush1.msra.mxu0 0.0
      %4266 = vmatprep.subr.mxu0 0.0
      %4267 = vmatpush1.msra.mxu0 0.0
      %4268 = vmatprep.subr.mxu0 0.0
      %4269 = vmatpush1.msra.mxu0 0.0
      %4270 = vmatprep.subr.mxu0 0.0
      %4271 = vmatpush1.msra.mxu0 0.0
      %4272 = vmatprep.subr.mxu0 0.0
      %4273 = vmatpush1.msra.mxu0 0.0
      %4274 = vmatprep.subr.mxu0 0.0
      %4275 = vmatpush1.msra.mxu0 0.0
      %4276 = vmatprep.subr.mxu0 0.0
      %4277 = vmatpush1.msra.mxu0 0.0
      %4278 = vmatprep.subr.mxu0 0.0
      %4279 = vmatpush1.msra.mxu0 0.0
      %4280 = vmatprep.subr.mxu0 0.0
      %4281 = vmatpush1.msra.mxu0 0.0
      %4282 = vmatprep.subr.mxu0 0.0
      %4283 = vmatpush1.msra.mxu0 0.0
      %4284 = vmatprep.subr.mxu0 0.0
      %4285 = vmatpush1.msra.mxu0 0.0
      %4286 = vmatprep.subr.mxu0 0.0
      %4287 = vmatpush1.msra.mxu0 0.0
      %4288 = vmatprep.subr.mxu0 0.0
      %4289 = vmatpush1.msra.mxu0 0.0
      %4290 = vmatprep.subr.mxu0 0.0
      %4291 = vmatpush1.msra.mxu0 0.0
      %4292 = vmatprep.subr.mxu0 0.0
      %4293 = vmatpush1.msra.mxu0 0.0
      %4294 = vmatprep.subr.mxu0 0.0
      %4295 = vmatpush1.msra.mxu0 0.0
      %4296 = vmatprep.subr.mxu0 0.0
      %4297 = vmatpush1.msra.mxu0 0.0
      %4298 = vmatprep.subr.mxu0 0.0
      %4299 = vmatpush1.msra.mxu0 0.0
      %4300 = vmatprep.subr.mxu0 0.0
      %4301 = vmatpush1.msra.mxu0 0.0
      %4302 = vmatprep.subr.mxu0 0.0
      %4303 = vmatpush1.msra.mxu0 0.0
      %4304 = vmatprep.subr.mxu0 0.0
      %4305 = vmatpush1.msra.mxu0 0.0
      %4306 = vmatprep.subr.mxu0 0.0
      %4307 = vmatpush1.msra.mxu0 0.0
      %4308 = vmatprep.mubr.f32.mxu0 0.0
      %4309 = vmatmul.mubr.f32.gmra.mrb[0].mxu0 %v4242
      %v4310 = vpop.f32.mrb[0].mxu0
      %v4311 = vadd.f32 0.0, %v4310
      %v4312 = vpop.f32.mrb[0].mxu0
      %v4313 = vadd.f32 0.0, %v4312
      %4314 = vdwg.mxu0
      %v4315 = vadd.f32 %v4237, %v4311
      %v4316 = vadd.f32 %v4238, %v4313
      %s4317 = scalar_lea.vmem %s10, 112
      %v4318 = vld [vmem:[%s4317] sm:$0xff]
      %4319 = vrot.lane.b32.xlu0 %v3879, 127
      %v4320 = vpop.permute.xlu0 %4319
      %4321 = vrot.lane.b32.xlu0 %v3881, 127
      %v4322 = vpop.permute.xlu0 %4321
      %4323 = vrot.lane.b32.xlu0 %v3880, 127
      %v4324 = vpop.permute.xlu0 %4323
      %4325 = vrot.lane.b32.xlu0 %v3882, 127
      %v4326 = vpop.permute.xlu0 %4325
      %v4327 = vsel %vm680, %v4320, %v4324
      %v4328 = vsel %vm680, %v4322, %v4326
      %v4329 = vsel %vm680, %v4324, %v4320
      %v4330 = vsel %vm680, %v4326, %v4322
      %v4332 = vsel %vm879, %v4318, 0
      %4334 = vmatprep.subr.mxu0 %v4329
      %4335 = vmatpush1.msra.mxu0 %v4327
      %4336 = vmatprep.subr.mxu0 %v4330
      %4337 = vmatpush1.msra.mxu0 %v4328
      %4338 = vmatprep.subr.mxu0 0.0
      %4339 = vmatpush1.msra.mxu0 0.0
      %4340 = vmatprep.subr.mxu0 0.0
      %4341 = vmatpush1.msra.mxu0 0.0
      %4342 = vmatprep.subr.mxu0 0.0
      %4343 = vmatpush1.msra.mxu0 0.0
      %4344 = vmatprep.subr.mxu0 0.0
      %4345 = vmatpush1.msra.mxu0 0.0
      %4346 = vmatprep.subr.mxu0 0.0
      %4347 = vmatpush1.msra.mxu0 0.0
      %4348 = vmatprep.subr.mxu0 0.0
      %4349 = vmatpush1.msra.mxu0 0.0
      %4350 = vmatprep.subr.mxu0 0.0
      %4351 = vmatpush1.msra.mxu0 0.0
      %4352 = vmatprep.subr.mxu0 0.0
      %4353 = vmatpush1.msra.mxu0 0.0
      %4354 = vmatprep.subr.mxu0 0.0
      %4355 = vmatpush1.msra.mxu0 0.0
      %4356 = vmatprep.subr.mxu0 0.0
      %4357 = vmatpush1.msra.mxu0 0.0
      %4358 = vmatprep.subr.mxu0 0.0
      %4359 = vmatpush1.msra.mxu0 0.0
      %4360 = vmatprep.subr.mxu0 0.0
      %4361 = vmatpush1.msra.mxu0 0.0
      %4362 = vmatprep.subr.mxu0 0.0
      %4363 = vmatpush1.msra.mxu0 0.0
      %4364 = vmatprep.subr.mxu0 0.0
      %4365 = vmatpush1.msra.mxu0 0.0
      %4366 = vmatprep.subr.mxu0 0.0
      %4367 = vmatpush1.msra.mxu0 0.0
      %4368 = vmatprep.subr.mxu0 0.0
      %4369 = vmatpush1.msra.mxu0 0.0
      %4370 = vmatprep.subr.mxu0 0.0
      %4371 = vmatpush1.msra.mxu0 0.0
      %4372 = vmatprep.subr.mxu0 0.0
      %4373 = vmatpush1.msra.mxu0 0.0
      %4374 = vmatprep.subr.mxu0 0.0
      %4375 = vmatpush1.msra.mxu0 0.0
      %4376 = vmatprep.subr.mxu0 0.0
      %4377 = vmatpush1.msra.mxu0 0.0
      %4378 = vmatprep.subr.mxu0 0.0
      %4379 = vmatpush1.msra.mxu0 0.0
      %4380 = vmatprep.subr.mxu0 0.0
      %4381 = vmatpush1.msra.mxu0 0.0
      %4382 = vmatprep.subr.mxu0 0.0
      %4383 = vmatpush1.msra.mxu0 0.0
      %4384 = vmatprep.subr.mxu0 0.0
      %4385 = vmatpush1.msra.mxu0 0.0
      %4386 = vmatprep.subr.mxu0 0.0
      %4387 = vmatpush1.msra.mxu0 0.0
      %4388 = vmatprep.subr.mxu0 0.0
      %4389 = vmatpush1.msra.mxu0 0.0
      %4390 = vmatprep.subr.mxu0 0.0
      %4391 = vmatpush1.msra.mxu0 0.0
      %4392 = vmatprep.subr.mxu0 0.0
      %4393 = vmatpush1.msra.mxu0 0.0
      %4394 = vmatprep.subr.mxu0 0.0
      %4395 = vmatpush1.msra.mxu0 0.0
      %4396 = vmatprep.subr.mxu0 0.0
      %4397 = vmatpush1.msra.mxu0 0.0
      %4398 = vmatprep.mubr.f32.mxu0 0.0
      %4399 = vmatmul.mubr.f32.gmra.mrb[0].mxu0 %v4332
      %v4400 = vpop.f32.mrb[0].mxu0
      %v4401 = vadd.f32 0.0, %v4400
      %v4402 = vpop.f32.mrb[0].mxu0
      %v4403 = vadd.f32 0.0, %v4402
      %4404 = vdwg.mxu0
      %v4405 = vadd.f32 %v4315, %v4401
      %v4406 = vadd.f32 %v4316, %v4403
      %s4407 = scalar_lea.vmem %s10, 120
      %v4408 = vld [vmem:[%s4407] sm:$0xff]
      %4409 = vrot.lane.b32.xlu0 %v3879, 113
      %v4410 = vpop.permute.xlu0 %4409
      %4411 = vrot.lane.b32.xlu0 %v3881, 113
      %v4412 = vpop.permute.xlu0 %4411
      %4413 = vrot.lane.b32.xlu0 %v3880, 113
      %v4414 = vpop.permute.xlu0 %4413
      %4415 = vrot.lane.b32.xlu0 %v3882, 113
      %v4416 = vpop.permute.xlu0 %4415
      %v4417 = vsel %vm592, %v4410, %v4414
      %v4418 = vsel %vm592, %v4412, %v4416
      %v4419 = vsel %vm592, %v4414, %v4410
      %v4420 = vsel %vm592, %v4416, %v4412
      %v4422 = vsel %vm879, %v4408, 0
      %4424 = vmatprep.subr.mxu0 %v4419
      %4425 = vmatpush1.msra.mxu0 %v4417
      %4426 = vmatprep.subr.mxu0 %v4420
      %4427 = vmatpush1.msra.mxu0 %v4418
      %4428 = vmatprep.subr.mxu0 0.0
      %4429 = vmatpush1.msra.mxu0 0.0
      %4430 = vmatprep.subr.mxu0 0.0
      %4431 = vmatpush1.msra.mxu0 0.0
      %4432 = vmatprep.subr.mxu0 0.0
      %4433 = vmatpush1.msra.mxu0 0.0
      %4434 = vmatprep.subr.mxu0 0.0
      %4435 = vmatpush1.msra.mxu0 0.0
      %4436 = vmatprep.subr.mxu0 0.0
      %4437 = vmatpush1.msra.mxu0 0.0
      %4438 = vmatprep.subr.mxu0 0.0
      %4439 = vmatpush1.msra.mxu0 0.0
      %4440 = vmatprep.subr.mxu0 0.0
      %4441 = vmatpush1.msra.mxu0 0.0
      %4442 = vmatprep.subr.mxu0 0.0
      %4443 = vmatpush1.msra.mxu0 0.0
      %4444 = vmatprep.subr.mxu0 0.0
      %4445 = vmatpush1.msra.mxu0 0.0
      %4446 = vmatprep.subr.mxu0 0.0
      %4447 = vmatpush1.msra.mxu0 0.0
      %4448 = vmatprep.subr.mxu0 0.0
      %4449 = vmatpush1.msra.mxu0 0.0
      %4450 = vmatprep.subr.mxu0 0.0
      %4451 = vmatpush1.msra.mxu0 0.0
      %4452 = vmatprep.subr.mxu0 0.0
      %4453 = vmatpush1.msra.mxu0 0.0
      %4454 = vmatprep.subr.mxu0 0.0
      %4455 = vmatpush1.msra.mxu0 0.0
      %4456 = vmatprep.subr.mxu0 0.0
      %4457 = vmatpush1.msra.mxu0 0.0
      %4458 = vmatprep.subr.mxu0 0.0
      %4459 = vmatpush1.msra.mxu0 0.0
      %4460 = vmatprep.subr.mxu0 0.0
      %4461 = vmatpush1.msra.mxu0 0.0
      %4462 = vmatprep.subr.mxu0 0.0
      %4463 = vmatpush1.msra.mxu0 0.0
      %4464 = vmatprep.subr.mxu0 0.0
      %4465 = vmatpush1.msra.mxu0 0.0
      %4466 = vmatprep.subr.mxu0 0.0
      %4467 = vmatpush1.msra.mxu0 0.0
      %4468 = vmatprep.subr.mxu0 0.0
      %4469 = vmatpush1.msra.mxu0 0.0
      %4470 = vmatprep.subr.mxu0 0.0
      %4471 = vmatpush1.msra.mxu0 0.0
      %4472 = vmatprep.subr.mxu0 0.0
      %4473 = vmatpush1.msra.mxu0 0.0
      %4474 = vmatprep.subr.mxu0 0.0
      %4475 = vmatpush1.msra.mxu0 0.0
      %4476 = vmatprep.subr.mxu0 0.0
      %4477 = vmatpush1.msra.mxu0 0.0
      %4478 = vmatprep.subr.mxu0 0.0
      %4479 = vmatpush1.msra.mxu0 0.0
      %4480 = vmatprep.subr.mxu0 0.0
      %4481 = vmatpush1.msra.mxu0 0.0
      %4482 = vmatprep.subr.mxu0 0.0
      %4483 = vmatpush1.msra.mxu0 0.0
      %4484 = vmatprep.subr.mxu0 0.0
      %4485 = vmatpush1.msra.mxu0 0.0
      %4486 = vmatprep.subr.mxu0 0.0
      %4487 = vmatpush1.msra.mxu0 0.0
      %4488 = vmatprep.mubr.f32.mxu0 0.0
      %4489 = vmatmul.mubr.f32.gmra.mrb[0].mxu0 %v4422
      %v4490 = vpop.f32.mrb[0].mxu0
      %v4491 = vadd.f32 0.0, %v4490
      %v4492 = vpop.f32.mrb[0].mxu0
      %v4493 = vadd.f32 0.0, %v4492
      %4494 = vdwg.mxu0
      %v4495 = vadd.f32 %v4405, %v4491
      %v4496 = vadd.f32 %v4406, %v4493
      %s4497 = scalar_lea.vmem %s10, 128
      %v4498 = vld [vmem:[%s4497] sm:$0xff]
      %4499 = vrot.lane.b32.xlu0 %v3879, 112
      %v4500 = vpop.permute.xlu0 %4499
      %4501 = vrot.lane.b32.xlu0 %v3881, 112
      %v4502 = vpop.permute.xlu0 %4501
      %4503 = vrot.lane.b32.xlu0 %v3880, 112
      %v4504 = vpop.permute.xlu0 %4503
      %4505 = vrot.lane.b32.xlu0 %v3882, 112
      %v4506 = vpop.permute.xlu0 %4505
      %v4507 = vsel %vm800, %v4500, %v4504
      %v4508 = vsel %vm800, %v4502, %v4506
      %v4509 = vsel %vm800, %v4504, %v4500
      %v4510 = vsel %vm800, %v4506, %v4502
      %v4512 = vsel %vm879, %v4498, 0
      %4514 = vmatprep.subr.mxu0 %v4509
      %4515 = vmatpush1.msra.mxu0 %v4507
      %4516 = vmatprep.subr.mxu0 %v4510
      %4517 = vmatpush1.msra.mxu0 %v4508
      %4518 = vmatprep.subr.mxu0 0.0
      %4519 = vmatpush1.msra.mxu0 0.0
      %4520 = vmatprep.subr.mxu0 0.0
      %4521 = vmatpush1.msra.mxu0 0.0
      %4522 = vmatprep.subr.mxu0 0.0
      %4523 = vmatpush1.msra.mxu0 0.0
      %4524 = vmatprep.subr.mxu0 0.0
      %4525 = vmatpush1.msra.mxu0 0.0
      %4526 = vmatprep.subr.mxu0 0.0
      %4527 = vmatpush1.msra.mxu0 0.0
      %4528 = vmatprep.subr.mxu0 0.0
      %4529 = vmatpush1.msra.mxu0 0.0
      %4530 = vmatprep.subr.mxu0 0.0
      %4531 = vmatpush1.msra.mxu0 0.0
      %4532 = vmatprep.subr.mxu0 0.0
      %4533 = vmatpush1.msra.mxu0 0.0
      %4534 = vmatprep.subr.mxu0 0.0
      %4535 = vmatpush1.msra.mxu0 0.0
      %4536 = vmatprep.subr.mxu0 0.0
      %4537 = vmatpush1.msra.mxu0 0.0
      %4538 = vmatprep.subr.mxu0 0.0
      %4539 = vmatpush1.msra.mxu0 0.0
      %4540 = vmatprep.subr.mxu0 0.0
      %4541 = vmatpush1.msra.mxu0 0.0
      %4542 = vmatprep.subr.mxu0 0.0
      %4543 = vmatpush1.msra.mxu0 0.0
      %4544 = vmatprep.subr.mxu0 0.0
      %4545 = vmatpush1.msra.mxu0 0.0
      %4546 = vmatprep.subr.mxu0 0.0
      %4547 = vmatpush1.msra.mxu0 0.0
      %4548 = vmatprep.subr.mxu0 0.0
      %4549 = vmatpush1.msra.mxu0 0.0
      %4550 = vmatprep.subr.mxu0 0.0
      %4551 = vmatpush1.msra.mxu0 0.0
      %4552 = vmatprep.subr.mxu0 0.0
      %4553 = vmatpush1.msra.mxu0 0.0
      %4554 = vmatprep.subr.mxu0 0.0
      %4555 = vmatpush1.msra.mxu0 0.0
      %4556 = vmatprep.subr.mxu0 0.0
      %4557 = vmatpush1.msra.mxu0 0.0
      %4558 = vmatprep.subr.mxu0 0.0
      %4559 = vmatpush1.msra.mxu0 0.0
      %4560 = vmatprep.subr.mxu0 0.0
      %4561 = vmatpush1.msra.mxu0 0.0
      %4562 = vmatprep.subr.mxu0 0.0
      %4563 = vmatpush1.msra.mxu0 0.0
      %4564 = vmatprep.subr.mxu0 0.0
      %4565 = vmatpush1.msra.mxu0 0.0
      %4566 = vmatprep.subr.mxu0 0.0
      %4567 = vmatpush1.msra.mxu0 0.0
      %4568 = vmatprep.subr.mxu0 0.0
      %4569 = vmatpush1.msra.mxu0 0.0
      %4570 = vmatprep.subr.mxu0 0.0
      %4571 = vmatpush1.msra.mxu0 0.0
      %4572 = vmatprep.subr.mxu0 0.0
      %4573 = vmatpush1.msra.mxu0 0.0
      %4574 = vmatprep.subr.mxu0 0.0
      %4575 = vmatpush1.msra.mxu0 0.0
      %4576 = vmatprep.subr.mxu0 0.0
      %4577 = vmatpush1.msra.mxu0 0.0
      %4578 = vmatprep.mubr.f32.mxu0 0.0
      %4579 = vmatmul.mubr.f32.gmra.mrb[0].mxu0 %v4512
      %v4580 = vpop.f32.mrb[0].mxu0
      %v4581 = vadd.f32 0.0, %v4580
      %v4582 = vpop.f32.mrb[0].mxu0
      %v4583 = vadd.f32 0.0, %v4582
      %4584 = vdwg.mxu0
      %v4585 = vadd.f32 %v4495, %v4581
      %v4586 = vadd.f32 %v4496, %v4583
      %s4587 = scalar_lea.vmem %s10, 136
      %v4588 = vld [vmem:[%s4587] sm:$0xff]
      %4589 = vrot.lane.b32.xlu0 %v3879, 111
      %v4590 = vpop.permute.xlu0 %4589
      %4591 = vrot.lane.b32.xlu0 %v3881, 111
      %v4592 = vpop.permute.xlu0 %4591
      %4593 = vrot.lane.b32.xlu0 %v3880, 111
      %v4594 = vpop.permute.xlu0 %4593
      %4595 = vrot.lane.b32.xlu0 %v3882, 111
      %v4596 = vpop.permute.xlu0 %4595
      %v4597 = vsel %vm817, %v4590, %v4594
      %v4598 = vsel %vm817, %v4592, %v4596
      %v4599 = vsel %vm817, %v4594, %v4590
      %v4600 = vsel %vm817, %v4596, %v4592
      %v4602 = vsel %vm879, %v4588, 0
      %4604 = vmatprep.subr.mxu0 %v4599
      %4605 = vmatpush1.msra.mxu0 %v4597
      %4606 = vmatprep.subr.mxu0 %v4600
      %4607 = vmatpush1.msra.mxu0 %v4598
      %4608 = vmatprep.subr.mxu0 0.0
      %4609 = vmatpush1.msra.mxu0 0.0
      %4610 = vmatprep.subr.mxu0 0.0
      %4611 = vmatpush1.msra.mxu0 0.0
      %4612 = vmatprep.subr.mxu0 0.0
      %4613 = vmatpush1.msra.mxu0 0.0
      %4614 = vmatprep.subr.mxu0 0.0
      %4615 = vmatpush1.msra.mxu0 0.0
      %4616 = vmatprep.subr.mxu0 0.0
      %4617 = vmatpush1.msra.mxu0 0.0
      %4618 = vmatprep.subr.mxu0 0.0
      %4619 = vmatpush1.msra.mxu0 0.0
      %4620 = vmatprep.subr.mxu0 0.0
      %4621 = vmatpush1.msra.mxu0 0.0
      %4622 = vmatprep.subr.mxu0 0.0
      %4623 = vmatpush1.msra.mxu0 0.0
      %4624 = vmatprep.subr.mxu0 0.0
      %4625 = vmatpush1.msra.mxu0 0.0
      %4626 = vmatprep.subr.mxu0 0.0
      %4627 = vmatpush1.msra.mxu0 0.0
      %4628 = vmatprep.subr.mxu0 0.0
      %4629 = vmatpush1.msra.mxu0 0.0
      %4630 = vmatprep.subr.mxu0 0.0
      %4631 = vmatpush1.msra.mxu0 0.0
      %4632 = vmatprep.subr.mxu0 0.0
      %4633 = vmatpush1.msra.mxu0 0.0
      %4634 = vmatprep.subr.mxu0 0.0
      %4635 = vmatpush1.msra.mxu0 0.0
      %4636 = vmatprep.subr.mxu0 0.0
      %4637 = vmatpush1.msra.mxu0 0.0
      %4638 = vmatprep.subr.mxu0 0.0
      %4639 = vmatpush1.msra.mxu0 0.0
      %4640 = vmatprep.subr.mxu0 0.0
      %4641 = vmatpush1.msra.mxu0 0.0
      %4642 = vmatprep.subr.mxu0 0.0
      %4643 = vmatpush1.msra.mxu0 0.0
      %4644 = vmatprep.subr.mxu0 0.0
      %4645 = vmatpush1.msra.mxu0 0.0
      %4646 = vmatprep.subr.mxu0 0.0
      %4647 = vmatpush1.msra.mxu0 0.0
      %4648 = vmatprep.subr.mxu0 0.0
      %4649 = vmatpush1.msra.mxu0 0.0
      %4650 = vmatprep.subr.mxu0 0.0
      %4651 = vmatpush1.msra.mxu0 0.0
      %4652 = vmatprep.subr.mxu0 0.0
      %4653 = vmatpush1.msra.mxu0 0.0
      %4654 = vmatprep.subr.mxu0 0.0
      %4655 = vmatpush1.msra.mxu0 0.0
      %4656 = vmatprep.subr.mxu0 0.0
      %4657 = vmatpush1.msra.mxu0 0.0
      %4658 = vmatprep.subr.mxu0 0.0
      %4659 = vmatpush1.msra.mxu0 0.0
      %4660 = vmatprep.subr.mxu0 0.0
      %4661 = vmatpush1.msra.mxu0 0.0
      %4662 = vmatprep.subr.mxu0 0.0
      %4663 = vmatpush1.msra.mxu0 0.0
      %4664 = vmatprep.subr.mxu0 0.0
      %4665 = vmatpush1.msra.mxu0 0.0
      %4666 = vmatprep.subr.mxu0 0.0
      %4667 = vmatpush1.msra.mxu0 0.0
      %4668 = vmatprep.mubr.f32.mxu0 0.0
      %4669 = vmatmul.mubr.f32.gmra.mrb[0].mxu0 %v4602
      %v4670 = vpop.f32.mrb[0].mxu0
      %v4671 = vadd.f32 0.0, %v4670
      %v4672 = vpop.f32.mrb[0].mxu0
      %v4673 = vadd.f32 0.0, %v4672
      %4674 = vdwg.mxu0
      %v4675 = vadd.f32 %v4585, %v4671
      %v4676 = vadd.f32 %v4586, %v4673
      %s4677 = scalar_lea.vmem %s535, 8
      %v4678 = vld [vmem:[%s4677] sm:$0xff]
      %4680 = vset.pattern.permute.xlu0 0
      %4681 = vperm.xlu0 %4680, %v4678
      %v4682 = vpop.permute.xlu0 %4681
      %v4684 = vmul.f32 %v4675, %v4682
      %v4685 = vmul.f32 %v4676, %v4682
      %s4686 = scalar_lea.vmem %s11, 8
      %v4687 = vld [vmem:[%s4686] sm:$0xff]
      %4689 = vset.pattern.permute.xlu0 0
      %4690 = vperm.xlu0 %4689, %v4687
      %v4691 = vpop.permute.xlu0 %4690
      %v4693 = vadd.f32 %v4684, %v4691
      %v4694 = vadd.f32 %v4685, %v4691
      %vm4695 = vcmp.ge.f32.partialorder %v4693, 0.0
      %vm4696 = vcmp.ge.f32.partialorder %v4694, 0.0
      %v4697 = vmul.f32 %v4693, 0.2
      %v4698 = vmul.f32 %v4694, 0.2
      %v4699 = vsel %vm4695, %v4693, %v4697
      %v4700 = vsel %vm4696, %v4694, %v4698
      %v4701 = vmul.f32 %v4699, 1.4142135
      %v4702 = vmul.f32 %v4700, 1.4142135
      %v4704 = vlaneseq
      %v4705 = vshrl.u32 %v4704, 7
      %v4706 = vsub.s32 0, %v4705
      %v4707 = vrot.slane %v2617, %v4706
      %v4708 = vlaneseq
      %v4709 = vshrl.u32 %v4708, 7
      %v4710 = vsub.s32 1, %v4709
      %v4711 = vrot.slane %v2617, %v4710
      %v4714 = vmul.f32 %v4701, %v4707
      %v4715 = vmul.f32 %v4702, %v4711
      %4716 = vst [vmem:[#allocation2] sm:$0xff] %v4714
      %4717 = vst [vmem:[#allocation2 + $0x8] sm:$0xff] %v4715
      %4718 = vst [vmem:[%s540] sm:$0xff] %v4714
      %4719 = vst [vmem:[%s540 + $0x8] sm:$0xff] %v4715
      %p4720 = scmp.lt.s32.totalorder %s24, 1
      %s4721 = scalar_select %p4720, %s24, 1
      %s4722 = smul.addr %s4721, 2
      %s4723 = smul.addr %s4722, 8
      %s4724 = scalar_lea.vmem %s13, %s4723
      // Predicated region
      $region73: #{implicit_function_forward.1} parent=71 // pred_check
        %p4725 = pneg %p345
      $region74: #{implicit_function_forward.1} parent=71 // pred_check_branch
        %4727 = sbr.rel (%p4725) target = $region76
      $region75: #{implicit_function_forward.1} parent=71 // pred_region
        _
      $region76: #{implicit_function_forward.1} parent=71 // pred_fallthru
        _
    $region72: #{implicit_function_forward.1} parent=5 // pred_fallthru
      _
    %p4728 = scmp.le.s32.totalorder 2, %s19
    // Predicated region
    $region77: #{implicit_function_forward.1} parent=5 // pred_check
      %p4729 = pneg %p4728
    $region78: #{implicit_function_forward.1} parent=5 // pred_check_branch
      %4731 = sbr.rel (%p4729) target = $region80
    $region79: #{implicit_function_forward.1} parent=5 // pred_region
      %s4732 = ssub.s32 %s19, 2
      // Predicated region
      $region81: #{implicit_function_forward.1} parent=79 // pred_check
        %p4733 = pneg %p351
      $region82: #{implicit_function_forward.1} parent=79 // pred_check_branch
        %4735 = sbr.rel (%p4733) target = $region84
      $region83: #{implicit_function_forward.1} parent=79 // pred_region
        %p4736 = scmp.lt.s32.totalorder %s25, 1
        %s4737 = scalar_select %p4736, %s25, 1
        %s4738 = smul.addr %s4737, 2
        %s4739 = smul.addr %s4738, 8
        %s4740 = scalar_lea.vmem %s13, %s4739
      $region84: #{implicit_function_forward.1} parent=79 // pred_fallthru
        _
    $region80: #{implicit_function_forward.1} parent=5 // pred_fallthru
      _
  $region6: #{implicit_function_forward.1} parent=0 // loop_footer
    %s23 = sadd.s32 1, %s19
  $region7: #{implicit_function_forward.1} parent=0 // loop_footer_branch
    %18 = sbr.rel target = $region3
  $region8: #{implicit_function_forward.1} parent=0 // loop_exit
    _

</llo_original>
